<compile_context>
chip_gen: v5e
topology: v5e:2x2
jax: 0.10.0
libtpu: 0.0.40
codegen_flags: <defaults>
</compile_context>

<pallas_src>
import functools

import jax
import jax.numpy as jnp
from jax.experimental import pallas as pl
from jax.experimental.pallas import tpu as pltpu


# ---------------------------------------------------------------------------
# Fused whole-forward Pallas kernel.
#
# Ref order:
#   x, edge_attr, recv_col[E,1], send_col[E,1], tgt_row[1,E],
#   enc_node(8), enc_edge(8), proc_edge(10), proc_node(9), dec_head(8),
#   dec_wT, dec_b,                      <- inputs (5 + 45)
#   out_slab[8, N_pad], e_lat[E_pad, L] <- outputs
# ---------------------------------------------------------------------------
def _mesh_pde_kernel(num_steps, *refs):
    x_ref, ea_ref, recv_ref, send_ref, tgt_ref = refs[:5]
    out_ref, elat_ref = refs[-2], refs[-1]
    wrefs = list(refs[5:-2])

    pos = [0]

    def take(n):
        r = wrefs[pos[0]:pos[0] + n]
        pos[0] += n
        return r

    enc_node = take(8)      # 1 input segment, 4 linear layers
    enc_edge = take(8)      # 1 segment, 4 layers
    proc_edge = take(10)    # 3 segments (x_recv, x_send, e), 4 layers
    proc_node = take(9)     # 2 segments (x, agg), 4 layers
    dec_head = take(8)      # 1 segment, first 4 decoder layers
    dec_wT, dec_b = take(2)  # last decoder layer, transposed + /10 folded in

    def mlp(segments, params, n_seg, n_layers):
        """FCBlock: split first layer over segments, ReLU on all but last layer.

        Weights are bf16, biases f32; dots accumulate in f32 (MXU), bias/ReLU
        stay f32 on the VPU.
        """
        h = None
        for s in range(n_seg):
            d = jnp.dot(segments[s].astype(jnp.bfloat16), params[s][...],
                        preferred_element_type=jnp.float32)
            h = d if h is None else h + d
        h = jnp.maximum(h + params[n_seg][...], 0.0)
        idx = n_seg + 1
        for layer in range(1, n_layers):
            h = jnp.dot(h.astype(jnp.bfloat16), params[idx][...],
                        preferred_element_type=jnp.float32) + params[idx + 1][...]
            idx += 2
            if layer < n_layers - 1:
                h = jnp.maximum(h, 0.0)
        return h

    n_pad = x_ref.shape[0]
    e_pad = ea_ref.shape[0]

    # One-hot gather / scatter matrices, built once and reused by every step.
    lane_nodes = jax.lax.broadcasted_iota(jnp.int32, (e_pad, n_pad), 1)
    recv_oh = (recv_ref[...] == lane_nodes).astype(jnp.bfloat16)   # [E, N]
    send_oh = (send_ref[...] == lane_nodes).astype(jnp.bfloat16)   # [E, N]
    sub_nodes = jax.lax.broadcasted_iota(jnp.int32, (n_pad, e_pad), 0)
    scat_oh = (sub_nodes == tgt_ref[...]).astype(jnp.bfloat16)     # [N, E]

    # encoder(): var=0 -> additive noise term is exactly zero.
    x = mlp([x_ref[...]], enc_node, 1, 4)      # [N_pad, L] f32
    e = mlp([ea_ref[...]], enc_edge, 1, 4)     # [E_pad, L] f32

    # Shared processor (diffMLP=False), unrolled num_steps times.
    for _ in range(num_steps):
        x_bf = x.astype(jnp.bfloat16)
        x_recv = jnp.dot(recv_oh, x_bf, preferred_element_type=jnp.float32)
        x_send = jnp.dot(send_oh, x_bf, preferred_element_type=jnp.float32)
        # edge_encoder(cat([x_recv, x_send, e])) via split-W0 dots
        e = mlp([x_recv, x_send, e], proc_edge, 3, 4)
        # aggr='add' of edge messages into target nodes (edge_index[1])
        agg = jnp.dot(scat_oh, e.astype(jnp.bfloat16),
                      preferred_element_type=jnp.float32)
        # node_encoder(cat([x, agg])) + x  (residual)
        x = mlp([x, agg], proc_node, 2, 4) + x

    # decoder + /10 (folded into dec_wT / dec_b), lane-dense (8, N_pad) output.
    h = jnp.maximum(mlp([x], dec_head, 1, 4), 0.0)
    out = jax.lax.dot_general(
        dec_wT[...], h.astype(jnp.bfloat16),
        dimension_numbers=(((1,), (1,)), ((), ())),    # [8,L] . [N,L]^T -> [8,N]
        preferred_element_type=jnp.float32) + dec_b[...]
    out_ref[...] = out
    elat_ref[...] = e


# ---------------------------------------------------------------------------
# Parameter init (PyTorch nn.Linear-style uniform init) + kernel-layout prep.
# ---------------------------------------------------------------------------
def init_fcblock(key, in_features, out_features, hidden_features,
                 num_hidden_layers):
    # FCBlock = Linear(in,h)+nl, num_hidden_layers x (Linear(h,h)+nl), Linear(h,out)
    dims = [in_features] + [hidden_features] * (num_hidden_layers + 1) + [out_features]
    layers = []
    for i in range(len(dims) - 1):
        key, kw, kb = jax.random.split(key, 3)
        bound = 1.0 / float(dims[i]) ** 0.5
        w = jax.random.uniform(kw, (dims[i], dims[i + 1]), jnp.float32,
                               -bound, bound)
        b = jax.random.uniform(kb, (dims[i + 1],), jnp.float32, -bound, bound)
        layers.append((w, b))
    return layers, key


def _prep_mlp(layers, first_splits=None):
    """Kernel layout: bf16 weights, f32 [1,dim] biases; optional row-split of W0."""
    w0, b0 = layers[0]
    if first_splits is None:
        parts = [w0]
    else:
        parts, off = [], 0
        for s in first_splits:
            parts.append(w0[off:off + s])
            off += s
    out = [p.astype(jnp.bfloat16) for p in parts]
    out.append(b0.reshape(1, -1).astype(jnp.float32))
    for w, b in layers[1:]:
        out.append(w.astype(jnp.bfloat16))
        out.append(b.reshape(1, -1).astype(jnp.float32))
    return out


def init_mesh_pde(key, edge_dim, node_dim, latent_dim=32):
    encoder_edge, key = init_fcblock(key, edge_dim, latent_dim, latent_dim, 2)
    encoder_nodes, key = init_fcblock(key, node_dim, latent_dim, latent_dim, 2)
    proc_edge, key = init_fcblock(key, latent_dim * 3, latent_dim, latent_dim, 2)
    proc_node, key = init_fcblock(key, latent_dim * 2, latent_dim, latent_dim, 2)
    decoder, key = init_fcblock(key, latent_dim, 1, latent_dim, 3)

    # Decoder tail: fold forward()'s /10 into the last Linear, store it
    # transposed and sublane-padded to 8 so the kernel emits a lane-dense
    # (8, N_pad) slab (row 0 is the real result).
    w4, b4 = decoder[4]                                  # [L,1], [1]
    dec_wT = jnp.zeros((8, latent_dim), jnp.float32).at[0].set(w4[:, 0] / 10.0)
    dec_b = jnp.zeros((8, 1), jnp.float32).at[0, 0].set(b4[0] / 10.0)

    params = {
        "enc_node": _prep_mlp(encoder_nodes),
        "enc_edge": _prep_mlp(encoder_edge),
        "proc_edge": _prep_mlp(proc_edge, (latent_dim, latent_dim, latent_dim)),
        "proc_node": _prep_mlp(proc_node, (latent_dim, latent_dim)),
        "dec_head": _prep_mlp(decoder[:4]),
        "dec_tail": [dec_wT.astype(jnp.bfloat16), dec_b],
    }
    return params, key


# ---------------------------------------------------------------------------
# mesh_PDE forward wrapper (single pallas_call).
# ---------------------------------------------------------------------------
def _round_up(v, m):
    return ((v + m - 1) // m) * m


@functools.partial(jax.jit, static_argnames=("num_steps",))
def mesh_pde_forward(params, x, edge_attr, edge_index, num_steps=3):
    n = x.shape[0]
    e = edge_attr.shape[0]
    latent = params["dec_tail"][0].shape[1]

    # Pad once, up front (padding hoisted out of the per-MLP path).
    n_pad = _round_up(n, 128)     # multiple of 128 -> lane-dense decoder slab
    e_pad = _round_up(e, 128)

    x_p = jnp.pad(x.astype(jnp.float32), ((0, n_pad - n), (0, 0)))
    ea_p = jnp.pad(edge_attr.astype(jnp.float32), ((0, e_pad - e), (0, 0)))

    recv = edge_index[0].astype(jnp.int32)   # x_receiver = x[edge_index[0]]
    send = edge_index[1].astype(jnp.int32)   # x_sender   = x[edge_index[1]]
    pad_idx = jnp.full((e_pad - e,), -1, jnp.int32)   # padded edges hit no node
    recv_col = jnp.concatenate([recv, pad_idx]).reshape(e_pad, 1)
    send_col = jnp.concatenate([send, pad_idx]).reshape(e_pad, 1)
    # aggr='add' target under flow='source_to_target' is edge_index[1]
    tgt_row = jnp.concatenate([send, pad_idx]).reshape(1, e_pad)

    flat = (params["enc_node"] + params["enc_edge"] + params["proc_edge"]
            + params["proc_node"] + params["dec_head"] + params["dec_tail"])

    vmem = pl.BlockSpec(memory_space=pltpu.MemorySpace.VMEM)
    out_slab, e_lat_p = pl.pallas_call(
        functools.partial(_mesh_pde_kernel, num_steps),
        out_shape=(jax.ShapeDtypeStruct((8, n_pad), jnp.float32),
                   jax.ShapeDtypeStruct((e_pad, latent), jnp.float32)),
        in_specs=[vmem] * (5 + len(flat)),
        out_specs=(vmem, vmem),
    )(x_p, ea_p, recv_col, send_col, tgt_row, *flat)

    out = out_slab[0, :n].reshape(n, 1)   # graph_latent.x == graph_latent.eval
    e_lat = e_lat_p[:e]                   # graph_latent.edge_attr
    return out, e_lat


if __name__ == "__main__":
    key = jax.random.PRNGKey(0)

    num_nodes, num_edges = 64, 128
    node_dim, edge_dim, latent_dim = 7, 5, 32

    params, key = init_mesh_pde(key, edge_dim, node_dim, latent_dim)

    key, kx, ke, ki = jax.random.split(key, 4)
    x = jax.random.normal(kx, (num_nodes, node_dim), jnp.float32)
    edge_attr = jax.random.normal(ke, (num_edges, edge_dim), jnp.float32)
    edge_index = jax.random.randint(ki, (2, num_edges), 0, num_nodes,
                                    dtype=jnp.int32)

    out, e_lat = mesh_pde_forward(params, x, edge_attr, edge_index, num_steps=3)
    out = jax.block_until_ready(out)
    e_lat = jax.block_until_ready(e_lat)

    assert out.shape == (num_nodes, 1)
    assert e_lat.shape == (num_edges, latent_dim)
    assert bool(jnp.all(jnp.isfinite(out)))
    assert bool(jnp.all(jnp.isfinite(e_lat)))
    print("KERNEL_OK")
</pallas_src>

<mosaic_0001>
module attributes {stable_mosaic.version = 11 : i64} {
  func.func @_mesh_pde_kernel(%arg0: memref<128x7xf32, #tpu.memory_space<vmem>>, %arg1: memref<128x5xf32, #tpu.memory_space<vmem>>, %arg2: memref<128x1xi32, #tpu.memory_space<vmem>>, %arg3: memref<128x1xi32, #tpu.memory_space<vmem>>, %arg4: memref<1x128xi32, #tpu.memory_space<vmem>>, %arg5: memref<7x32xbf16, #tpu.memory_space<vmem>>, %arg6: memref<1x32xf32, #tpu.memory_space<vmem>>, %arg7: memref<32x32xbf16, #tpu.memory_space<vmem>>, %arg8: memref<1x32xf32, #tpu.memory_space<vmem>>, %arg9: memref<32x32xbf16, #tpu.memory_space<vmem>>, %arg10: memref<1x32xf32, #tpu.memory_space<vmem>>, %arg11: memref<32x32xbf16, #tpu.memory_space<vmem>>, %arg12: memref<1x32xf32, #tpu.memory_space<vmem>>, %arg13: memref<5x32xbf16, #tpu.memory_space<vmem>>, %arg14: memref<1x32xf32, #tpu.memory_space<vmem>>, %arg15: memref<32x32xbf16, #tpu.memory_space<vmem>>, %arg16: memref<1x32xf32, #tpu.memory_space<vmem>>, %arg17: memref<32x32xbf16, #tpu.memory_space<vmem>>, %arg18: memref<1x32xf32, #tpu.memory_space<vmem>>, %arg19: memref<32x32xbf16, #tpu.memory_space<vmem>>, %arg20: memref<1x32xf32, #tpu.memory_space<vmem>>, %arg21: memref<32x32xbf16, #tpu.memory_space<vmem>>, %arg22: memref<32x32xbf16, #tpu.memory_space<vmem>>, %arg23: memref<32x32xbf16, #tpu.memory_space<vmem>>, %arg24: memref<1x32xf32, #tpu.memory_space<vmem>>, %arg25: memref<32x32xbf16, #tpu.memory_space<vmem>>, %arg26: memref<1x32xf32, #tpu.memory_space<vmem>>, %arg27: memref<32x32xbf16, #tpu.memory_space<vmem>>, %arg28: memref<1x32xf32, #tpu.memory_space<vmem>>, %arg29: memref<32x32xbf16, #tpu.memory_space<vmem>>, %arg30: memref<1x32xf32, #tpu.memory_space<vmem>>, %arg31: memref<32x32xbf16, #tpu.memory_space<vmem>>, %arg32: memref<32x32xbf16, #tpu.memory_space<vmem>>, %arg33: memref<1x32xf32, #tpu.memory_space<vmem>>, %arg34: memref<32x32xbf16, #tpu.memory_space<vmem>>, %arg35: memref<1x32xf32, #tpu.memory_space<vmem>>, %arg36: memref<32x32xbf16, #tpu.memory_space<vmem>>, %arg37: memref<1x32xf32, #tpu.memory_space<vmem>>, %arg38: memref<32x32xbf16, #tpu.memory_space<vmem>>, %arg39: memref<1x32xf32, #tpu.memory_space<vmem>>, %arg40: memref<32x32xbf16, #tpu.memory_space<vmem>>, %arg41: memref<1x32xf32, #tpu.memory_space<vmem>>, %arg42: memref<32x32xbf16, #tpu.memory_space<vmem>>, %arg43: memref<1x32xf32, #tpu.memory_space<vmem>>, %arg44: memref<32x32xbf16, #tpu.memory_space<vmem>>, %arg45: memref<1x32xf32, #tpu.memory_space<vmem>>, %arg46: memref<32x32xbf16, #tpu.memory_space<vmem>>, %arg47: memref<1x32xf32, #tpu.memory_space<vmem>>, %arg48: memref<8x32xbf16, #tpu.memory_space<vmem>>, %arg49: memref<8x1xf32, #tpu.memory_space<vmem>>, %arg50: memref<8x128xf32, #tpu.memory_space<vmem>>, %arg51: memref<128x32xf32, #tpu.memory_space<vmem>>) attributes {dimension_semantics = [], scalar_prefetch = 0 : i64, scratch_operands = 0 : i64, tpu.core_type = #tpu.core_type<tc>} {
    %0 = tpu.iota {dimensions = array<i32: 1>} : vector<128x128xi32>
    %c0 = arith.constant 0 : index
    %c0_0 = arith.constant 0 : index
    %1 = vector.load %arg2[%c0, %c0_0] : memref<128x1xi32, #tpu.memory_space<vmem>>, vector<128x1xi32>
    %2 = vector.broadcast %1 : vector<128x1xi32> to vector<128x128xi32>
    %3 = arith.cmpi eq, %2, %0 : vector<128x128xi32>
    %4 = arith.extui %3 : vector<128x128xi1> to vector<128x128xi32>
    %5 = arith.sitofp %4 : vector<128x128xi32> to vector<128x128xf32>
    %6 = arith.truncf %5 : vector<128x128xf32> to vector<128x128xbf16>
    %c0_1 = arith.constant 0 : index
    %c0_2 = arith.constant 0 : index
    %7 = vector.load %arg3[%c0_1, %c0_2] : memref<128x1xi32, #tpu.memory_space<vmem>>, vector<128x1xi32>
    %8 = vector.broadcast %7 : vector<128x1xi32> to vector<128x128xi32>
    %9 = arith.cmpi eq, %8, %0 : vector<128x128xi32>
    %10 = arith.extui %9 : vector<128x128xi1> to vector<128x128xi32>
    %11 = arith.sitofp %10 : vector<128x128xi32> to vector<128x128xf32>
    %12 = arith.truncf %11 : vector<128x128xf32> to vector<128x128xbf16>
    %13 = tpu.iota {dimensions = array<i32: 0>} : vector<128x128xi32>
    %c0_3 = arith.constant 0 : index
    %c0_4 = arith.constant 0 : index
    %14 = vector.load %arg4[%c0_3, %c0_4] : memref<1x128xi32, #tpu.memory_space<vmem>>, vector<1x128xi32>
    %15 = vector.broadcast %14 : vector<1x128xi32> to vector<128x128xi32>
    %16 = arith.cmpi eq, %13, %15 : vector<128x128xi32>
    %17 = arith.extui %16 : vector<128x128xi1> to vector<128x128xi32>
    %18 = arith.sitofp %17 : vector<128x128xi32> to vector<128x128xf32>
    %19 = arith.truncf %18 : vector<128x128xf32> to vector<128x128xbf16>
    %c0_5 = arith.constant 0 : index
    %c0_6 = arith.constant 0 : index
    %20 = vector.load %arg0[%c0_5, %c0_6] : memref<128x7xf32, #tpu.memory_space<vmem>>, vector<128x7xf32>
    %21 = arith.truncf %20 : vector<128x7xf32> to vector<128x7xbf16>
    %c0_7 = arith.constant 0 : index
    %c0_8 = arith.constant 0 : index
    %22 = vector.load %arg5[%c0_7, %c0_8] : memref<7x32xbf16, #tpu.memory_space<vmem>>, vector<7x32xbf16>
    %cst = arith.constant dense<0.000000e+00> : vector<128x32xf32>
    %23 = tpu.matmul %21, %22, %cst {dimension_numbers = #tpu.dot_dimension_numbers<[1], [0], [0], [1], [0, 0, 1, 1], [], []>} : vector<128x7xbf16>, vector<7x32xbf16>, vector<128x32xf32> -> vector<128x32xf32>
    %c0_9 = arith.constant 0 : index
    %c0_10 = arith.constant 0 : index
    %24 = vector.load %arg6[%c0_9, %c0_10] : memref<1x32xf32, #tpu.memory_space<vmem>>, vector<1x32xf32>
    %25 = vector.broadcast %24 : vector<1x32xf32> to vector<128x32xf32>
    %26 = arith.addf %23, %25 : vector<128x32xf32>
    %cst_11 = arith.constant 0.000000e+00 : f32
    %27 = vector.broadcast %cst_11 : f32 to vector<128x32xf32>
    %28 = arith.maximumf %26, %27 : vector<128x32xf32>
    %29 = arith.truncf %28 : vector<128x32xf32> to vector<128x32xbf16>
    %c0_12 = arith.constant 0 : index
    %c0_13 = arith.constant 0 : index
    %30 = vector.load %arg7[%c0_12, %c0_13] : memref<32x32xbf16, #tpu.memory_space<vmem>>, vector<32x32xbf16>
    %cst_14 = arith.constant dense<0.000000e+00> : vector<128x32xf32>
    %31 = tpu.matmul %29, %30, %cst_14 {dimension_numbers = #tpu.dot_dimension_numbers<[1], [0], [0], [1], [0, 0, 1, 1], [], []>} : vector<128x32xbf16>, vector<32x32xbf16>, vector<128x32xf32> -> vector<128x32xf32>
    %c0_15 = arith.constant 0 : index
    %c0_16 = arith.constant 0 : index
    %32 = vector.load %arg8[%c0_15, %c0_16] : memref<1x32xf32, #tpu.memory_space<vmem>>, vector<1x32xf32>
    %33 = vector.broadcast %32 : vector<1x32xf32> to vector<128x32xf32>
    %34 = arith.addf %31, %33 : vector<128x32xf32>
    %cst_17 = arith.constant 0.000000e+00 : f32
    %35 = vector.broadcast %cst_17 : f32 to vector<128x32xf32>
    %36 = arith.maximumf %34, %35 : vector<128x32xf32>
    %37 = arith.truncf %36 : vector<128x32xf32> to vector<128x32xbf16>
    %c0_18 = arith.constant 0 : index
    %c0_19 = arith.constant 0 : index
    %38 = vector.load %arg9[%c0_18, %c0_19] : memref<32x32xbf16, #tpu.memory_space<vmem>>, vector<32x32xbf16>
    %cst_20 = arith.constant dense<0.000000e+00> : vector<128x32xf32>
    %39 = tpu.matmul %37, %38, %cst_20 {dimension_numbers = #tpu.dot_dimension_numbers<[1], [0], [0], [1], [0, 0, 1, 1], [], []>} : vector<128x32xbf16>, vector<32x32xbf16>, vector<128x32xf32> -> vector<128x32xf32>
    %c0_21 = arith.constant 0 : index
    %c0_22 = arith.constant 0 : index
    %40 = vector.load %arg10[%c0_21, %c0_22] : memref<1x32xf32, #tpu.memory_space<vmem>>, vector<1x32xf32>
    %41 = vector.broadcast %40 : vector<1x32xf32> to vector<128x32xf32>
    %42 = arith.addf %39, %41 : vector<128x32xf32>
    %cst_23 = arith.constant 0.000000e+00 : f32
    %43 = vector.broadcast %cst_23 : f32 to vector<128x32xf32>
    %44 = arith.maximumf %42, %43 : vector<128x32xf32>
    %45 = arith.truncf %44 : vector<128x32xf32> to vector<128x32xbf16>
    %c0_24 = arith.constant 0 : index
    %c0_25 = arith.constant 0 : index
    %46 = vector.load %arg11[%c0_24, %c0_25] : memref<32x32xbf16, #tpu.memory_space<vmem>>, vector<32x32xbf16>
    %cst_26 = arith.constant dense<0.000000e+00> : vector<128x32xf32>
    %47 = tpu.matmul %45, %46, %cst_26 {dimension_numbers = #tpu.dot_dimension_numbers<[1], [0], [0], [1], [0, 0, 1, 1], [], []>} : vector<128x32xbf16>, vector<32x32xbf16>, vector<128x32xf32> -> vector<128x32xf32>
    %c0_27 = arith.constant 0 : index
    %c0_28 = arith.constant 0 : index
    %48 = vector.load %arg12[%c0_27, %c0_28] : memref<1x32xf32, #tpu.memory_space<vmem>>, vector<1x32xf32>
    %49 = vector.broadcast %48 : vector<1x32xf32> to vector<128x32xf32>
    %50 = arith.addf %47, %49 : vector<128x32xf32>
    %c0_29 = arith.constant 0 : index
    %c0_30 = arith.constant 0 : index
    %51 = vector.load %arg1[%c0_29, %c0_30] : memref<128x5xf32, #tpu.memory_space<vmem>>, vector<128x5xf32>
    %52 = arith.truncf %51 : vector<128x5xf32> to vector<128x5xbf16>
    %c0_31 = arith.constant 0 : index
    %c0_32 = arith.constant 0 : index
    %53 = vector.load %arg13[%c0_31, %c0_32] : memref<5x32xbf16, #tpu.memory_space<vmem>>, vector<5x32xbf16>
    %cst_33 = arith.constant dense<0.000000e+00> : vector<128x32xf32>
    %54 = tpu.matmul %52, %53, %cst_33 {dimension_numbers = #tpu.dot_dimension_numbers<[1], [0], [0], [1], [0, 0, 1, 1], [], []>} : vector<128x5xbf16>, vector<5x32xbf16>, vector<128x32xf32> -> vector<128x32xf32>
    %c0_34 = arith.constant 0 : index
    %c0_35 = arith.constant 0 : index
    %55 = vector.load %arg14[%c0_34, %c0_35] : memref<1x32xf32, #tpu.memory_space<vmem>>, vector<1x32xf32>
    %56 = vector.broadcast %55 : vector<1x32xf32> to vector<128x32xf32>
    %57 = arith.addf %54, %56 : vector<128x32xf32>
    %cst_36 = arith.constant 0.000000e+00 : f32
    %58 = vector.broadcast %cst_36 : f32 to vector<128x32xf32>
    %59 = arith.maximumf %57, %58 : vector<128x32xf32>
    %60 = arith.truncf %59 : vector<128x32xf32> to vector<128x32xbf16>
    %c0_37 = arith.constant 0 : index
    %c0_38 = arith.constant 0 : index
    %61 = vector.load %arg15[%c0_37, %c0_38] : memref<32x32xbf16, #tpu.memory_space<vmem>>, vector<32x32xbf16>
    %cst_39 = arith.constant dense<0.000000e+00> : vector<128x32xf32>
    %62 = tpu.matmul %60, %61, %cst_39 {dimension_numbers = #tpu.dot_dimension_numbers<[1], [0], [0], [1], [0, 0, 1, 1], [], []>} : vector<128x32xbf16>, vector<32x32xbf16>, vector<128x32xf32> -> vector<128x32xf32>
    %c0_40 = arith.constant 0 : index
    %c0_41 = arith.constant 0 : index
    %63 = vector.load %arg16[%c0_40, %c0_41] : memref<1x32xf32, #tpu.memory_space<vmem>>, vector<1x32xf32>
    %64 = vector.broadcast %63 : vector<1x32xf32> to vector<128x32xf32>
    %65 = arith.addf %62, %64 : vector<128x32xf32>
    %cst_42 = arith.constant 0.000000e+00 : f32
    %66 = vector.broadcast %cst_42 : f32 to vector<128x32xf32>
    %67 = arith.maximumf %65, %66 : vector<128x32xf32>
    %68 = arith.truncf %67 : vector<128x32xf32> to vector<128x32xbf16>
    %c0_43 = arith.constant 0 : index
    %c0_44 = arith.constant 0 : index
    %69 = vector.load %arg17[%c0_43, %c0_44] : memref<32x32xbf16, #tpu.memory_space<vmem>>, vector<32x32xbf16>
    %cst_45 = arith.constant dense<0.000000e+00> : vector<128x32xf32>
    %70 = tpu.matmul %68, %69, %cst_45 {dimension_numbers = #tpu.dot_dimension_numbers<[1], [0], [0], [1], [0, 0, 1, 1], [], []>} : vector<128x32xbf16>, vector<32x32xbf16>, vector<128x32xf32> -> vector<128x32xf32>
    %c0_46 = arith.constant 0 : index
    %c0_47 = arith.constant 0 : index
    %71 = vector.load %arg18[%c0_46, %c0_47] : memref<1x32xf32, #tpu.memory_space<vmem>>, vector<1x32xf32>
    %72 = vector.broadcast %71 : vector<1x32xf32> to vector<128x32xf32>
    %73 = arith.addf %70, %72 : vector<128x32xf32>
    %cst_48 = arith.constant 0.000000e+00 : f32
    %74 = vector.broadcast %cst_48 : f32 to vector<128x32xf32>
    %75 = arith.maximumf %73, %74 : vector<128x32xf32>
    %76 = arith.truncf %75 : vector<128x32xf32> to vector<128x32xbf16>
    %c0_49 = arith.constant 0 : index
    %c0_50 = arith.constant 0 : index
    %77 = vector.load %arg19[%c0_49, %c0_50] : memref<32x32xbf16, #tpu.memory_space<vmem>>, vector<32x32xbf16>
    %cst_51 = arith.constant dense<0.000000e+00> : vector<128x32xf32>
    %78 = tpu.matmul %76, %77, %cst_51 {dimension_numbers = #tpu.dot_dimension_numbers<[1], [0], [0], [1], [0, 0, 1, 1], [], []>} : vector<128x32xbf16>, vector<32x32xbf16>, vector<128x32xf32> -> vector<128x32xf32>
    %c0_52 = arith.constant 0 : index
    %c0_53 = arith.constant 0 : index
    %79 = vector.load %arg20[%c0_52, %c0_53] : memref<1x32xf32, #tpu.memory_space<vmem>>, vector<1x32xf32>
    %80 = vector.broadcast %79 : vector<1x32xf32> to vector<128x32xf32>
    %81 = arith.addf %78, %80 : vector<128x32xf32>
    %82 = arith.truncf %50 : vector<128x32xf32> to vector<128x32xbf16>
    %cst_54 = arith.constant dense<0.000000e+00> : vector<128x32xf32>
    %83 = tpu.matmul %6, %82, %cst_54 {dimension_numbers = #tpu.dot_dimension_numbers<[1], [0], [0], [1], [0, 0, 1, 1], [], []>} : vector<128x128xbf16>, vector<128x32xbf16>, vector<128x32xf32> -> vector<128x32xf32>
    %cst_55 = arith.constant dense<0.000000e+00> : vector<128x32xf32>
    %84 = tpu.matmul %12, %82, %cst_55 {dimension_numbers = #tpu.dot_dimension_numbers<[1], [0], [0], [1], [0, 0, 1, 1], [], []>} : vector<128x128xbf16>, vector<128x32xbf16>, vector<128x32xf32> -> vector<128x32xf32>
    %85 = arith.truncf %83 : vector<128x32xf32> to vector<128x32xbf16>
    %c0_56 = arith.constant 0 : index
    %c0_57 = arith.constant 0 : index
    %86 = vector.load %arg21[%c0_56, %c0_57] : memref<32x32xbf16, #tpu.memory_space<vmem>>, vector<32x32xbf16>
    %cst_58 = arith.constant dense<0.000000e+00> : vector<128x32xf32>
    %87 = tpu.matmul %85, %86, %cst_58 {dimension_numbers = #tpu.dot_dimension_numbers<[1], [0], [0], [1], [0, 0, 1, 1], [], []>} : vector<128x32xbf16>, vector<32x32xbf16>, vector<128x32xf32> -> vector<128x32xf32>
    %88 = arith.truncf %84 : vector<128x32xf32> to vector<128x32xbf16>
    %c0_59 = arith.constant 0 : index
    %c0_60 = arith.constant 0 : index
    %89 = vector.load %arg22[%c0_59, %c0_60] : memref<32x32xbf16, #tpu.memory_space<vmem>>, vector<32x32xbf16>
    %cst_61 = arith.constant dense<0.000000e+00> : vector<128x32xf32>
    %90 = tpu.matmul %88, %89, %cst_61 {dimension_numbers = #tpu.dot_dimension_numbers<[1], [0], [0], [1], [0, 0, 1, 1], [], []>} : vector<128x32xbf16>, vector<32x32xbf16>, vector<128x32xf32> -> vector<128x32xf32>
    %91 = arith.addf %87, %90 : vector<128x32xf32>
    %92 = arith.truncf %81 : vector<128x32xf32> to vector<128x32xbf16>
    %c0_62 = arith.constant 0 : index
    %c0_63 = arith.constant 0 : index
    %93 = vector.load %arg23[%c0_62, %c0_63] : memref<32x32xbf16, #tpu.memory_space<vmem>>, vector<32x32xbf16>
    %cst_64 = arith.constant dense<0.000000e+00> : vector<128x32xf32>
    %94 = tpu.matmul %92, %93, %cst_64 {dimension_numbers = #tpu.dot_dimension_numbers<[1], [0], [0], [1], [0, 0, 1, 1], [], []>} : vector<128x32xbf16>, vector<32x32xbf16>, vector<128x32xf32> -> vector<128x32xf32>
    %95 = arith.addf %91, %94 : vector<128x32xf32>
    %c0_65 = arith.constant 0 : index
    %c0_66 = arith.constant 0 : index
    %96 = vector.load %arg24[%c0_65, %c0_66] : memref<1x32xf32, #tpu.memory_space<vmem>>, vector<1x32xf32>
    %97 = vector.broadcast %96 : vector<1x32xf32> to vector<128x32xf32>
    %98 = arith.addf %95, %97 : vector<128x32xf32>
    %cst_67 = arith.constant 0.000000e+00 : f32
    %99 = vector.broadcast %cst_67 : f32 to vector<128x32xf32>
    %100 = arith.maximumf %98, %99 : vector<128x32xf32>
    %101 = arith.truncf %100 : vector<128x32xf32> to vector<128x32xbf16>
    %c0_68 = arith.constant 0 : index
    %c0_69 = arith.constant 0 : index
    %102 = vector.load %arg25[%c0_68, %c0_69] : memref<32x32xbf16, #tpu.memory_space<vmem>>, vector<32x32xbf16>
    %cst_70 = arith.constant dense<0.000000e+00> : vector<128x32xf32>
    %103 = tpu.matmul %101, %102, %cst_70 {dimension_numbers = #tpu.dot_dimension_numbers<[1], [0], [0], [1], [0, 0, 1, 1], [], []>} : vector<128x32xbf16>, vector<32x32xbf16>, vector<128x32xf32> -> vector<128x32xf32>
    %c0_71 = arith.constant 0 : index
    %c0_72 = arith.constant 0 : index
    %104 = vector.load %arg26[%c0_71, %c0_72] : memref<1x32xf32, #tpu.memory_space<vmem>>, vector<1x32xf32>
    %105 = vector.broadcast %104 : vector<1x32xf32> to vector<128x32xf32>
    %106 = arith.addf %103, %105 : vector<128x32xf32>
    %cst_73 = arith.constant 0.000000e+00 : f32
    %107 = vector.broadcast %cst_73 : f32 to vector<128x32xf32>
    %108 = arith.maximumf %106, %107 : vector<128x32xf32>
    %109 = arith.truncf %108 : vector<128x32xf32> to vector<128x32xbf16>
    %c0_74 = arith.constant 0 : index
    %c0_75 = arith.constant 0 : index
    %110 = vector.load %arg27[%c0_74, %c0_75] : memref<32x32xbf16, #tpu.memory_space<vmem>>, vector<32x32xbf16>
    %cst_76 = arith.constant dense<0.000000e+00> : vector<128x32xf32>
    %111 = tpu.matmul %109, %110, %cst_76 {dimension_numbers = #tpu.dot_dimension_numbers<[1], [0], [0], [1], [0, 0, 1, 1], [], []>} : vector<128x32xbf16>, vector<32x32xbf16>, vector<128x32xf32> -> vector<128x32xf32>
    %c0_77 = arith.constant 0 : index
    %c0_78 = arith.constant 0 : index
    %112 = vector.load %arg28[%c0_77, %c0_78] : memref<1x32xf32, #tpu.memory_space<vmem>>, vector<1x32xf32>
    %113 = vector.broadcast %112 : vector<1x32xf32> to vector<128x32xf32>
    %114 = arith.addf %111, %113 : vector<128x32xf32>
    %cst_79 = arith.constant 0.000000e+00 : f32
    %115 = vector.broadcast %cst_79 : f32 to vector<128x32xf32>
    %116 = arith.maximumf %114, %115 : vector<128x32xf32>
    %117 = arith.truncf %116 : vector<128x32xf32> to vector<128x32xbf16>
    %c0_80 = arith.constant 0 : index
    %c0_81 = arith.constant 0 : index
    %118 = vector.load %arg29[%c0_80, %c0_81] : memref<32x32xbf16, #tpu.memory_space<vmem>>, vector<32x32xbf16>
    %cst_82 = arith.constant dense<0.000000e+00> : vector<128x32xf32>
    %119 = tpu.matmul %117, %118, %cst_82 {dimension_numbers = #tpu.dot_dimension_numbers<[1], [0], [0], [1], [0, 0, 1, 1], [], []>} : vector<128x32xbf16>, vector<32x32xbf16>, vector<128x32xf32> -> vector<128x32xf32>
    %c0_83 = arith.constant 0 : index
    %c0_84 = arith.constant 0 : index
    %120 = vector.load %arg30[%c0_83, %c0_84] : memref<1x32xf32, #tpu.memory_space<vmem>>, vector<1x32xf32>
    %121 = vector.broadcast %120 : vector<1x32xf32> to vector<128x32xf32>
    %122 = arith.addf %119, %121 : vector<128x32xf32>
    %123 = arith.truncf %122 : vector<128x32xf32> to vector<128x32xbf16>
    %cst_85 = arith.constant dense<0.000000e+00> : vector<128x32xf32>
    %124 = tpu.matmul %19, %123, %cst_85 {dimension_numbers = #tpu.dot_dimension_numbers<[1], [0], [0], [1], [0, 0, 1, 1], [], []>} : vector<128x128xbf16>, vector<128x32xbf16>, vector<128x32xf32> -> vector<128x32xf32>
    %125 = arith.truncf %50 : vector<128x32xf32> to vector<128x32xbf16>
    %c0_86 = arith.constant 0 : index
    %c0_87 = arith.constant 0 : index
    %126 = vector.load %arg31[%c0_86, %c0_87] : memref<32x32xbf16, #tpu.memory_space<vmem>>, vector<32x32xbf16>
    %cst_88 = arith.constant dense<0.000000e+00> : vector<128x32xf32>
    %127 = tpu.matmul %125, %126, %cst_88 {dimension_numbers = #tpu.dot_dimension_numbers<[1], [0], [0], [1], [0, 0, 1, 1], [], []>} : vector<128x32xbf16>, vector<32x32xbf16>, vector<128x32xf32> -> vector<128x32xf32>
    %128 = arith.truncf %124 : vector<128x32xf32> to vector<128x32xbf16>
    %c0_89 = arith.constant 0 : index
    %c0_90 = arith.constant 0 : index
    %129 = vector.load %arg32[%c0_89, %c0_90] : memref<32x32xbf16, #tpu.memory_space<vmem>>, vector<32x32xbf16>
    %cst_91 = arith.constant dense<0.000000e+00> : vector<128x32xf32>
    %130 = tpu.matmul %128, %129, %cst_91 {dimension_numbers = #tpu.dot_dimension_numbers<[1], [0], [0], [1], [0, 0, 1, 1], [], []>} : vector<128x32xbf16>, vector<32x32xbf16>, vector<128x32xf32> -> vector<128x32xf32>
    %131 = arith.addf %127, %130 : vector<128x32xf32>
    %c0_92 = arith.constant 0 : index
    %c0_93 = arith.constant 0 : index
    %132 = vector.load %arg33[%c0_92, %c0_93] : memref<1x32xf32, #tpu.memory_space<vmem>>, vector<1x32xf32>
    %133 = vector.broadcast %132 : vector<1x32xf32> to vector<128x32xf32>
    %134 = arith.addf %131, %133 : vector<128x32xf32>
    %cst_94 = arith.constant 0.000000e+00 : f32
    %135 = vector.broadcast %cst_94 : f32 to vector<128x32xf32>
    %136 = arith.maximumf %134, %135 : vector<128x32xf32>
    %137 = arith.truncf %136 : vector<128x32xf32> to vector<128x32xbf16>
    %c0_95 = arith.constant 0 : index
    %c0_96 = arith.constant 0 : index
    %138 = vector.load %arg34[%c0_95, %c0_96] : memref<32x32xbf16, #tpu.memory_space<vmem>>, vector<32x32xbf16>
    %cst_97 = arith.constant dense<0.000000e+00> : vector<128x32xf32>
    %139 = tpu.matmul %137, %138, %cst_97 {dimension_numbers = #tpu.dot_dimension_numbers<[1], [0], [0], [1], [0, 0, 1, 1], [], []>} : vector<128x32xbf16>, vector<32x32xbf16>, vector<128x32xf32> -> vector<128x32xf32>
    %c0_98 = arith.constant 0 : index
    %c0_99 = arith.constant 0 : index
    %140 = vector.load %arg35[%c0_98, %c0_99] : memref<1x32xf32, #tpu.memory_space<vmem>>, vector<1x32xf32>
    %141 = vector.broadcast %140 : vector<1x32xf32> to vector<128x32xf32>
    %142 = arith.addf %139, %141 : vector<128x32xf32>
    %cst_100 = arith.constant 0.000000e+00 : f32
    %143 = vector.broadcast %cst_100 : f32 to vector<128x32xf32>
    %144 = arith.maximumf %142, %143 : vector<128x32xf32>
    %145 = arith.truncf %144 : vector<128x32xf32> to vector<128x32xbf16>
    %c0_101 = arith.constant 0 : index
    %c0_102 = arith.constant 0 : index
    %146 = vector.load %arg36[%c0_101, %c0_102] : memref<32x32xbf16, #tpu.memory_space<vmem>>, vector<32x32xbf16>
    %cst_103 = arith.constant dense<0.000000e+00> : vector<128x32xf32>
    %147 = tpu.matmul %145, %146, %cst_103 {dimension_numbers = #tpu.dot_dimension_numbers<[1], [0], [0], [1], [0, 0, 1, 1], [], []>} : vector<128x32xbf16>, vector<32x32xbf16>, vector<128x32xf32> -> vector<128x32xf32>
    %c0_104 = arith.constant 0 : index
    %c0_105 = arith.constant 0 : index
    %148 = vector.load %arg37[%c0_104, %c0_105] : memref<1x32xf32, #tpu.memory_space<vmem>>, vector<1x32xf32>
    %149 = vector.broadcast %148 : vector<1x32xf32> to vector<128x32xf32>
    %150 = arith.addf %147, %149 : vector<128x32xf32>
    %cst_106 = arith.constant 0.000000e+00 : f32
    %151 = vector.broadcast %cst_106 : f32 to vector<128x32xf32>
    %152 = arith.maximumf %150, %151 : vector<128x32xf32>
    %153 = arith.truncf %152 : vector<128x32xf32> to vector<128x32xbf16>
    %c0_107 = arith.constant 0 : index
    %c0_108 = arith.constant 0 : index
    %154 = vector.load %arg38[%c0_107, %c0_108] : memref<32x32xbf16, #tpu.memory_space<vmem>>, vector<32x32xbf16>
    %cst_109 = arith.constant dense<0.000000e+00> : vector<128x32xf32>
    %155 = tpu.matmul %153, %154, %cst_109 {dimension_numbers = #tpu.dot_dimension_numbers<[1], [0], [0], [1], [0, 0, 1, 1], [], []>} : vector<128x32xbf16>, vector<32x32xbf16>, vector<128x32xf32> -> vector<128x32xf32>
    %c0_110 = arith.constant 0 : index
    %c0_111 = arith.constant 0 : index
    %156 = vector.load %arg39[%c0_110, %c0_111] : memref<1x32xf32, #tpu.memory_space<vmem>>, vector<1x32xf32>
    %157 = vector.broadcast %156 : vector<1x32xf32> to vector<128x32xf32>
    %158 = arith.addf %155, %157 : vector<128x32xf32>
    %159 = arith.addf %158, %50 : vector<128x32xf32>
    %160 = arith.truncf %159 : vector<128x32xf32> to vector<128x32xbf16>
    %cst_112 = arith.constant dense<0.000000e+00> : vector<128x32xf32>
    %161 = tpu.matmul %6, %160, %cst_112 {dimension_numbers = #tpu.dot_dimension_numbers<[1], [0], [0], [1], [0, 0, 1, 1], [], []>} : vector<128x128xbf16>, vector<128x32xbf16>, vector<128x32xf32> -> vector<128x32xf32>
    %cst_113 = arith.constant dense<0.000000e+00> : vector<128x32xf32>
    %162 = tpu.matmul %12, %160, %cst_113 {dimension_numbers = #tpu.dot_dimension_numbers<[1], [0], [0], [1], [0, 0, 1, 1], [], []>} : vector<128x128xbf16>, vector<128x32xbf16>, vector<128x32xf32> -> vector<128x32xf32>
    %163 = arith.truncf %161 : vector<128x32xf32> to vector<128x32xbf16>
    %c0_114 = arith.constant 0 : index
    %c0_115 = arith.constant 0 : index
    %164 = vector.load %arg21[%c0_114, %c0_115] : memref<32x32xbf16, #tpu.memory_space<vmem>>, vector<32x32xbf16>
    %cst_116 = arith.constant dense<0.000000e+00> : vector<128x32xf32>
    %165 = tpu.matmul %163, %164, %cst_116 {dimension_numbers = #tpu.dot_dimension_numbers<[1], [0], [0], [1], [0, 0, 1, 1], [], []>} : vector<128x32xbf16>, vector<32x32xbf16>, vector<128x32xf32> -> vector<128x32xf32>
    %166 = arith.truncf %162 : vector<128x32xf32> to vector<128x32xbf16>
    %c0_117 = arith.constant 0 : index
    %c0_118 = arith.constant 0 : index
    %167 = vector.load %arg22[%c0_117, %c0_118] : memref<32x32xbf16, #tpu.memory_space<vmem>>, vector<32x32xbf16>
    %cst_119 = arith.constant dense<0.000000e+00> : vector<128x32xf32>
    %168 = tpu.matmul %166, %167, %cst_119 {dimension_numbers = #tpu.dot_dimension_numbers<[1], [0], [0], [1], [0, 0, 1, 1], [], []>} : vector<128x32xbf16>, vector<32x32xbf16>, vector<128x32xf32> -> vector<128x32xf32>
    %169 = arith.addf %165, %168 : vector<128x32xf32>
    %170 = arith.truncf %122 : vector<128x32xf32> to vector<128x32xbf16>
    %c0_120 = arith.constant 0 : index
    %c0_121 = arith.constant 0 : index
    %171 = vector.load %arg23[%c0_120, %c0_121] : memref<32x32xbf16, #tpu.memory_space<vmem>>, vector<32x32xbf16>
    %cst_122 = arith.constant dense<0.000000e+00> : vector<128x32xf32>
    %172 = tpu.matmul %170, %171, %cst_122 {dimension_numbers = #tpu.dot_dimension_numbers<[1], [0], [0], [1], [0, 0, 1, 1], [], []>} : vector<128x32xbf16>, vector<32x32xbf16>, vector<128x32xf32> -> vector<128x32xf32>
    %173 = arith.addf %169, %172 : vector<128x32xf32>
    %c0_123 = arith.constant 0 : index
    %c0_124 = arith.constant 0 : index
    %174 = vector.load %arg24[%c0_123, %c0_124] : memref<1x32xf32, #tpu.memory_space<vmem>>, vector<1x32xf32>
    %175 = vector.broadcast %174 : vector<1x32xf32> to vector<128x32xf32>
    %176 = arith.addf %173, %175 : vector<128x32xf32>
    %cst_125 = arith.constant 0.000000e+00 : f32
    %177 = vector.broadcast %cst_125 : f32 to vector<128x32xf32>
    %178 = arith.maximumf %176, %177 : vector<128x32xf32>
    %179 = arith.truncf %178 : vector<128x32xf32> to vector<128x32xbf16>
    %c0_126 = arith.constant 0 : index
    %c0_127 = arith.constant 0 : index
    %180 = vector.load %arg25[%c0_126, %c0_127] : memref<32x32xbf16, #tpu.memory_space<vmem>>, vector<32x32xbf16>
    %cst_128 = arith.constant dense<0.000000e+00> : vector<128x32xf32>
    %181 = tpu.matmul %179, %180, %cst_128 {dimension_numbers = #tpu.dot_dimension_numbers<[1], [0], [0], [1], [0, 0, 1, 1], [], []>} : vector<128x32xbf16>, vector<32x32xbf16>, vector<128x32xf32> -> vector<128x32xf32>
    %c0_129 = arith.constant 0 : index
    %c0_130 = arith.constant 0 : index
    %182 = vector.load %arg26[%c0_129, %c0_130] : memref<1x32xf32, #tpu.memory_space<vmem>>, vector<1x32xf32>
    %183 = vector.broadcast %182 : vector<1x32xf32> to vector<128x32xf32>
    %184 = arith.addf %181, %183 : vector<128x32xf32>
    %cst_131 = arith.constant 0.000000e+00 : f32
    %185 = vector.broadcast %cst_131 : f32 to vector<128x32xf32>
    %186 = arith.maximumf %184, %185 : vector<128x32xf32>
    %187 = arith.truncf %186 : vector<128x32xf32> to vector<128x32xbf16>
    %c0_132 = arith.constant 0 : index
    %c0_133 = arith.constant 0 : index
    %188 = vector.load %arg27[%c0_132, %c0_133] : memref<32x32xbf16, #tpu.memory_space<vmem>>, vector<32x32xbf16>
    %cst_134 = arith.constant dense<0.000000e+00> : vector<128x32xf32>
    %189 = tpu.matmul %187, %188, %cst_134 {dimension_numbers = #tpu.dot_dimension_numbers<[1], [0], [0], [1], [0, 0, 1, 1], [], []>} : vector<128x32xbf16>, vector<32x32xbf16>, vector<128x32xf32> -> vector<128x32xf32>
    %c0_135 = arith.constant 0 : index
    %c0_136 = arith.constant 0 : index
    %190 = vector.load %arg28[%c0_135, %c0_136] : memref<1x32xf32, #tpu.memory_space<vmem>>, vector<1x32xf32>
    %191 = vector.broadcast %190 : vector<1x32xf32> to vector<128x32xf32>
    %192 = arith.addf %189, %191 : vector<128x32xf32>
    %cst_137 = arith.constant 0.000000e+00 : f32
    %193 = vector.broadcast %cst_137 : f32 to vector<128x32xf32>
    %194 = arith.maximumf %192, %193 : vector<128x32xf32>
    %195 = arith.truncf %194 : vector<128x32xf32> to vector<128x32xbf16>
    %c0_138 = arith.constant 0 : index
    %c0_139 = arith.constant 0 : index
    %196 = vector.load %arg29[%c0_138, %c0_139] : memref<32x32xbf16, #tpu.memory_space<vmem>>, vector<32x32xbf16>
    %cst_140 = arith.constant dense<0.000000e+00> : vector<128x32xf32>
    %197 = tpu.matmul %195, %196, %cst_140 {dimension_numbers = #tpu.dot_dimension_numbers<[1], [0], [0], [1], [0, 0, 1, 1], [], []>} : vector<128x32xbf16>, vector<32x32xbf16>, vector<128x32xf32> -> vector<128x32xf32>
    %c0_141 = arith.constant 0 : index
    %c0_142 = arith.constant 0 : index
    %198 = vector.load %arg30[%c0_141, %c0_142] : memref<1x32xf32, #tpu.memory_space<vmem>>, vector<1x32xf32>
    %199 = vector.broadcast %198 : vector<1x32xf32> to vector<128x32xf32>
    %200 = arith.addf %197, %199 : vector<128x32xf32>
    %201 = arith.truncf %200 : vector<128x32xf32> to vector<128x32xbf16>
    %cst_143 = arith.constant dense<0.000000e+00> : vector<128x32xf32>
    %202 = tpu.matmul %19, %201, %cst_143 {dimension_numbers = #tpu.dot_dimension_numbers<[1], [0], [0], [1], [0, 0, 1, 1], [], []>} : vector<128x128xbf16>, vector<128x32xbf16>, vector<128x32xf32> -> vector<128x32xf32>
    %203 = arith.truncf %159 : vector<128x32xf32> to vector<128x32xbf16>
    %c0_144 = arith.constant 0 : index
    %c0_145 = arith.constant 0 : index
    %204 = vector.load %arg31[%c0_144, %c0_145] : memref<32x32xbf16, #tpu.memory_space<vmem>>, vector<32x32xbf16>
    %cst_146 = arith.constant dense<0.000000e+00> : vector<128x32xf32>
    %205 = tpu.matmul %203, %204, %cst_146 {dimension_numbers = #tpu.dot_dimension_numbers<[1], [0], [0], [1], [0, 0, 1, 1], [], []>} : vector<128x32xbf16>, vector<32x32xbf16>, vector<128x32xf32> -> vector<128x32xf32>
    %206 = arith.truncf %202 : vector<128x32xf32> to vector<128x32xbf16>
    %c0_147 = arith.constant 0 : index
    %c0_148 = arith.constant 0 : index
    %207 = vector.load %arg32[%c0_147, %c0_148] : memref<32x32xbf16, #tpu.memory_space<vmem>>, vector<32x32xbf16>
    %cst_149 = arith.constant dense<0.000000e+00> : vector<128x32xf32>
    %208 = tpu.matmul %206, %207, %cst_149 {dimension_numbers = #tpu.dot_dimension_numbers<[1], [0], [0], [1], [0, 0, 1, 1], [], []>} : vector<128x32xbf16>, vector<32x32xbf16>, vector<128x32xf32> -> vector<128x32xf32>
    %209 = arith.addf %205, %208 : vector<128x32xf32>
    %c0_150 = arith.constant 0 : index
    %c0_151 = arith.constant 0 : index
    %210 = vector.load %arg33[%c0_150, %c0_151] : memref<1x32xf32, #tpu.memory_space<vmem>>, vector<1x32xf32>
    %211 = vector.broadcast %210 : vector<1x32xf32> to vector<128x32xf32>
    %212 = arith.addf %209, %211 : vector<128x32xf32>
    %cst_152 = arith.constant 0.000000e+00 : f32
    %213 = vector.broadcast %cst_152 : f32 to vector<128x32xf32>
    %214 = arith.maximumf %212, %213 : vector<128x32xf32>
    %215 = arith.truncf %214 : vector<128x32xf32> to vector<128x32xbf16>
    %c0_153 = arith.constant 0 : index
    %c0_154 = arith.constant 0 : index
    %216 = vector.load %arg34[%c0_153, %c0_154] : memref<32x32xbf16, #tpu.memory_space<vmem>>, vector<32x32xbf16>
    %cst_155 = arith.constant dense<0.000000e+00> : vector<128x32xf32>
    %217 = tpu.matmul %215, %216, %cst_155 {dimension_numbers = #tpu.dot_dimension_numbers<[1], [0], [0], [1], [0, 0, 1, 1], [], []>} : vector<128x32xbf16>, vector<32x32xbf16>, vector<128x32xf32> -> vector<128x32xf32>
    %c0_156 = arith.constant 0 : index
    %c0_157 = arith.constant 0 : index
    %218 = vector.load %arg35[%c0_156, %c0_157] : memref<1x32xf32, #tpu.memory_space<vmem>>, vector<1x32xf32>
    %219 = vector.broadcast %218 : vector<1x32xf32> to vector<128x32xf32>
    %220 = arith.addf %217, %219 : vector<128x32xf32>
    %cst_158 = arith.constant 0.000000e+00 : f32
    %221 = vector.broadcast %cst_158 : f32 to vector<128x32xf32>
    %222 = arith.maximumf %220, %221 : vector<128x32xf32>
    %223 = arith.truncf %222 : vector<128x32xf32> to vector<128x32xbf16>
    %c0_159 = arith.constant 0 : index
    %c0_160 = arith.constant 0 : index
    %224 = vector.load %arg36[%c0_159, %c0_160] : memref<32x32xbf16, #tpu.memory_space<vmem>>, vector<32x32xbf16>
    %cst_161 = arith.constant dense<0.000000e+00> : vector<128x32xf32>
    %225 = tpu.matmul %223, %224, %cst_161 {dimension_numbers = #tpu.dot_dimension_numbers<[1], [0], [0], [1], [0, 0, 1, 1], [], []>} : vector<128x32xbf16>, vector<32x32xbf16>, vector<128x32xf32> -> vector<128x32xf32>
    %c0_162 = arith.constant 0 : index
    %c0_163 = arith.constant 0 : index
    %226 = vector.load %arg37[%c0_162, %c0_163] : memref<1x32xf32, #tpu.memory_space<vmem>>, vector<1x32xf32>
    %227 = vector.broadcast %226 : vector<1x32xf32> to vector<128x32xf32>
    %228 = arith.addf %225, %227 : vector<128x32xf32>
    %cst_164 = arith.constant 0.000000e+00 : f32
    %229 = vector.broadcast %cst_164 : f32 to vector<128x32xf32>
    %230 = arith.maximumf %228, %229 : vector<128x32xf32>
    %231 = arith.truncf %230 : vector<128x32xf32> to vector<128x32xbf16>
    %c0_165 = arith.constant 0 : index
    %c0_166 = arith.constant 0 : index
    %232 = vector.load %arg38[%c0_165, %c0_166] : memref<32x32xbf16, #tpu.memory_space<vmem>>, vector<32x32xbf16>
    %cst_167 = arith.constant dense<0.000000e+00> : vector<128x32xf32>
    %233 = tpu.matmul %231, %232, %cst_167 {dimension_numbers = #tpu.dot_dimension_numbers<[1], [0], [0], [1], [0, 0, 1, 1], [], []>} : vector<128x32xbf16>, vector<32x32xbf16>, vector<128x32xf32> -> vector<128x32xf32>
    %c0_168 = arith.constant 0 : index
    %c0_169 = arith.constant 0 : index
    %234 = vector.load %arg39[%c0_168, %c0_169] : memref<1x32xf32, #tpu.memory_space<vmem>>, vector<1x32xf32>
    %235 = vector.broadcast %234 : vector<1x32xf32> to vector<128x32xf32>
    %236 = arith.addf %233, %235 : vector<128x32xf32>
    %237 = arith.addf %236, %159 : vector<128x32xf32>
    %238 = arith.truncf %237 : vector<128x32xf32> to vector<128x32xbf16>
    %cst_170 = arith.constant dense<0.000000e+00> : vector<128x32xf32>
    %239 = tpu.matmul %6, %238, %cst_170 {dimension_numbers = #tpu.dot_dimension_numbers<[1], [0], [0], [1], [0, 0, 1, 1], [], []>} : vector<128x128xbf16>, vector<128x32xbf16>, vector<128x32xf32> -> vector<128x32xf32>
    %cst_171 = arith.constant dense<0.000000e+00> : vector<128x32xf32>
    %240 = tpu.matmul %12, %238, %cst_171 {dimension_numbers = #tpu.dot_dimension_numbers<[1], [0], [0], [1], [0, 0, 1, 1], [], []>} : vector<128x128xbf16>, vector<128x32xbf16>, vector<128x32xf32> -> vector<128x32xf32>
    %241 = arith.truncf %239 : vector<128x32xf32> to vector<128x32xbf16>
    %c0_172 = arith.constant 0 : index
    %c0_173 = arith.constant 0 : index
    %242 = vector.load %arg21[%c0_172, %c0_173] : memref<32x32xbf16, #tpu.memory_space<vmem>>, vector<32x32xbf16>
    %cst_174 = arith.constant dense<0.000000e+00> : vector<128x32xf32>
    %243 = tpu.matmul %241, %242, %cst_174 {dimension_numbers = #tpu.dot_dimension_numbers<[1], [0], [0], [1], [0, 0, 1, 1], [], []>} : vector<128x32xbf16>, vector<32x32xbf16>, vector<128x32xf32> -> vector<128x32xf32>
    %244 = arith.truncf %240 : vector<128x32xf32> to vector<128x32xbf16>
    %c0_175 = arith.constant 0 : index
    %c0_176 = arith.constant 0 : index
    %245 = vector.load %arg22[%c0_175, %c0_176] : memref<32x32xbf16, #tpu.memory_space<vmem>>, vector<32x32xbf16>
    %cst_177 = arith.constant dense<0.000000e+00> : vector<128x32xf32>
    %246 = tpu.matmul %244, %245, %cst_177 {dimension_numbers = #tpu.dot_dimension_numbers<[1], [0], [0], [1], [0, 0, 1, 1], [], []>} : vector<128x32xbf16>, vector<32x32xbf16>, vector<128x32xf32> -> vector<128x32xf32>
    %247 = arith.addf %243, %246 : vector<128x32xf32>
    %248 = arith.truncf %200 : vector<128x32xf32> to vector<128x32xbf16>
    %c0_178 = arith.constant 0 : index
    %c0_179 = arith.constant 0 : index
    %249 = vector.load %arg23[%c0_178, %c0_179] : memref<32x32xbf16, #tpu.memory_space<vmem>>, vector<32x32xbf16>
    %cst_180 = arith.constant dense<0.000000e+00> : vector<128x32xf32>
    %250 = tpu.matmul %248, %249, %cst_180 {dimension_numbers = #tpu.dot_dimension_numbers<[1], [0], [0], [1], [0, 0, 1, 1], [], []>} : vector<128x32xbf16>, vector<32x32xbf16>, vector<128x32xf32> -> vector<128x32xf32>
    %251 = arith.addf %247, %250 : vector<128x32xf32>
    %c0_181 = arith.constant 0 : index
    %c0_182 = arith.constant 0 : index
    %252 = vector.load %arg24[%c0_181, %c0_182] : memref<1x32xf32, #tpu.memory_space<vmem>>, vector<1x32xf32>
    %253 = vector.broadcast %252 : vector<1x32xf32> to vector<128x32xf32>
    %254 = arith.addf %251, %253 : vector<128x32xf32>
    %cst_183 = arith.constant 0.000000e+00 : f32
    %255 = vector.broadcast %cst_183 : f32 to vector<128x32xf32>
    %256 = arith.maximumf %254, %255 : vector<128x32xf32>
    %257 = arith.truncf %256 : vector<128x32xf32> to vector<128x32xbf16>
    %c0_184 = arith.constant 0 : index
    %c0_185 = arith.constant 0 : index
    %258 = vector.load %arg25[%c0_184, %c0_185] : memref<32x32xbf16, #tpu.memory_space<vmem>>, vector<32x32xbf16>
    %cst_186 = arith.constant dense<0.000000e+00> : vector<128x32xf32>
    %259 = tpu.matmul %257, %258, %cst_186 {dimension_numbers = #tpu.dot_dimension_numbers<[1], [0], [0], [1], [0, 0, 1, 1], [], []>} : vector<128x32xbf16>, vector<32x32xbf16>, vector<128x32xf32> -> vector<128x32xf32>
    %c0_187 = arith.constant 0 : index
    %c0_188 = arith.constant 0 : index
    %260 = vector.load %arg26[%c0_187, %c0_188] : memref<1x32xf32, #tpu.memory_space<vmem>>, vector<1x32xf32>
    %261 = vector.broadcast %260 : vector<1x32xf32> to vector<128x32xf32>
    %262 = arith.addf %259, %261 : vector<128x32xf32>
    %cst_189 = arith.constant 0.000000e+00 : f32
    %263 = vector.broadcast %cst_189 : f32 to vector<128x32xf32>
    %264 = arith.maximumf %262, %263 : vector<128x32xf32>
    %265 = arith.truncf %264 : vector<128x32xf32> to vector<128x32xbf16>
    %c0_190 = arith.constant 0 : index
    %c0_191 = arith.constant 0 : index
    %266 = vector.load %arg27[%c0_190, %c0_191] : memref<32x32xbf16, #tpu.memory_space<vmem>>, vector<32x32xbf16>
    %cst_192 = arith.constant dense<0.000000e+00> : vector<128x32xf32>
    %267 = tpu.matmul %265, %266, %cst_192 {dimension_numbers = #tpu.dot_dimension_numbers<[1], [0], [0], [1], [0, 0, 1, 1], [], []>} : vector<128x32xbf16>, vector<32x32xbf16>, vector<128x32xf32> -> vector<128x32xf32>
    %c0_193 = arith.constant 0 : index
    %c0_194 = arith.constant 0 : index
    %268 = vector.load %arg28[%c0_193, %c0_194] : memref<1x32xf32, #tpu.memory_space<vmem>>, vector<1x32xf32>
    %269 = vector.broadcast %268 : vector<1x32xf32> to vector<128x32xf32>
    %270 = arith.addf %267, %269 : vector<128x32xf32>
    %cst_195 = arith.constant 0.000000e+00 : f32
    %271 = vector.broadcast %cst_195 : f32 to vector<128x32xf32>
    %272 = arith.maximumf %270, %271 : vector<128x32xf32>
    %273 = arith.truncf %272 : vector<128x32xf32> to vector<128x32xbf16>
    %c0_196 = arith.constant 0 : index
    %c0_197 = arith.constant 0 : index
    %274 = vector.load %arg29[%c0_196, %c0_197] : memref<32x32xbf16, #tpu.memory_space<vmem>>, vector<32x32xbf16>
    %cst_198 = arith.constant dense<0.000000e+00> : vector<128x32xf32>
    %275 = tpu.matmul %273, %274, %cst_198 {dimension_numbers = #tpu.dot_dimension_numbers<[1], [0], [0], [1], [0, 0, 1, 1], [], []>} : vector<128x32xbf16>, vector<32x32xbf16>, vector<128x32xf32> -> vector<128x32xf32>
    %c0_199 = arith.constant 0 : index
    %c0_200 = arith.constant 0 : index
    %276 = vector.load %arg30[%c0_199, %c0_200] : memref<1x32xf32, #tpu.memory_space<vmem>>, vector<1x32xf32>
    %277 = vector.broadcast %276 : vector<1x32xf32> to vector<128x32xf32>
    %278 = arith.addf %275, %277 : vector<128x32xf32>
    %279 = arith.truncf %278 : vector<128x32xf32> to vector<128x32xbf16>
    %cst_201 = arith.constant dense<0.000000e+00> : vector<128x32xf32>
    %280 = tpu.matmul %19, %279, %cst_201 {dimension_numbers = #tpu.dot_dimension_numbers<[1], [0], [0], [1], [0, 0, 1, 1], [], []>} : vector<128x128xbf16>, vector<128x32xbf16>, vector<128x32xf32> -> vector<128x32xf32>
    %281 = arith.truncf %237 : vector<128x32xf32> to vector<128x32xbf16>
    %c0_202 = arith.constant 0 : index
    %c0_203 = arith.constant 0 : index
    %282 = vector.load %arg31[%c0_202, %c0_203] : memref<32x32xbf16, #tpu.memory_space<vmem>>, vector<32x32xbf16>
    %cst_204 = arith.constant dense<0.000000e+00> : vector<128x32xf32>
    %283 = tpu.matmul %281, %282, %cst_204 {dimension_numbers = #tpu.dot_dimension_numbers<[1], [0], [0], [1], [0, 0, 1, 1], [], []>} : vector<128x32xbf16>, vector<32x32xbf16>, vector<128x32xf32> -> vector<128x32xf32>
    %284 = arith.truncf %280 : vector<128x32xf32> to vector<128x32xbf16>
    %c0_205 = arith.constant 0 : index
    %c0_206 = arith.constant 0 : index
    %285 = vector.load %arg32[%c0_205, %c0_206] : memref<32x32xbf16, #tpu.memory_space<vmem>>, vector<32x32xbf16>
    %cst_207 = arith.constant dense<0.000000e+00> : vector<128x32xf32>
    %286 = tpu.matmul %284, %285, %cst_207 {dimension_numbers = #tpu.dot_dimension_numbers<[1], [0], [0], [1], [0, 0, 1, 1], [], []>} : vector<128x32xbf16>, vector<32x32xbf16>, vector<128x32xf32> -> vector<128x32xf32>
    %287 = arith.addf %283, %286 : vector<128x32xf32>
    %c0_208 = arith.constant 0 : index
    %c0_209 = arith.constant 0 : index
    %288 = vector.load %arg33[%c0_208, %c0_209] : memref<1x32xf32, #tpu.memory_space<vmem>>, vector<1x32xf32>
    %289 = vector.broadcast %288 : vector<1x32xf32> to vector<128x32xf32>
    %290 = arith.addf %287, %289 : vector<128x32xf32>
    %cst_210 = arith.constant 0.000000e+00 : f32
    %291 = vector.broadcast %cst_210 : f32 to vector<128x32xf32>
    %292 = arith.maximumf %290, %291 : vector<128x32xf32>
    %293 = arith.truncf %292 : vector<128x32xf32> to vector<128x32xbf16>
    %c0_211 = arith.constant 0 : index
    %c0_212 = arith.constant 0 : index
    %294 = vector.load %arg34[%c0_211, %c0_212] : memref<32x32xbf16, #tpu.memory_space<vmem>>, vector<32x32xbf16>
    %cst_213 = arith.constant dense<0.000000e+00> : vector<128x32xf32>
    %295 = tpu.matmul %293, %294, %cst_213 {dimension_numbers = #tpu.dot_dimension_numbers<[1], [0], [0], [1], [0, 0, 1, 1], [], []>} : vector<128x32xbf16>, vector<32x32xbf16>, vector<128x32xf32> -> vector<128x32xf32>
    %c0_214 = arith.constant 0 : index
    %c0_215 = arith.constant 0 : index
    %296 = vector.load %arg35[%c0_214, %c0_215] : memref<1x32xf32, #tpu.memory_space<vmem>>, vector<1x32xf32>
    %297 = vector.broadcast %296 : vector<1x32xf32> to vector<128x32xf32>
    %298 = arith.addf %295, %297 : vector<128x32xf32>
    %cst_216 = arith.constant 0.000000e+00 : f32
    %299 = vector.broadcast %cst_216 : f32 to vector<128x32xf32>
    %300 = arith.maximumf %298, %299 : vector<128x32xf32>
    %301 = arith.truncf %300 : vector<128x32xf32> to vector<128x32xbf16>
    %c0_217 = arith.constant 0 : index
    %c0_218 = arith.constant 0 : index
    %302 = vector.load %arg36[%c0_217, %c0_218] : memref<32x32xbf16, #tpu.memory_space<vmem>>, vector<32x32xbf16>
    %cst_219 = arith.constant dense<0.000000e+00> : vector<128x32xf32>
    %303 = tpu.matmul %301, %302, %cst_219 {dimension_numbers = #tpu.dot_dimension_numbers<[1], [0], [0], [1], [0, 0, 1, 1], [], []>} : vector<128x32xbf16>, vector<32x32xbf16>, vector<128x32xf32> -> vector<128x32xf32>
    %c0_220 = arith.constant 0 : index
    %c0_221 = arith.constant 0 : index
    %304 = vector.load %arg37[%c0_220, %c0_221] : memref<1x32xf32, #tpu.memory_space<vmem>>, vector<1x32xf32>
    %305 = vector.broadcast %304 : vector<1x32xf32> to vector<128x32xf32>
    %306 = arith.addf %303, %305 : vector<128x32xf32>
    %cst_222 = arith.constant 0.000000e+00 : f32
    %307 = vector.broadcast %cst_222 : f32 to vector<128x32xf32>
    %308 = arith.maximumf %306, %307 : vector<128x32xf32>
    %309 = arith.truncf %308 : vector<128x32xf32> to vector<128x32xbf16>
    %c0_223 = arith.constant 0 : index
    %c0_224 = arith.constant 0 : index
    %310 = vector.load %arg38[%c0_223, %c0_224] : memref<32x32xbf16, #tpu.memory_space<vmem>>, vector<32x32xbf16>
    %cst_225 = arith.constant dense<0.000000e+00> : vector<128x32xf32>
    %311 = tpu.matmul %309, %310, %cst_225 {dimension_numbers = #tpu.dot_dimension_numbers<[1], [0], [0], [1], [0, 0, 1, 1], [], []>} : vector<128x32xbf16>, vector<32x32xbf16>, vector<128x32xf32> -> vector<128x32xf32>
    %c0_226 = arith.constant 0 : index
    %c0_227 = arith.constant 0 : index
    %312 = vector.load %arg39[%c0_226, %c0_227] : memref<1x32xf32, #tpu.memory_space<vmem>>, vector<1x32xf32>
    %313 = vector.broadcast %312 : vector<1x32xf32> to vector<128x32xf32>
    %314 = arith.addf %311, %313 : vector<128x32xf32>
    %315 = arith.addf %314, %237 : vector<128x32xf32>
    %316 = arith.truncf %315 : vector<128x32xf32> to vector<128x32xbf16>
    %c0_228 = arith.constant 0 : index
    %c0_229 = arith.constant 0 : index
    %317 = vector.load %arg40[%c0_228, %c0_229] : memref<32x32xbf16, #tpu.memory_space<vmem>>, vector<32x32xbf16>
    %cst_230 = arith.constant dense<0.000000e+00> : vector<128x32xf32>
    %318 = tpu.matmul %316, %317, %cst_230 {dimension_numbers = #tpu.dot_dimension_numbers<[1], [0], [0], [1], [0, 0, 1, 1], [], []>} : vector<128x32xbf16>, vector<32x32xbf16>, vector<128x32xf32> -> vector<128x32xf32>
    %c0_231 = arith.constant 0 : index
    %c0_232 = arith.constant 0 : index
    %319 = vector.load %arg41[%c0_231, %c0_232] : memref<1x32xf32, #tpu.memory_space<vmem>>, vector<1x32xf32>
    %320 = vector.broadcast %319 : vector<1x32xf32> to vector<128x32xf32>
    %321 = arith.addf %318, %320 : vector<128x32xf32>
    %cst_233 = arith.constant 0.000000e+00 : f32
    %322 = vector.broadcast %cst_233 : f32 to vector<128x32xf32>
    %323 = arith.maximumf %321, %322 : vector<128x32xf32>
    %324 = arith.truncf %323 : vector<128x32xf32> to vector<128x32xbf16>
    %c0_234 = arith.constant 0 : index
    %c0_235 = arith.constant 0 : index
    %325 = vector.load %arg42[%c0_234, %c0_235] : memref<32x32xbf16, #tpu.memory_space<vmem>>, vector<32x32xbf16>
    %cst_236 = arith.constant dense<0.000000e+00> : vector<128x32xf32>
    %326 = tpu.matmul %324, %325, %cst_236 {dimension_numbers = #tpu.dot_dimension_numbers<[1], [0], [0], [1], [0, 0, 1, 1], [], []>} : vector<128x32xbf16>, vector<32x32xbf16>, vector<128x32xf32> -> vector<128x32xf32>
    %c0_237 = arith.constant 0 : index
    %c0_238 = arith.constant 0 : index
    %327 = vector.load %arg43[%c0_237, %c0_238] : memref<1x32xf32, #tpu.memory_space<vmem>>, vector<1x32xf32>
    %328 = vector.broadcast %327 : vector<1x32xf32> to vector<128x32xf32>
    %329 = arith.addf %326, %328 : vector<128x32xf32>
    %cst_239 = arith.constant 0.000000e+00 : f32
    %330 = vector.broadcast %cst_239 : f32 to vector<128x32xf32>
    %331 = arith.maximumf %329, %330 : vector<128x32xf32>
    %332 = arith.truncf %331 : vector<128x32xf32> to vector<128x32xbf16>
    %c0_240 = arith.constant 0 : index
    %c0_241 = arith.constant 0 : index
    %333 = vector.load %arg44[%c0_240, %c0_241] : memref<32x32xbf16, #tpu.memory_space<vmem>>, vector<32x32xbf16>
    %cst_242 = arith.constant dense<0.000000e+00> : vector<128x32xf32>
    %334 = tpu.matmul %332, %333, %cst_242 {dimension_numbers = #tpu.dot_dimension_numbers<[1], [0], [0], [1], [0, 0, 1, 1], [], []>} : vector<128x32xbf16>, vector<32x32xbf16>, vector<128x32xf32> -> vector<128x32xf32>
    %c0_243 = arith.constant 0 : index
    %c0_244 = arith.constant 0 : index
    %335 = vector.load %arg45[%c0_243, %c0_244] : memref<1x32xf32, #tpu.memory_space<vmem>>, vector<1x32xf32>
    %336 = vector.broadcast %335 : vector<1x32xf32> to vector<128x32xf32>
    %337 = arith.addf %334, %336 : vector<128x32xf32>
    %cst_245 = arith.constant 0.000000e+00 : f32
    %338 = vector.broadcast %cst_245 : f32 to vector<128x32xf32>
    %339 = arith.maximumf %337, %338 : vector<128x32xf32>
    %340 = arith.truncf %339 : vector<128x32xf32> to vector<128x32xbf16>
    %c0_246 = arith.constant 0 : index
    %c0_247 = arith.constant 0 : index
    %341 = vector.load %arg46[%c0_246, %c0_247] : memref<32x32xbf16, #tpu.memory_space<vmem>>, vector<32x32xbf16>
    %cst_248 = arith.constant dense<0.000000e+00> : vector<128x32xf32>
    %342 = tpu.matmul %340, %341, %cst_248 {dimension_numbers = #tpu.dot_dimension_numbers<[1], [0], [0], [1], [0, 0, 1, 1], [], []>} : vector<128x32xbf16>, vector<32x32xbf16>, vector<128x32xf32> -> vector<128x32xf32>
    %c0_249 = arith.constant 0 : index
    %c0_250 = arith.constant 0 : index
    %343 = vector.load %arg47[%c0_249, %c0_250] : memref<1x32xf32, #tpu.memory_space<vmem>>, vector<1x32xf32>
    %344 = vector.broadcast %343 : vector<1x32xf32> to vector<128x32xf32>
    %345 = arith.addf %342, %344 : vector<128x32xf32>
    %cst_251 = arith.constant 0.000000e+00 : f32
    %346 = vector.broadcast %cst_251 : f32 to vector<128x32xf32>
    %347 = arith.maximumf %345, %346 : vector<128x32xf32>
    %c0_252 = arith.constant 0 : index
    %c0_253 = arith.constant 0 : index
    %348 = vector.load %arg48[%c0_252, %c0_253] : memref<8x32xbf16, #tpu.memory_space<vmem>>, vector<8x32xbf16>
    %349 = arith.truncf %347 : vector<128x32xf32> to vector<128x32xbf16>
    %cst_254 = arith.constant dense<0.000000e+00> : vector<8x128xf32>
    %350 = tpu.matmul %348, %349, %cst_254 {dimension_numbers = #tpu.dot_dimension_numbers<[1], [1], [0], [0], [0, 0, 1, 0], [], []>} : vector<8x32xbf16>, vector<128x32xbf16>, vector<8x128xf32> -> vector<8x128xf32>
    %c0_255 = arith.constant 0 : index
    %c0_256 = arith.constant 0 : index
    %351 = vector.load %arg49[%c0_255, %c0_256] : memref<8x1xf32, #tpu.memory_space<vmem>>, vector<8x1xf32>
    %352 = vector.broadcast %351 : vector<8x1xf32> to vector<8x128xf32>
    %353 = arith.addf %350, %352 : vector<8x128xf32>
    %c0_257 = arith.constant 0 : index
    %c0_258 = arith.constant 0 : index
    %354 = vector.load %arg50[%c0_257, %c0_258] : memref<8x128xf32, #tpu.memory_space<vmem>>, vector<8x128xf32>
    tpu.vector_store %arg50[%c0_257, %c0_258], %353 {strides = array<i32>} : memref<8x128xf32, #tpu.memory_space<vmem>>, vector<8x128xf32>,
    %c0_259 = arith.constant 0 : index
    %c0_260 = arith.constant 0 : index
    %355 = vector.load %arg51[%c0_259, %c0_260] : memref<128x32xf32, #tpu.memory_space<vmem>>, vector<128x32xf32>
    tpu.vector_store %arg51[%c0_259, %c0_260], %278 {strides = array<i32>} : memref<128x32xf32, #tpu.memory_space<vmem>>, vector<128x32xf32>,
    return
  }
}

</mosaic_0001>

<llo_original>
// kernel: mesh_pde_forward.1
$region0: #{mesh_pde_forward.1}
  #allocation0 [shape = 'u32[]', space=smem, size = 0x4, offset = 0x4, fixed_abs, tag = 'smem constant byte address 0x4 - core index']
  #allocation1 [shape = 'u32[72,128]{1,0:T(1,128)}', space=vmem, size = 0x9000, scoped, tag = 'internal scratch']
  %s0 = inlined_call_operand.smem [shape: u32[52], index: -1, kind: input, shape index: {}]
  %s1 = sld [smem:[%s0]]
  %s2 = scalar_lea.smem %s0, 1
  %s3 = sld [smem:[%s2]]
  %s4 = scalar_lea.smem %s0, 2
  %s5 = sld [smem:[%s4]]
  %s6 = scalar_lea.smem %s0, 3
  %s7 = sld [smem:[%s6]]
  %s8 = scalar_lea.smem %s0, 4
  %s9 = sld [smem:[%s8]]
  %s10 = scalar_lea.smem %s0, 5
  %s11 = sld [smem:[%s10]]
  %s12 = scalar_lea.smem %s0, 6
  %s13 = sld [smem:[%s12]]
  %s14 = scalar_lea.smem %s0, 7
  %s15 = sld [smem:[%s14]]
  %s16 = scalar_lea.smem %s0, 8
  %s17 = sld [smem:[%s16]]
  %s18 = scalar_lea.smem %s0, 9
  %s19 = sld [smem:[%s18]]
  %s20 = scalar_lea.smem %s0, 10
  %s21 = sld [smem:[%s20]]
  %s22 = scalar_lea.smem %s0, 11
  %s23 = sld [smem:[%s22]]
  %s24 = scalar_lea.smem %s0, 12
  %s25 = sld [smem:[%s24]]
  %s26 = scalar_lea.smem %s0, 13
  %s27 = sld [smem:[%s26]]
  %s28 = scalar_lea.smem %s0, 14
  %s29 = sld [smem:[%s28]]
  %s30 = scalar_lea.smem %s0, 15
  %s31 = sld [smem:[%s30]]
  %s32 = scalar_lea.smem %s0, 16
  %s33 = sld [smem:[%s32]]
  %s34 = scalar_lea.smem %s0, 17
  %s35 = sld [smem:[%s34]]
  %s36 = scalar_lea.smem %s0, 18
  %s37 = sld [smem:[%s36]]
  %s38 = scalar_lea.smem %s0, 19
  %s39 = sld [smem:[%s38]]
  %s40 = scalar_lea.smem %s0, 20
  %s41 = sld [smem:[%s40]]
  %s42 = scalar_lea.smem %s0, 21
  %s43 = sld [smem:[%s42]]
  %s44 = scalar_lea.smem %s0, 22
  %s45 = sld [smem:[%s44]]
  %s46 = scalar_lea.smem %s0, 23
  %s47 = sld [smem:[%s46]]
  %s48 = scalar_lea.smem %s0, 24
  %s49 = sld [smem:[%s48]]
  %s50 = scalar_lea.smem %s0, 25
  %s51 = sld [smem:[%s50]]
  %s52 = scalar_lea.smem %s0, 26
  %s53 = sld [smem:[%s52]]
  %s54 = scalar_lea.smem %s0, 27
  %s55 = sld [smem:[%s54]]
  %s56 = scalar_lea.smem %s0, 28
  %s57 = sld [smem:[%s56]]
  %s58 = scalar_lea.smem %s0, 29
  %s59 = sld [smem:[%s58]]
  %s60 = scalar_lea.smem %s0, 30
  %s61 = sld [smem:[%s60]]
  %s62 = scalar_lea.smem %s0, 31
  %s63 = sld [smem:[%s62]]
  %s64 = scalar_lea.smem %s0, 32
  %s65 = sld [smem:[%s64]]
  %s66 = scalar_lea.smem %s0, 33
  %s67 = sld [smem:[%s66]]
  %s68 = scalar_lea.smem %s0, 34
  %s69 = sld [smem:[%s68]]
  %s70 = scalar_lea.smem %s0, 35
  %s71 = sld [smem:[%s70]]
  %s72 = scalar_lea.smem %s0, 36
  %s73 = sld [smem:[%s72]]
  %s74 = scalar_lea.smem %s0, 37
  %s75 = sld [smem:[%s74]]
  %s76 = scalar_lea.smem %s0, 38
  %s77 = sld [smem:[%s76]]
  %s78 = scalar_lea.smem %s0, 39
  %s79 = sld [smem:[%s78]]
  %s80 = scalar_lea.smem %s0, 40
  %s81 = sld [smem:[%s80]]
  %s82 = scalar_lea.smem %s0, 41
  %s83 = sld [smem:[%s82]]
  %s84 = scalar_lea.smem %s0, 42
  %s85 = sld [smem:[%s84]]
  %s86 = scalar_lea.smem %s0, 43
  %s87 = sld [smem:[%s86]]
  %s88 = scalar_lea.smem %s0, 44
  %s89 = sld [smem:[%s88]]
  %s90 = scalar_lea.smem %s0, 45
  %s91 = sld [smem:[%s90]]
  %s92 = scalar_lea.smem %s0, 46
  %s93 = sld [smem:[%s92]]
  %s94 = scalar_lea.smem %s0, 47
  %s95 = sld [smem:[%s94]]
  %s96 = scalar_lea.smem %s0, 48
  %s97 = sld [smem:[%s96]]
  %s98 = scalar_lea.smem %s0, 49
  %s99 = sld [smem:[%s98]]
  %s100 = scalar_lea.smem %s0, 50
  %s101 = sld [smem:[%s100]]
  %s102 = scalar_lea.smem %s0, 51
  %s103 = sld [smem:[%s102]]
  %104 = xla_tuple %s101, %s103
  %s105 = sld [smem:[#allocation0]]
  $region238: #{mesh_pde_forward.1} parent=0
    _
  %s107 = ssub.s32 1, %s105
  %s108 = scalar_select 0, %s107, %s105
  $region1: #{mesh_pde_forward.1} parent=0
    #allocation2 [shape = 'u8[512]{0}', space=vmem, size = 0x400, scoped, tag = 'input window, operand 39, single buffered']
    #allocation3 [shape = 's32[1]{0}', space=sflag, size = 0x4, scoped, tag = 'scoped memory for mesh_pde_forward.1']
    #allocation4 [shape = 'u8[512]{0}', space=vmem, size = 0x400, scoped, tag = 'input window, operand 41, single buffered']
    #allocation5 [shape = 's32[1]{0}', space=sflag, size = 0x4, scoped, tag = 'scoped memory for mesh_pde_forward.1']
    #allocation6 [shape = 'u8[512]{0}', space=vmem, size = 0x400, scoped, tag = 'input window, operand 43, single buffered']
    #allocation7 [shape = 'u8[512]{0}', space=vmem, size = 0x400, scoped, tag = 'input window, operand 45, single buffered']
    #allocation8 [shape = 's32[1]{0}', space=sflag, size = 0x4, scoped, tag = 'scoped memory for mesh_pde_forward.1']
    #allocation9 [shape = 'u8[512]{0}', space=vmem, size = 0x400, scoped, tag = 'input window, operand 47, single buffered']
    %109 = vsyncpa [#allocation3], 0
    %110 = vsyncpa [#allocation5], 0
    %111 = vsyncpa [#allocation8], 0
    // Predicated region
    $region2: #{mesh_pde_forward.1} parent=1 // pred_check
      _
    $region3: #{mesh_pde_forward.1} parent=1 // pred_check_branch
      %113 = sbr.rel (0) target = $region5
    $region4: #{mesh_pde_forward.1} parent=1 // pred_region
      _
    $region5: #{mesh_pde_forward.1} parent=1 // pred_fallthru
      _
    // Predicated region
    $region6: #{mesh_pde_forward.1} parent=1 // pred_check
      _
    $region7: #{mesh_pde_forward.1} parent=1 // pred_check_branch
      %115 = sbr.rel (0) target = $region9
    $region8: #{mesh_pde_forward.1} parent=1 // pred_region
      _
    $region9: #{mesh_pde_forward.1} parent=1 // pred_fallthru
      _
    // Predicated region
    $region10: #{mesh_pde_forward.1} parent=1 // pred_check
      _
    $region11: #{mesh_pde_forward.1} parent=1 // pred_check_branch
      %117 = sbr.rel (0) target = $region13
    $region12: #{mesh_pde_forward.1} parent=1 // pred_region
      _
    $region13: #{mesh_pde_forward.1} parent=1 // pred_fallthru
      _
    // Predicated region
    $region14: #{mesh_pde_forward.1} parent=1 // pred_check
      _
    $region15: #{mesh_pde_forward.1} parent=1 // pred_check_branch
      %119 = sbr.rel (0) target = $region17
    $region16: #{mesh_pde_forward.1} parent=1 // pred_region
      _
    $region17: #{mesh_pde_forward.1} parent=1 // pred_fallthru
      _
    // Predicated region
    $region18: #{mesh_pde_forward.1} parent=1 // pred_check
      _
    $region19: #{mesh_pde_forward.1} parent=1 // pred_check_branch
      %121 = sbr.rel (0) target = $region21
    $region20: #{mesh_pde_forward.1} parent=1 // pred_region
      _
    $region21: #{mesh_pde_forward.1} parent=1 // pred_fallthru
      _
    // Predicated region
    $region22: #{mesh_pde_forward.1} parent=1 // pred_check
      _
    $region23: #{mesh_pde_forward.1} parent=1 // pred_check_branch
      %123 = sbr.rel (0) target = $region25
    $region24: #{mesh_pde_forward.1} parent=1 // pred_region
      _
    $region25: #{mesh_pde_forward.1} parent=1 // pred_fallthru
      _
    // Predicated region
    $region26: #{mesh_pde_forward.1} parent=1 // pred_check
      _
    $region27: #{mesh_pde_forward.1} parent=1 // pred_check_branch
      %125 = sbr.rel (0) target = $region29
    $region28: #{mesh_pde_forward.1} parent=1 // pred_region
      _
    $region29: #{mesh_pde_forward.1} parent=1 // pred_fallthru
      _
    // Predicated region
    $region30: #{mesh_pde_forward.1} parent=1 // pred_check
      _
    $region31: #{mesh_pde_forward.1} parent=1 // pred_check_branch
      %127 = sbr.rel (0) target = $region33
    $region32: #{mesh_pde_forward.1} parent=1 // pred_region
      _
    $region33: #{mesh_pde_forward.1} parent=1 // pred_fallthru
      _
    // Predicated region
    $region34: #{mesh_pde_forward.1} parent=1 // pred_check
      _
    $region35: #{mesh_pde_forward.1} parent=1 // pred_check_branch
      %129 = sbr.rel (0) target = $region37
    $region36: #{mesh_pde_forward.1} parent=1 // pred_region
      _
    $region37: #{mesh_pde_forward.1} parent=1 // pred_fallthru
      _
    // Predicated region
    $region38: #{mesh_pde_forward.1} parent=1 // pred_check
      _
    $region39: #{mesh_pde_forward.1} parent=1 // pred_check_branch
      %131 = sbr.rel (0) target = $region41
    $region40: #{mesh_pde_forward.1} parent=1 // pred_region
      _
    $region41: #{mesh_pde_forward.1} parent=1 // pred_fallthru
      _
    // Predicated region
    $region42: #{mesh_pde_forward.1} parent=1 // pred_check
      _
    $region43: #{mesh_pde_forward.1} parent=1 // pred_check_branch
      %133 = sbr.rel (0) target = $region45
    $region44: #{mesh_pde_forward.1} parent=1 // pred_region
      _
    $region45: #{mesh_pde_forward.1} parent=1 // pred_fallthru
      _
    // Predicated region
    $region46: #{mesh_pde_forward.1} parent=1 // pred_check
      _
    $region47: #{mesh_pde_forward.1} parent=1 // pred_check_branch
      %135 = sbr.rel (0) target = $region49
    $region48: #{mesh_pde_forward.1} parent=1 // pred_region
      _
    $region49: #{mesh_pde_forward.1} parent=1 // pred_fallthru
      _
    // Predicated region
    $region50: #{mesh_pde_forward.1} parent=1 // pred_check
      _
    $region51: #{mesh_pde_forward.1} parent=1 // pred_check_branch
      %137 = sbr.rel (0) target = $region53
    $region52: #{mesh_pde_forward.1} parent=1 // pred_region
      _
    $region53: #{mesh_pde_forward.1} parent=1 // pred_fallthru
      _
    // Predicated region
    $region54: #{mesh_pde_forward.1} parent=1 // pred_check
      _
    $region55: #{mesh_pde_forward.1} parent=1 // pred_check_branch
      %139 = sbr.rel (0) target = $region57
    $region56: #{mesh_pde_forward.1} parent=1 // pred_region
      _
    $region57: #{mesh_pde_forward.1} parent=1 // pred_fallthru
      _
    // Predicated region
    $region58: #{mesh_pde_forward.1} parent=1 // pred_check
      _
    $region59: #{mesh_pde_forward.1} parent=1 // pred_check_branch
      %141 = sbr.rel (0) target = $region61
    $region60: #{mesh_pde_forward.1} parent=1 // pred_region
      _
    $region61: #{mesh_pde_forward.1} parent=1 // pred_fallthru
      _
    // Predicated region
    $region62: #{mesh_pde_forward.1} parent=1 // pred_check
      _
    $region63: #{mesh_pde_forward.1} parent=1 // pred_check_branch
      %143 = sbr.rel (0) target = $region65
    $region64: #{mesh_pde_forward.1} parent=1 // pred_region
      _
    $region65: #{mesh_pde_forward.1} parent=1 // pred_fallthru
      _
    // Predicated region
    $region66: #{mesh_pde_forward.1} parent=1 // pred_check
      _
    $region67: #{mesh_pde_forward.1} parent=1 // pred_check_branch
      %145 = sbr.rel (0) target = $region69
    $region68: #{mesh_pde_forward.1} parent=1 // pred_region
      _
    $region69: #{mesh_pde_forward.1} parent=1 // pred_fallthru
      _
    // Predicated region
    $region70: #{mesh_pde_forward.1} parent=1 // pred_check
      _
    $region71: #{mesh_pde_forward.1} parent=1 // pred_check_branch
      %147 = sbr.rel (0) target = $region73
    $region72: #{mesh_pde_forward.1} parent=1 // pred_region
      _
    $region73: #{mesh_pde_forward.1} parent=1 // pred_fallthru
      _
    // Predicated region
    $region74: #{mesh_pde_forward.1} parent=1 // pred_check
      _
    $region75: #{mesh_pde_forward.1} parent=1 // pred_check_branch
      %149 = sbr.rel (0) target = $region77
    $region76: #{mesh_pde_forward.1} parent=1 // pred_region
      _
    $region77: #{mesh_pde_forward.1} parent=1 // pred_fallthru
      _
    // Predicated region
    $region78: #{mesh_pde_forward.1} parent=1 // pred_check
      _
    $region79: #{mesh_pde_forward.1} parent=1 // pred_check_branch
      %151 = sbr.rel (0) target = $region81
    $region80: #{mesh_pde_forward.1} parent=1 // pred_region
      _
    $region81: #{mesh_pde_forward.1} parent=1 // pred_fallthru
      _
    // Predicated region
    $region82: #{mesh_pde_forward.1} parent=1 // pred_check
      _
    $region83: #{mesh_pde_forward.1} parent=1 // pred_check_branch
      %153 = sbr.rel (0) target = $region85
    $region84: #{mesh_pde_forward.1} parent=1 // pred_region
      _
    $region85: #{mesh_pde_forward.1} parent=1 // pred_fallthru
      _
    // Predicated region
    $region86: #{mesh_pde_forward.1} parent=1 // pred_check
      _
    $region87: #{mesh_pde_forward.1} parent=1 // pred_check_branch
      %155 = sbr.rel (0) target = $region89
    $region88: #{mesh_pde_forward.1} parent=1 // pred_region
      _
    $region89: #{mesh_pde_forward.1} parent=1 // pred_fallthru
      _
    // Predicated region
    $region90: #{mesh_pde_forward.1} parent=1 // pred_check
      _
    $region91: #{mesh_pde_forward.1} parent=1 // pred_check_branch
      %157 = sbr.rel (0) target = $region93
    $region92: #{mesh_pde_forward.1} parent=1 // pred_region
      _
    $region93: #{mesh_pde_forward.1} parent=1 // pred_fallthru
      _
    // Predicated region
    $region94: #{mesh_pde_forward.1} parent=1 // pred_check
      _
    $region95: #{mesh_pde_forward.1} parent=1 // pred_check_branch
      %159 = sbr.rel (0) target = $region97
    $region96: #{mesh_pde_forward.1} parent=1 // pred_region
      _
    $region97: #{mesh_pde_forward.1} parent=1 // pred_fallthru
      _
    // Predicated region
    $region98: #{mesh_pde_forward.1} parent=1 // pred_check
      _
    $region99: #{mesh_pde_forward.1} parent=1 // pred_check_branch
      %161 = sbr.rel (0) target = $region101
    $region100: #{mesh_pde_forward.1} parent=1 // pred_region
      _
    $region101: #{mesh_pde_forward.1} parent=1 // pred_fallthru
      _
    // Predicated region
    $region102: #{mesh_pde_forward.1} parent=1 // pred_check
      _
    $region103: #{mesh_pde_forward.1} parent=1 // pred_check_branch
      %163 = sbr.rel (0) target = $region105
    $region104: #{mesh_pde_forward.1} parent=1 // pred_region
      _
    $region105: #{mesh_pde_forward.1} parent=1 // pred_fallthru
      _
    // Predicated region
    $region106: #{mesh_pde_forward.1} parent=1 // pred_check
      _
    $region107: #{mesh_pde_forward.1} parent=1 // pred_check_branch
      %165 = sbr.rel (0) target = $region109
    $region108: #{mesh_pde_forward.1} parent=1 // pred_region
      _
    $region109: #{mesh_pde_forward.1} parent=1 // pred_fallthru
      _
    // Predicated region
    $region110: #{mesh_pde_forward.1} parent=1 // pred_check
      _
    $region111: #{mesh_pde_forward.1} parent=1 // pred_check_branch
      %167 = sbr.rel (0) target = $region113
    $region112: #{mesh_pde_forward.1} parent=1 // pred_region
      _
    $region113: #{mesh_pde_forward.1} parent=1 // pred_fallthru
      _
    // Predicated region
    $region114: #{mesh_pde_forward.1} parent=1 // pred_check
      _
    $region115: #{mesh_pde_forward.1} parent=1 // pred_check_branch
      %169 = sbr.rel (0) target = $region117
    $region116: #{mesh_pde_forward.1} parent=1 // pred_region
      _
    $region117: #{mesh_pde_forward.1} parent=1 // pred_fallthru
      _
    // Predicated region
    $region118: #{mesh_pde_forward.1} parent=1 // pred_check
      _
    $region119: #{mesh_pde_forward.1} parent=1 // pred_check_branch
      %171 = sbr.rel (0) target = $region121
    $region120: #{mesh_pde_forward.1} parent=1 // pred_region
      _
    $region121: #{mesh_pde_forward.1} parent=1 // pred_fallthru
      _
    // Predicated region
    $region122: #{mesh_pde_forward.1} parent=1 // pred_check
      _
    $region123: #{mesh_pde_forward.1} parent=1 // pred_check_branch
      %173 = sbr.rel (0) target = $region125
    $region124: #{mesh_pde_forward.1} parent=1 // pred_region
      _
    $region125: #{mesh_pde_forward.1} parent=1 // pred_fallthru
      _
    // Predicated region
    $region126: #{mesh_pde_forward.1} parent=1 // pred_check
      _
    $region127: #{mesh_pde_forward.1} parent=1 // pred_check_branch
      %175 = sbr.rel (0) target = $region129
    $region128: #{mesh_pde_forward.1} parent=1 // pred_region
      _
    $region129: #{mesh_pde_forward.1} parent=1 // pred_fallthru
      _
    // Predicated region
    $region130: #{mesh_pde_forward.1} parent=1 // pred_check
      _
    $region131: #{mesh_pde_forward.1} parent=1 // pred_check_branch
      %177 = sbr.rel (0) target = $region133
    $region132: #{mesh_pde_forward.1} parent=1 // pred_region
      _
    $region133: #{mesh_pde_forward.1} parent=1 // pred_fallthru
      _
    // Predicated region
    $region134: #{mesh_pde_forward.1} parent=1 // pred_check
      _
    $region135: #{mesh_pde_forward.1} parent=1 // pred_check_branch
      %179 = sbr.rel (0) target = $region137
    $region136: #{mesh_pde_forward.1} parent=1 // pred_region
      _
    $region137: #{mesh_pde_forward.1} parent=1 // pred_fallthru
      _
    // Predicated region
    $region138: #{mesh_pde_forward.1} parent=1 // pred_check
      _
    $region139: #{mesh_pde_forward.1} parent=1 // pred_check_branch
      %181 = sbr.rel (0) target = $region141
    $region140: #{mesh_pde_forward.1} parent=1 // pred_region
      _
    $region141: #{mesh_pde_forward.1} parent=1 // pred_fallthru
      _
    // Predicated region
    $region142: #{mesh_pde_forward.1} parent=1 // pred_check
      _
    $region143: #{mesh_pde_forward.1} parent=1 // pred_check_branch
      %183 = sbr.rel (0) target = $region145
    $region144: #{mesh_pde_forward.1} parent=1 // pred_region
      _
    $region145: #{mesh_pde_forward.1} parent=1 // pred_fallthru
      _
    // Predicated region
    $region146: #{mesh_pde_forward.1} parent=1 // pred_check
      _
    $region147: #{mesh_pde_forward.1} parent=1 // pred_check_branch
      %185 = sbr.rel (0) target = $region149
    $region148: #{mesh_pde_forward.1} parent=1 // pred_region
      _
    $region149: #{mesh_pde_forward.1} parent=1 // pred_fallthru
      _
    // Predicated region
    $region150: #{mesh_pde_forward.1} parent=1 // pred_check
      _
    $region151: #{mesh_pde_forward.1} parent=1 // pred_check_branch
      %187 = sbr.rel (0) target = $region153
    $region152: #{mesh_pde_forward.1} parent=1 // pred_region
      _
    $region153: #{mesh_pde_forward.1} parent=1 // pred_fallthru
      _
    // Predicated region
    $region154: #{mesh_pde_forward.1} parent=1 // pred_check
      _
    $region155: #{mesh_pde_forward.1} parent=1 // pred_check_branch
      %189 = sbr.rel (0) target = $region157
    $region156: #{mesh_pde_forward.1} parent=1 // pred_region
      _
    $region157: #{mesh_pde_forward.1} parent=1 // pred_fallthru
      _
    // Predicated region
    $region158: #{mesh_pde_forward.1} parent=1 // pred_check
      _
    $region159: #{mesh_pde_forward.1} parent=1 // pred_check_branch
      %191 = sbr.rel (0) target = $region161
    $region160: #{mesh_pde_forward.1} parent=1 // pred_region
      %193 = vsyncadd [#allocation3], 0
      %s195 = sshll.u32 %s79, 4
      %s196 = int_to_ptr.hbm [resolvable:$true] %s195
      %s197 = sshll.u32 [#allocation2], 4
      %s198 = int_to_ptr.vmem [resolvable:$true] %s197
      %200 = dma.hbm_to_vmem [thread:$0]  %s196, 16, %s198, [#allocation3]
    $region161: #{mesh_pde_forward.1} parent=1 // pred_fallthru
      _
    // Predicated region
    $region162: #{mesh_pde_forward.1} parent=1 // pred_check
      _
    $region163: #{mesh_pde_forward.1} parent=1 // pred_check_branch
      %202 = sbr.rel (0) target = $region165
    $region164: #{mesh_pde_forward.1} parent=1 // pred_region
      _
    $region165: #{mesh_pde_forward.1} parent=1 // pred_fallthru
      _
    // Predicated region
    $region166: #{mesh_pde_forward.1} parent=1 // pred_check
      _
    $region167: #{mesh_pde_forward.1} parent=1 // pred_check_branch
      %204 = sbr.rel (0) target = $region169
    $region168: #{mesh_pde_forward.1} parent=1 // pred_region
      %206 = vsyncadd [#allocation5], 0
      %s208 = sshll.u32 %s83, 4
      %s209 = int_to_ptr.hbm [resolvable:$true] %s208
      %s210 = sshll.u32 [#allocation4], 4
      %s211 = int_to_ptr.vmem [resolvable:$true] %s210
      %213 = dma.hbm_to_vmem [thread:$0]  %s209, 16, %s211, [#allocation5]
    $region169: #{mesh_pde_forward.1} parent=1 // pred_fallthru
      _
    // Predicated region
    $region170: #{mesh_pde_forward.1} parent=1 // pred_check
      _
    $region171: #{mesh_pde_forward.1} parent=1 // pred_check_branch
      %215 = sbr.rel (0) target = $region173
    $region172: #{mesh_pde_forward.1} parent=1 // pred_region
      _
    $region173: #{mesh_pde_forward.1} parent=1 // pred_fallthru
      _
    // Predicated region
    $region174: #{mesh_pde_forward.1} parent=1 // pred_check
      _
    $region175: #{mesh_pde_forward.1} parent=1 // pred_check_branch
      %217 = sbr.rel (0) target = $region177
    $region176: #{mesh_pde_forward.1} parent=1 // pred_region
      %219 = vsyncadd [#allocation5], 0
      %s221 = sshll.u32 %s87, 4
      %s222 = int_to_ptr.hbm [resolvable:$true] %s221
      %s223 = sshll.u32 [#allocation6], 4
      %s224 = int_to_ptr.vmem [resolvable:$true] %s223
      %226 = dma.hbm_to_vmem [thread:$0]  %s222, 16, %s224, [#allocation5]
    $region177: #{mesh_pde_forward.1} parent=1 // pred_fallthru
      _
    // Predicated region
    $region178: #{mesh_pde_forward.1} parent=1 // pred_check
      _
    $region179: #{mesh_pde_forward.1} parent=1 // pred_check_branch
      %228 = sbr.rel (0) target = $region181
    $region180: #{mesh_pde_forward.1} parent=1 // pred_region
      _
    $region181: #{mesh_pde_forward.1} parent=1 // pred_fallthru
      _
    // Predicated region
    $region182: #{mesh_pde_forward.1} parent=1 // pred_check
      _
    $region183: #{mesh_pde_forward.1} parent=1 // pred_check_branch
      %230 = sbr.rel (0) target = $region185
    $region184: #{mesh_pde_forward.1} parent=1 // pred_region
      %232 = vsyncadd [#allocation8], 0
      %s234 = sshll.u32 %s91, 4
      %s235 = int_to_ptr.hbm [resolvable:$true] %s234
      %s236 = sshll.u32 [#allocation7], 4
      %s237 = int_to_ptr.vmem [resolvable:$true] %s236
      %239 = dma.hbm_to_vmem [thread:$0]  %s235, 16, %s237, [#allocation8]
    $region185: #{mesh_pde_forward.1} parent=1 // pred_fallthru
      _
    // Predicated region
    $region186: #{mesh_pde_forward.1} parent=1 // pred_check
      _
    $region187: #{mesh_pde_forward.1} parent=1 // pred_check_branch
      %241 = sbr.rel (0) target = $region189
    $region188: #{mesh_pde_forward.1} parent=1 // pred_region
      _
    $region189: #{mesh_pde_forward.1} parent=1 // pred_fallthru
      _
    // Predicated region
    $region190: #{mesh_pde_forward.1} parent=1 // pred_check
      _
    $region191: #{mesh_pde_forward.1} parent=1 // pred_check_branch
      %243 = sbr.rel (0) target = $region193
    $region192: #{mesh_pde_forward.1} parent=1 // pred_region
      %245 = vsyncadd [#allocation8], 0
      %s247 = sshll.u32 %s95, 4
      %s248 = int_to_ptr.hbm [resolvable:$true] %s247
      %s249 = sshll.u32 [#allocation9], 4
      %s250 = int_to_ptr.vmem [resolvable:$true] %s249
      %252 = dma.hbm_to_vmem [thread:$0]  %s248, 16, %s250, [#allocation8]
    $region193: #{mesh_pde_forward.1} parent=1 // pred_fallthru
      _
    // Predicated region
    $region194: #{mesh_pde_forward.1} parent=1 // pred_check
      _
    $region195: #{mesh_pde_forward.1} parent=1 // pred_check_branch
      %254 = sbr.rel (0) target = $region197
    $region196: #{mesh_pde_forward.1} parent=1 // pred_region
      _
    $region197: #{mesh_pde_forward.1} parent=1 // pred_fallthru
      _
    // Predicated region
    $region198: #{mesh_pde_forward.1} parent=1 // pred_check
      _
    $region199: #{mesh_pde_forward.1} parent=1 // pred_check_branch
      %256 = sbr.rel (0) target = $region201
    $region200: #{mesh_pde_forward.1} parent=1 // pred_region
      _
    $region201: #{mesh_pde_forward.1} parent=1 // pred_fallthru
      _
    // Predicated region
    $region202: #{mesh_pde_forward.1} parent=1 // pred_check
      _
    $region203: #{mesh_pde_forward.1} parent=1 // pred_check_branch
      %258 = sbr.rel (0) target = $region205
    $region204: #{mesh_pde_forward.1} parent=1 // pred_region
      %260 = dma.done [#allocation3], 16
    $region205: #{mesh_pde_forward.1} parent=1 // pred_fallthru
      _
    // Predicated region
    $region206: #{mesh_pde_forward.1} parent=1 // pred_check
      _
    $region207: #{mesh_pde_forward.1} parent=1 // pred_check_branch
      %262 = sbr.rel (0) target = $region209
    $region208: #{mesh_pde_forward.1} parent=1 // pred_region
      %264 = dma.done [#allocation5], 16
    $region209: #{mesh_pde_forward.1} parent=1 // pred_fallthru
      _
    // Predicated region
    $region210: #{mesh_pde_forward.1} parent=1 // pred_check
      _
    $region211: #{mesh_pde_forward.1} parent=1 // pred_check_branch
      %266 = sbr.rel (0) target = $region213
    $region212: #{mesh_pde_forward.1} parent=1 // pred_region
      %268 = dma.done [#allocation5], 16
    $region213: #{mesh_pde_forward.1} parent=1 // pred_fallthru
      _
    // Predicated region
    $region214: #{mesh_pde_forward.1} parent=1 // pred_check
      _
    $region215: #{mesh_pde_forward.1} parent=1 // pred_check_branch
      %270 = sbr.rel (0) target = $region217
    $region216: #{mesh_pde_forward.1} parent=1 // pred_region
      %272 = dma.done [#allocation8], 16
    $region217: #{mesh_pde_forward.1} parent=1 // pred_fallthru
      _
    // Predicated region
    $region218: #{mesh_pde_forward.1} parent=1 // pred_check
      _
    $region219: #{mesh_pde_forward.1} parent=1 // pred_check_branch
      %274 = sbr.rel (0) target = $region221
    $region220: #{mesh_pde_forward.1} parent=1 // pred_region
      %276 = dma.done [#allocation8], 16
    $region221: #{mesh_pde_forward.1} parent=1 // pred_fallthru
      _
    %v278 = vlaneseq
    %v279 = vand.u32 %v278, 127
    %v280 = vld [vmem:[%s5] sm:$0xff]
    %v281 = vld [vmem:[%s5 + $0x8] sm:$0xff]
    %v282 = vld [vmem:[%s5 + $0x10] sm:$0xff]
    %v283 = vld [vmem:[%s5 + $0x18] sm:$0xff]
    %v284 = vld [vmem:[%s5 + $0x20] sm:$0xff]
    %v285 = vld [vmem:[%s5 + $0x28] sm:$0xff]
    %v286 = vld [vmem:[%s5 + $0x30] sm:$0xff]
    %v287 = vld [vmem:[%s5 + $0x38] sm:$0xff]
    %v288 = vld [vmem:[%s5 + $0x40] sm:$0xff]
    %v289 = vld [vmem:[%s5 + $0x48] sm:$0xff]
    %v290 = vld [vmem:[%s5 + $0x50] sm:$0xff]
    %v291 = vld [vmem:[%s5 + $0x58] sm:$0xff]
    %v292 = vld [vmem:[%s5 + $0x60] sm:$0xff]
    %v293 = vld [vmem:[%s5 + $0x68] sm:$0xff]
    %v294 = vld [vmem:[%s5 + $0x70] sm:$0xff]
    %v295 = vld [vmem:[%s5 + $0x78] sm:$0xff]
    %296 = vset.pattern.permute.xlu0 0
    %297 = vperm.xlu0 %296, %v280
    %v298 = vpop.permute.xlu0 %297
    %299 = vset.pattern.permute.xlu0 0
    %300 = vperm.xlu0 %299, %v281
    %v301 = vpop.permute.xlu0 %300
    %302 = vset.pattern.permute.xlu0 0
    %303 = vperm.xlu0 %302, %v282
    %v304 = vpop.permute.xlu0 %303
    %305 = vset.pattern.permute.xlu0 0
    %306 = vperm.xlu0 %305, %v283
    %v307 = vpop.permute.xlu0 %306
    %308 = vset.pattern.permute.xlu0 0
    %309 = vperm.xlu0 %308, %v284
    %v310 = vpop.permute.xlu0 %309
    %311 = vset.pattern.permute.xlu0 0
    %312 = vperm.xlu0 %311, %v285
    %v313 = vpop.permute.xlu0 %312
    %314 = vset.pattern.permute.xlu0 0
    %315 = vperm.xlu0 %314, %v286
    %v316 = vpop.permute.xlu0 %315
    %317 = vset.pattern.permute.xlu0 0
    %318 = vperm.xlu0 %317, %v287
    %v319 = vpop.permute.xlu0 %318
    %320 = vset.pattern.permute.xlu0 0
    %321 = vperm.xlu0 %320, %v288
    %v322 = vpop.permute.xlu0 %321
    %323 = vset.pattern.permute.xlu0 0
    %324 = vperm.xlu0 %323, %v289
    %v325 = vpop.permute.xlu0 %324
    %326 = vset.pattern.permute.xlu0 0
    %327 = vperm.xlu0 %326, %v290
    %v328 = vpop.permute.xlu0 %327
    %329 = vset.pattern.permute.xlu0 0
    %330 = vperm.xlu0 %329, %v291
    %v331 = vpop.permute.xlu0 %330
    %332 = vset.pattern.permute.xlu0 0
    %333 = vperm.xlu0 %332, %v292
    %v334 = vpop.permute.xlu0 %333
    %335 = vset.pattern.permute.xlu0 0
    %336 = vperm.xlu0 %335, %v293
    %v337 = vpop.permute.xlu0 %336
    %338 = vset.pattern.permute.xlu0 0
    %339 = vperm.xlu0 %338, %v294
    %v340 = vpop.permute.xlu0 %339
    %341 = vset.pattern.permute.xlu0 0
    %342 = vperm.xlu0 %341, %v295
    %v343 = vpop.permute.xlu0 %342
    %vm344 = vcmp.eq.s32.totalorder %v298, %v279
    %vm345 = vcmp.eq.s32.totalorder %v301, %v279
    %vm346 = vcmp.eq.s32.totalorder %v304, %v279
    %vm347 = vcmp.eq.s32.totalorder %v307, %v279
    %vm348 = vcmp.eq.s32.totalorder %v310, %v279
    %vm349 = vcmp.eq.s32.totalorder %v313, %v279
    %vm350 = vcmp.eq.s32.totalorder %v316, %v279
    %vm351 = vcmp.eq.s32.totalorder %v319, %v279
    %vm352 = vcmp.eq.s32.totalorder %v322, %v279
    %vm353 = vcmp.eq.s32.totalorder %v325, %v279
    %vm354 = vcmp.eq.s32.totalorder %v328, %v279
    %vm355 = vcmp.eq.s32.totalorder %v331, %v279
    %vm356 = vcmp.eq.s32.totalorder %v334, %v279
    %vm357 = vcmp.eq.s32.totalorder %v337, %v279
    %vm358 = vcmp.eq.s32.totalorder %v340, %v279
    %vm359 = vcmp.eq.s32.totalorder %v343, %v279
    %v360 = vsel %vm344, 1, 0
    %v361 = vsel %vm345, 1, 0
    %v362 = vsel %vm346, 1, 0
    %v363 = vsel %vm347, 1, 0
    %v364 = vsel %vm348, 1, 0
    %v365 = vsel %vm349, 1, 0
    %v366 = vsel %vm350, 1, 0
    %v367 = vsel %vm351, 1, 0
    %v368 = vsel %vm352, 1, 0
    %v369 = vsel %vm353, 1, 0
    %v370 = vsel %vm354, 1, 0
    %v371 = vsel %vm355, 1, 0
    %v372 = vsel %vm356, 1, 0
    %v373 = vsel %vm357, 1, 0
    %v374 = vsel %vm358, 1, 0
    %v375 = vsel %vm359, 1, 0
    %v376 = vcvt.s32.f32 %v360
    %v377 = vcvt.s32.f32 %v361
    %v378 = vcvt.s32.f32 %v362
    %v379 = vcvt.s32.f32 %v363
    %v380 = vcvt.s32.f32 %v364
    %v381 = vcvt.s32.f32 %v365
    %v382 = vcvt.s32.f32 %v366
    %v383 = vcvt.s32.f32 %v367
    %v384 = vcvt.s32.f32 %v368
    %v385 = vcvt.s32.f32 %v369
    %v386 = vcvt.s32.f32 %v370
    %v387 = vcvt.s32.f32 %v371
    %v388 = vcvt.s32.f32 %v372
    %v389 = vcvt.s32.f32 %v373
    %v390 = vcvt.s32.f32 %v374
    %v391 = vcvt.s32.f32 %v375
    %v392 = vpack.c.bf16 %v377, %v376
    %v393 = vpack.c.bf16 %v379, %v378
    %v394 = vpack.c.bf16 %v381, %v380
    %v395 = vpack.c.bf16 %v383, %v382
    %v396 = vpack.c.bf16 %v385, %v384
    %v397 = vpack.c.bf16 %v387, %v386
    %v398 = vpack.c.bf16 %v389, %v388
    %v399 = vpack.c.bf16 %v391, %v390
    %v400 = vld [vmem:[%s7] sm:$0xff]
    %v401 = vld [vmem:[%s7 + $0x8] sm:$0xff]
    %v402 = vld [vmem:[%s7 + $0x10] sm:$0xff]
    %v403 = vld [vmem:[%s7 + $0x18] sm:$0xff]
    %v404 = vld [vmem:[%s7 + $0x20] sm:$0xff]
    %v405 = vld [vmem:[%s7 + $0x28] sm:$0xff]
    %v406 = vld [vmem:[%s7 + $0x30] sm:$0xff]
    %v407 = vld [vmem:[%s7 + $0x38] sm:$0xff]
    %v408 = vld [vmem:[%s7 + $0x40] sm:$0xff]
    %v409 = vld [vmem:[%s7 + $0x48] sm:$0xff]
    %v410 = vld [vmem:[%s7 + $0x50] sm:$0xff]
    %v411 = vld [vmem:[%s7 + $0x58] sm:$0xff]
    %v412 = vld [vmem:[%s7 + $0x60] sm:$0xff]
    %v413 = vld [vmem:[%s7 + $0x68] sm:$0xff]
    %v414 = vld [vmem:[%s7 + $0x70] sm:$0xff]
    %v415 = vld [vmem:[%s7 + $0x78] sm:$0xff]
    %416 = vset.pattern.permute.xlu0 0
    %417 = vperm.xlu0 %416, %v400
    %v418 = vpop.permute.xlu0 %417
    %419 = vset.pattern.permute.xlu0 0
    %420 = vperm.xlu0 %419, %v401
    %v421 = vpop.permute.xlu0 %420
    %422 = vset.pattern.permute.xlu0 0
    %423 = vperm.xlu0 %422, %v402
    %v424 = vpop.permute.xlu0 %423
    %425 = vset.pattern.permute.xlu0 0
    %426 = vperm.xlu0 %425, %v403
    %v427 = vpop.permute.xlu0 %426
    %428 = vset.pattern.permute.xlu0 0
    %429 = vperm.xlu0 %428, %v404
    %v430 = vpop.permute.xlu0 %429
    %431 = vset.pattern.permute.xlu0 0
    %432 = vperm.xlu0 %431, %v405
    %v433 = vpop.permute.xlu0 %432
    %434 = vset.pattern.permute.xlu0 0
    %435 = vperm.xlu0 %434, %v406
    %v436 = vpop.permute.xlu0 %435
    %437 = vset.pattern.permute.xlu0 0
    %438 = vperm.xlu0 %437, %v407
    %v439 = vpop.permute.xlu0 %438
    %440 = vset.pattern.permute.xlu0 0
    %441 = vperm.xlu0 %440, %v408
    %v442 = vpop.permute.xlu0 %441
    %443 = vset.pattern.permute.xlu0 0
    %444 = vperm.xlu0 %443, %v409
    %v445 = vpop.permute.xlu0 %444
    %446 = vset.pattern.permute.xlu0 0
    %447 = vperm.xlu0 %446, %v410
    %v448 = vpop.permute.xlu0 %447
    %449 = vset.pattern.permute.xlu0 0
    %450 = vperm.xlu0 %449, %v411
    %v451 = vpop.permute.xlu0 %450
    %452 = vset.pattern.permute.xlu0 0
    %453 = vperm.xlu0 %452, %v412
    %v454 = vpop.permute.xlu0 %453
    %455 = vset.pattern.permute.xlu0 0
    %456 = vperm.xlu0 %455, %v413
    %v457 = vpop.permute.xlu0 %456
    %458 = vset.pattern.permute.xlu0 0
    %459 = vperm.xlu0 %458, %v414
    %v460 = vpop.permute.xlu0 %459
    %461 = vset.pattern.permute.xlu0 0
    %462 = vperm.xlu0 %461, %v415
    %v463 = vpop.permute.xlu0 %462
    %vm464 = vcmp.eq.s32.totalorder %v418, %v279
    %vm465 = vcmp.eq.s32.totalorder %v421, %v279
    %vm466 = vcmp.eq.s32.totalorder %v424, %v279
    %vm467 = vcmp.eq.s32.totalorder %v427, %v279
    %vm468 = vcmp.eq.s32.totalorder %v430, %v279
    %vm469 = vcmp.eq.s32.totalorder %v433, %v279
    %vm470 = vcmp.eq.s32.totalorder %v436, %v279
    %vm471 = vcmp.eq.s32.totalorder %v439, %v279
    %vm472 = vcmp.eq.s32.totalorder %v442, %v279
    %vm473 = vcmp.eq.s32.totalorder %v445, %v279
    %vm474 = vcmp.eq.s32.totalorder %v448, %v279
    %vm475 = vcmp.eq.s32.totalorder %v451, %v279
    %vm476 = vcmp.eq.s32.totalorder %v454, %v279
    %vm477 = vcmp.eq.s32.totalorder %v457, %v279
    %vm478 = vcmp.eq.s32.totalorder %v460, %v279
    %vm479 = vcmp.eq.s32.totalorder %v463, %v279
    %v480 = vsel %vm464, 1, 0
    %v481 = vsel %vm465, 1, 0
    %v482 = vsel %vm466, 1, 0
    %v483 = vsel %vm467, 1, 0
    %v484 = vsel %vm468, 1, 0
    %v485 = vsel %vm469, 1, 0
    %v486 = vsel %vm470, 1, 0
    %v487 = vsel %vm471, 1, 0
    %v488 = vsel %vm472, 1, 0
    %v489 = vsel %vm473, 1, 0
    %v490 = vsel %vm474, 1, 0
    %v491 = vsel %vm475, 1, 0
    %v492 = vsel %vm476, 1, 0
    %v493 = vsel %vm477, 1, 0
    %v494 = vsel %vm478, 1, 0
    %v495 = vsel %vm479, 1, 0
    %v496 = vcvt.s32.f32 %v480
    %v497 = vcvt.s32.f32 %v481
    %v498 = vcvt.s32.f32 %v482
    %v499 = vcvt.s32.f32 %v483
    %v500 = vcvt.s32.f32 %v484
    %v501 = vcvt.s32.f32 %v485
    %v502 = vcvt.s32.f32 %v486
    %v503 = vcvt.s32.f32 %v487
    %v504 = vcvt.s32.f32 %v488
    %v505 = vcvt.s32.f32 %v489
    %v506 = vcvt.s32.f32 %v490
    %v507 = vcvt.s32.f32 %v491
    %v508 = vcvt.s32.f32 %v492
    %v509 = vcvt.s32.f32 %v493
    %v510 = vcvt.s32.f32 %v494
    %v511 = vcvt.s32.f32 %v495
    %v512 = vpack.c.bf16 %v497, %v496
    %v513 = vpack.c.bf16 %v499, %v498
    %v514 = vpack.c.bf16 %v501, %v500
    %v515 = vpack.c.bf16 %v503, %v502
    %v516 = vpack.c.bf16 %v505, %v504
    %v517 = vpack.c.bf16 %v507, %v506
    %v518 = vpack.c.bf16 %v509, %v508
    %v519 = vpack.c.bf16 %v511, %v510
    %v520 = vlaneseq
    %v521 = vshrl.u32 %v520, 7
    %v522 = vadd.s32 %v521, 8
    %v523 = vadd.s32 %v521, 16
    %v524 = vadd.s32 %v521, 24
    %v525 = vadd.s32 %v521, 32
    %v526 = vadd.s32 %v521, 40
    %v527 = vadd.s32 %v521, 48
    %v528 = vadd.s32 %v521, 56
    %v529 = vadd.s32 %v521, 64
    %v530 = vadd.s32 %v521, 72
    %v531 = vadd.s32 %v521, 80
    %v532 = vadd.s32 %v521, 88
    %v533 = vadd.s32 %v521, 96
    %v534 = vadd.s32 %v521, 104
    %v535 = vadd.s32 %v521, 112
    %v536 = vadd.s32 %v521, 120
    %v537 = vld [vmem:[%s9] sm:$0x1]
    %v538 = vperm.slane %v537, 0
    %vm539 = vcmp.eq.s32.totalorder %v521, %v538
    %vm540 = vcmp.eq.s32.totalorder %v522, %v538
    %vm541 = vcmp.eq.s32.totalorder %v523, %v538
    %vm542 = vcmp.eq.s32.totalorder %v524, %v538
    %vm543 = vcmp.eq.s32.totalorder %v525, %v538
    %vm544 = vcmp.eq.s32.totalorder %v526, %v538
    %vm545 = vcmp.eq.s32.totalorder %v527, %v538
    %vm546 = vcmp.eq.s32.totalorder %v528, %v538
    %vm547 = vcmp.eq.s32.totalorder %v529, %v538
    %vm548 = vcmp.eq.s32.totalorder %v530, %v538
    %vm549 = vcmp.eq.s32.totalorder %v531, %v538
    %vm550 = vcmp.eq.s32.totalorder %v532, %v538
    %vm551 = vcmp.eq.s32.totalorder %v533, %v538
    %vm552 = vcmp.eq.s32.totalorder %v534, %v538
    %vm553 = vcmp.eq.s32.totalorder %v535, %v538
    %vm554 = vcmp.eq.s32.totalorder %v536, %v538
    %v555 = vsel %vm539, 1, 0
    %v556 = vsel %vm540, 1, 0
    %v557 = vsel %vm541, 1, 0
    %v558 = vsel %vm542, 1, 0
    %v559 = vsel %vm543, 1, 0
    %v560 = vsel %vm544, 1, 0
    %v561 = vsel %vm545, 1, 0
    %v562 = vsel %vm546, 1, 0
    %v563 = vsel %vm547, 1, 0
    %v564 = vsel %vm548, 1, 0
    %v565 = vsel %vm549, 1, 0
    %v566 = vsel %vm550, 1, 0
    %v567 = vsel %vm551, 1, 0
    %v568 = vsel %vm552, 1, 0
    %v569 = vsel %vm553, 1, 0
    %v570 = vsel %vm554, 1, 0
    %v571 = vcvt.s32.f32 %v555
    %v572 = vcvt.s32.f32 %v556
    %v573 = vcvt.s32.f32 %v557
    %v574 = vcvt.s32.f32 %v558
    %v575 = vcvt.s32.f32 %v559
    %v576 = vcvt.s32.f32 %v560
    %v577 = vcvt.s32.f32 %v561
    %v578 = vcvt.s32.f32 %v562
    %v579 = vcvt.s32.f32 %v563
    %v580 = vcvt.s32.f32 %v564
    %v581 = vcvt.s32.f32 %v565
    %v582 = vcvt.s32.f32 %v566
    %v583 = vcvt.s32.f32 %v567
    %v584 = vcvt.s32.f32 %v568
    %v585 = vcvt.s32.f32 %v569
    %v586 = vcvt.s32.f32 %v570
    %v587 = vpack.c.bf16 %v572, %v571
    %v588 = vpack.c.bf16 %v574, %v573
    %v589 = vpack.c.bf16 %v576, %v575
    %v590 = vpack.c.bf16 %v578, %v577
    %v591 = vpack.c.bf16 %v580, %v579
    %v592 = vpack.c.bf16 %v582, %v581
    %v593 = vpack.c.bf16 %v584, %v583
    %v594 = vpack.c.bf16 %v586, %v585
    %v595 = vld [vmem:[%s1] sm:$0xff]
    %v596 = vld [vmem:[%s1 + $0x8] sm:$0xff]
    %v597 = vld [vmem:[%s1 + $0x10] sm:$0xff]
    %v598 = vld [vmem:[%s1 + $0x18] sm:$0xff]
    %v599 = vld [vmem:[%s1 + $0x20] sm:$0xff]
    %v600 = vld [vmem:[%s1 + $0x28] sm:$0xff]
    %v601 = vld [vmem:[%s1 + $0x30] sm:$0xff]
    %v602 = vld [vmem:[%s1 + $0x38] sm:$0xff]
    %v603 = vld [vmem:[%s1 + $0x40] sm:$0xff]
    %v604 = vld [vmem:[%s1 + $0x48] sm:$0xff]
    %v605 = vld [vmem:[%s1 + $0x50] sm:$0xff]
    %v606 = vld [vmem:[%s1 + $0x58] sm:$0xff]
    %v607 = vld [vmem:[%s1 + $0x60] sm:$0xff]
    %v608 = vld [vmem:[%s1 + $0x68] sm:$0xff]
    %v609 = vld [vmem:[%s1 + $0x70] sm:$0xff]
    %v610 = vld [vmem:[%s1 + $0x78] sm:$0xff]
    %v611 = vpack.c.bf16 %v596, %v595
    %v612 = vpack.c.bf16 %v598, %v597
    %v613 = vpack.c.bf16 %v600, %v599
    %v614 = vpack.c.bf16 %v602, %v601
    %v615 = vpack.c.bf16 %v604, %v603
    %v616 = vpack.c.bf16 %v606, %v605
    %v617 = vpack.c.bf16 %v608, %v607
    %v618 = vpack.c.bf16 %v610, %v609
    %v619 = vld [vmem:[%s11] sm:$0xf]
    %v620 = vld [vmem:[%s13] sm:$0x1]
    %v622 = vperm.slane %v620, 0
    %vm624 = vcmask 56320
    %v626 = vsel %vm624, %v611, 0
    %v629 = vsel %vm624, %v612, 0
    %v632 = vsel %vm624, %v613, 0
    %v635 = vsel %vm624, %v614, 0
    %v638 = vsel %vm624, %v615, 0
    %v641 = vsel %vm624, %v616, 0
    %v644 = vsel %vm624, %v617, 0
    %v647 = vsel %vm624, %v618, 0
    %vm649 = vcmask 1042432
    %vm650 = vcmask 1043456
    %v651 = vsel %vm649, 4294967295, 65535
    %v652 = vsel %vm650, %v651, 0
    %v654 = vand.u32 %v619, %v652
    %656 = vmatpush.bf16.msra.mxu0 0
    %657 = vmatpush.bf16.msra.mxu0 0
    %658 = vmatpush.bf16.msra.mxu0 0
    %659 = vmatpush.bf16.msra.mxu0 0
    %660 = vmatpush.bf16.msra.mxu0 0
    %661 = vmatpush.bf16.msra.mxu0 0
    %662 = vmatpush.bf16.msra.mxu0 0
    %663 = vmatpush.bf16.msra.mxu0 %v654
    %664 = vmatmul.bf16.gmra.mxu0 %v626
    %v665 = vpop.f32.mrf.mxu0
    %v666 = vadd.f32 %v622, %v665
    %v667 = vpop.f32.mrf.mxu0
    %v668 = vadd.f32 %v622, %v667
    %669 = vmatmul.bf16.gmra.mxu0 %v629
    %v670 = vpop.f32.mrf.mxu0
    %v671 = vadd.f32 %v622, %v670
    %v672 = vpop.f32.mrf.mxu0
    %v673 = vadd.f32 %v622, %v672
    %674 = vmatmul.bf16.gmra.mxu0 %v632
    %v675 = vpop.f32.mrf.mxu0
    %v676 = vadd.f32 %v622, %v675
    %v677 = vpop.f32.mrf.mxu0
    %v678 = vadd.f32 %v622, %v677
    %679 = vmatmul.bf16.gmra.mxu0 %v635
    %v680 = vpop.f32.mrf.mxu0
    %v681 = vadd.f32 %v622, %v680
    %v682 = vpop.f32.mrf.mxu0
    %v683 = vadd.f32 %v622, %v682
    %684 = vmatmul.bf16.gmra.mxu0 %v638
    %v685 = vpop.f32.mrf.mxu0
    %v686 = vadd.f32 %v622, %v685
    %v687 = vpop.f32.mrf.mxu0
    %v688 = vadd.f32 %v622, %v687
    %689 = vmatmul.bf16.gmra.mxu0 %v641
    %v690 = vpop.f32.mrf.mxu0
    %v691 = vadd.f32 %v622, %v690
    %v692 = vpop.f32.mrf.mxu0
    %v693 = vadd.f32 %v622, %v692
    %694 = vmatmul.bf16.gmra.mxu0 %v644
    %v695 = vpop.f32.mrf.mxu0
    %v696 = vadd.f32 %v622, %v695
    %v697 = vpop.f32.mrf.mxu0
    %v698 = vadd.f32 %v622, %v697
    %699 = vmatmul.bf16.gmra.mxu0 %v647
    %v700 = vpop.f32.mrf.mxu0
    %v701 = vadd.f32 %v622, %v700
    %v702 = vpop.f32.mrf.mxu0
    %v703 = vadd.f32 %v622, %v702
    %704 = vdwg.mxu0
    %v705 = vmax.f32 %v666, 0.0
    %v706 = vmax.f32 %v668, 0.0
    %v707 = vmax.f32 %v671, 0.0
    %v708 = vmax.f32 %v673, 0.0
    %v709 = vmax.f32 %v676, 0.0
    %v710 = vmax.f32 %v678, 0.0
    %v711 = vmax.f32 %v681, 0.0
    %v712 = vmax.f32 %v683, 0.0
    %v713 = vmax.f32 %v686, 0.0
    %v714 = vmax.f32 %v688, 0.0
    %v715 = vmax.f32 %v691, 0.0
    %v716 = vmax.f32 %v693, 0.0
    %v717 = vmax.f32 %v696, 0.0
    %v718 = vmax.f32 %v698, 0.0
    %v719 = vmax.f32 %v701, 0.0
    %v720 = vmax.f32 %v703, 0.0
    %v721 = vpack.c.bf16 %v706, %v705
    %v722 = vpack.c.bf16 %v708, %v707
    %v723 = vpack.c.bf16 %v710, %v709
    %v724 = vpack.c.bf16 %v712, %v711
    %v725 = vpack.c.bf16 %v714, %v713
    %v726 = vpack.c.bf16 %v716, %v715
    %v727 = vpack.c.bf16 %v718, %v717
    %v728 = vpack.c.bf16 %v720, %v719
    %v729 = vld [vmem:[%s15] sm:$0xf]
    %v730 = vld [vmem:[%s15 + $0x4] sm:$0xf]
    %v731 = vld [vmem:[%s15 + $0x8] sm:$0xf]
    %v732 = vld [vmem:[%s15 + $0xc] sm:$0xf]
    %v733 = vld [vmem:[%s17] sm:$0x1]
    %v735 = vperm.slane %v733, 0
    %v741 = vunpack.c.l.b16 %v729
    %v742 = vunpack.c.l.b16 %v730
    %v743 = vunpack.c.l.b16 %v731
    %v744 = vunpack.c.l.b16 %v732
    %v745 = vpack.c.b16 %v742, %v741
    %v746 = vpack.c.b16 %v744, %v743
    %vm749 = vcmask 261120
    %v751 = vsel %vm749, %v721, 0
    %v754 = vsel %vm749, %v722, 0
    %v757 = vsel %vm749, %v723, 0
    %v760 = vsel %vm749, %v724, 0
    %v763 = vsel %vm749, %v725, 0
    %v766 = vsel %vm749, %v726, 0
    %v769 = vsel %vm749, %v727, 0
    %v772 = vsel %vm749, %v728, 0
    %774 = vmatpush.bf16.msra.mxu0 0
    %775 = vmatpush.bf16.msra.mxu0 0
    %776 = vmatpush.bf16.msra.mxu0 0
    %777 = vmatpush.bf16.msra.mxu0 0
    %778 = vmatpush.bf16.msra.mxu0 0
    %779 = vmatpush.bf16.msra.mxu0 0
    %780 = vmatpush.bf16.msra.mxu0 %v746
    %781 = vmatpush.bf16.msra.mxu0 %v745
    %782 = vmatmul.bf16.gmra.mxu0 %v751
    %v783 = vpop.f32.mrf.mxu0
    %v784 = vadd.f32 %v735, %v783
    %v785 = vpop.f32.mrf.mxu0
    %v786 = vadd.f32 %v735, %v785
    %787 = vmatmul.bf16.gmra.mxu0 %v754
    %v788 = vpop.f32.mrf.mxu0
    %v789 = vadd.f32 %v735, %v788
    %v790 = vpop.f32.mrf.mxu0
    %v791 = vadd.f32 %v735, %v790
    %792 = vmatmul.bf16.gmra.mxu0 %v757
    %v793 = vpop.f32.mrf.mxu0
    %v794 = vadd.f32 %v735, %v793
    %v795 = vpop.f32.mrf.mxu0
    %v796 = vadd.f32 %v735, %v795
    %797 = vmatmul.bf16.gmra.mxu0 %v760
    %v798 = vpop.f32.mrf.mxu0
    %v799 = vadd.f32 %v735, %v798
    %v800 = vpop.f32.mrf.mxu0
    %v801 = vadd.f32 %v735, %v800
    %802 = vmatmul.bf16.gmra.mxu0 %v763
    %v803 = vpop.f32.mrf.mxu0
    %v804 = vadd.f32 %v735, %v803
    %v805 = vpop.f32.mrf.mxu0
    %v806 = vadd.f32 %v735, %v805
    %807 = vmatmul.bf16.gmra.mxu0 %v766
    %v808 = vpop.f32.mrf.mxu0
    %v809 = vadd.f32 %v735, %v808
    %v810 = vpop.f32.mrf.mxu0
    %v811 = vadd.f32 %v735, %v810
    %812 = vmatmul.bf16.gmra.mxu0 %v769
    %v813 = vpop.f32.mrf.mxu0
    %v814 = vadd.f32 %v735, %v813
    %v815 = vpop.f32.mrf.mxu0
    %v816 = vadd.f32 %v735, %v815
    %817 = vmatmul.bf16.gmra.mxu0 %v772
    %v818 = vpop.f32.mrf.mxu0
    %v819 = vadd.f32 %v735, %v818
    %v820 = vpop.f32.mrf.mxu0
    %v821 = vadd.f32 %v735, %v820
    %822 = vdwg.mxu0
    %v823 = vmax.f32 %v784, 0.0
    %v824 = vmax.f32 %v786, 0.0
    %v825 = vmax.f32 %v789, 0.0
    %v826 = vmax.f32 %v791, 0.0
    %v827 = vmax.f32 %v794, 0.0
    %v828 = vmax.f32 %v796, 0.0
    %v829 = vmax.f32 %v799, 0.0
    %v830 = vmax.f32 %v801, 0.0
    %v831 = vmax.f32 %v804, 0.0
    %v832 = vmax.f32 %v806, 0.0
    %v833 = vmax.f32 %v809, 0.0
    %v834 = vmax.f32 %v811, 0.0
    %v835 = vmax.f32 %v814, 0.0
    %v836 = vmax.f32 %v816, 0.0
    %v837 = vmax.f32 %v819, 0.0
    %v838 = vmax.f32 %v821, 0.0
    %v839 = vpack.c.bf16 %v824, %v823
    %v840 = vpack.c.bf16 %v826, %v825
    %v841 = vpack.c.bf16 %v828, %v827
    %v842 = vpack.c.bf16 %v830, %v829
    %v843 = vpack.c.bf16 %v832, %v831
    %v844 = vpack.c.bf16 %v834, %v833
    %v845 = vpack.c.bf16 %v836, %v835
    %v846 = vpack.c.bf16 %v838, %v837
    %v847 = vld [vmem:[%s19] sm:$0xf]
    %v848 = vld [vmem:[%s19 + $0x4] sm:$0xf]
    %v849 = vld [vmem:[%s19 + $0x8] sm:$0xf]
    %v850 = vld [vmem:[%s19 + $0xc] sm:$0xf]
    %v851 = vld [vmem:[%s21] sm:$0x1]
    %v853 = vperm.slane %v851, 0
    %v859 = vunpack.c.l.b16 %v847
    %v860 = vunpack.c.l.b16 %v848
    %v861 = vunpack.c.l.b16 %v849
    %v862 = vunpack.c.l.b16 %v850
    %v863 = vpack.c.b16 %v860, %v859
    %v864 = vpack.c.b16 %v862, %v861
    %v868 = vsel %vm749, %v839, 0
    %v871 = vsel %vm749, %v840, 0
    %v874 = vsel %vm749, %v841, 0
    %v877 = vsel %vm749, %v842, 0
    %v880 = vsel %vm749, %v843, 0
    %v883 = vsel %vm749, %v844, 0
    %v886 = vsel %vm749, %v845, 0
    %v889 = vsel %vm749, %v846, 0
    %891 = vmatpush.bf16.msra.mxu0 0
    %892 = vmatpush.bf16.msra.mxu0 0
    %893 = vmatpush.bf16.msra.mxu0 0
    %894 = vmatpush.bf16.msra.mxu0 0
    %895 = vmatpush.bf16.msra.mxu0 0
    %896 = vmatpush.bf16.msra.mxu0 0
    %897 = vmatpush.bf16.msra.mxu0 %v864
    %898 = vmatpush.bf16.msra.mxu0 %v863
    %899 = vmatmul.bf16.gmra.mxu0 %v868
    %v900 = vpop.f32.mrf.mxu0
    %v901 = vadd.f32 %v853, %v900
    %v902 = vpop.f32.mrf.mxu0
    %v903 = vadd.f32 %v853, %v902
    %904 = vmatmul.bf16.gmra.mxu0 %v871
    %v905 = vpop.f32.mrf.mxu0
    %v906 = vadd.f32 %v853, %v905
    %v907 = vpop.f32.mrf.mxu0
    %v908 = vadd.f32 %v853, %v907
    %909 = vmatmul.bf16.gmra.mxu0 %v874
    %v910 = vpop.f32.mrf.mxu0
    %v911 = vadd.f32 %v853, %v910
    %v912 = vpop.f32.mrf.mxu0
    %v913 = vadd.f32 %v853, %v912
    %914 = vmatmul.bf16.gmra.mxu0 %v877
    %v915 = vpop.f32.mrf.mxu0
    %v916 = vadd.f32 %v853, %v915
    %v917 = vpop.f32.mrf.mxu0
    %v918 = vadd.f32 %v853, %v917
    %919 = vmatmul.bf16.gmra.mxu0 %v880
    %v920 = vpop.f32.mrf.mxu0
    %v921 = vadd.f32 %v853, %v920
    %v922 = vpop.f32.mrf.mxu0
    %v923 = vadd.f32 %v853, %v922
    %924 = vmatmul.bf16.gmra.mxu0 %v883
    %v925 = vpop.f32.mrf.mxu0
    %v926 = vadd.f32 %v853, %v925
    %v927 = vpop.f32.mrf.mxu0
    %v928 = vadd.f32 %v853, %v927
    %929 = vmatmul.bf16.gmra.mxu0 %v886
    %v930 = vpop.f32.mrf.mxu0
    %v931 = vadd.f32 %v853, %v930
    %v932 = vpop.f32.mrf.mxu0
    %v933 = vadd.f32 %v853, %v932
    %934 = vmatmul.bf16.gmra.mxu0 %v889
    %v935 = vpop.f32.mrf.mxu0
    %v936 = vadd.f32 %v853, %v935
    %v937 = vpop.f32.mrf.mxu0
    %v938 = vadd.f32 %v853, %v937
    %939 = vdwg.mxu0
    %v940 = vmax.f32 %v901, 0.0
    %v941 = vmax.f32 %v903, 0.0
    %v942 = vmax.f32 %v906, 0.0
    %v943 = vmax.f32 %v908, 0.0
    %v944 = vmax.f32 %v911, 0.0
    %v945 = vmax.f32 %v913, 0.0
    %v946 = vmax.f32 %v916, 0.0
    %v947 = vmax.f32 %v918, 0.0
    %v948 = vmax.f32 %v921, 0.0
    %v949 = vmax.f32 %v923, 0.0
    %v950 = vmax.f32 %v926, 0.0
    %v951 = vmax.f32 %v928, 0.0
    %v952 = vmax.f32 %v931, 0.0
    %v953 = vmax.f32 %v933, 0.0
    %v954 = vmax.f32 %v936, 0.0
    %v955 = vmax.f32 %v938, 0.0
    %v956 = vpack.c.bf16 %v941, %v940
    %v957 = vpack.c.bf16 %v943, %v942
    %v958 = vpack.c.bf16 %v945, %v944
    %v959 = vpack.c.bf16 %v947, %v946
    %v960 = vpack.c.bf16 %v949, %v948
    %v961 = vpack.c.bf16 %v951, %v950
    %v962 = vpack.c.bf16 %v953, %v952
    %v963 = vpack.c.bf16 %v955, %v954
    %v964 = vld [vmem:[%s23] sm:$0xf]
    %v965 = vld [vmem:[%s23 + $0x4] sm:$0xf]
    %v966 = vld [vmem:[%s23 + $0x8] sm:$0xf]
    %v967 = vld [vmem:[%s23 + $0xc] sm:$0xf]
    %v968 = vld [vmem:[%s25] sm:$0x1]
    %v970 = vperm.slane %v968, 0
    %v976 = vunpack.c.l.b16 %v964
    %v977 = vunpack.c.l.b16 %v965
    %v978 = vunpack.c.l.b16 %v966
    %v979 = vunpack.c.l.b16 %v967
    %v980 = vpack.c.b16 %v977, %v976
    %v981 = vpack.c.b16 %v979, %v978
    %v985 = vsel %vm749, %v956, 0
    %v988 = vsel %vm749, %v957, 0
    %v991 = vsel %vm749, %v958, 0
    %v994 = vsel %vm749, %v959, 0
    %v997 = vsel %vm749, %v960, 0
    %v1000 = vsel %vm749, %v961, 0
    %v1003 = vsel %vm749, %v962, 0
    %v1006 = vsel %vm749, %v963, 0
    %1008 = vmatpush.bf16.msra.mxu0 0
    %1009 = vmatpush.bf16.msra.mxu0 0
    %1010 = vmatpush.bf16.msra.mxu0 0
    %1011 = vmatpush.bf16.msra.mxu0 0
    %1012 = vmatpush.bf16.msra.mxu0 0
    %1013 = vmatpush.bf16.msra.mxu0 0
    %1014 = vmatpush.bf16.msra.mxu0 %v981
    %1015 = vmatpush.bf16.msra.mxu0 %v980
    %1016 = vmatmul.bf16.gmra.mxu0 %v985
    %v1017 = vpop.f32.mrf.mxu0
    %v1018 = vadd.f32 %v970, %v1017
    %v1019 = vpop.f32.mrf.mxu0
    %v1020 = vadd.f32 %v970, %v1019
    %1021 = vmatmul.bf16.gmra.mxu0 %v988
    %v1022 = vpop.f32.mrf.mxu0
    %v1023 = vadd.f32 %v970, %v1022
    %v1024 = vpop.f32.mrf.mxu0
    %v1025 = vadd.f32 %v970, %v1024
    %1026 = vmatmul.bf16.gmra.mxu0 %v991
    %v1027 = vpop.f32.mrf.mxu0
    %v1028 = vadd.f32 %v970, %v1027
    %v1029 = vpop.f32.mrf.mxu0
    %v1030 = vadd.f32 %v970, %v1029
    %1031 = vmatmul.bf16.gmra.mxu0 %v994
    %v1032 = vpop.f32.mrf.mxu0
    %v1033 = vadd.f32 %v970, %v1032
    %v1034 = vpop.f32.mrf.mxu0
    %v1035 = vadd.f32 %v970, %v1034
    %1036 = vmatmul.bf16.gmra.mxu0 %v997
    %v1037 = vpop.f32.mrf.mxu0
    %v1038 = vadd.f32 %v970, %v1037
    %v1039 = vpop.f32.mrf.mxu0
    %v1040 = vadd.f32 %v970, %v1039
    %1041 = vmatmul.bf16.gmra.mxu0 %v1000
    %v1042 = vpop.f32.mrf.mxu0
    %v1043 = vadd.f32 %v970, %v1042
    %v1044 = vpop.f32.mrf.mxu0
    %v1045 = vadd.f32 %v970, %v1044
    %1046 = vmatmul.bf16.gmra.mxu0 %v1003
    %v1047 = vpop.f32.mrf.mxu0
    %v1048 = vadd.f32 %v970, %v1047
    %v1049 = vpop.f32.mrf.mxu0
    %v1050 = vadd.f32 %v970, %v1049
    %1051 = vmatmul.bf16.gmra.mxu0 %v1006
    %v1052 = vpop.f32.mrf.mxu0
    %v1053 = vadd.f32 %v970, %v1052
    %v1054 = vpop.f32.mrf.mxu0
    %v1055 = vadd.f32 %v970, %v1054
    %1056 = vdwg.mxu0
    %v1057 = vld [vmem:[%s3] sm:$0xff]
    %v1058 = vld [vmem:[%s3 + $0x8] sm:$0xff]
    %v1059 = vld [vmem:[%s3 + $0x10] sm:$0xff]
    %v1060 = vld [vmem:[%s3 + $0x18] sm:$0xff]
    %v1061 = vld [vmem:[%s3 + $0x20] sm:$0xff]
    %v1062 = vld [vmem:[%s3 + $0x28] sm:$0xff]
    %v1063 = vld [vmem:[%s3 + $0x30] sm:$0xff]
    %v1064 = vld [vmem:[%s3 + $0x38] sm:$0xff]
    %v1065 = vld [vmem:[%s3 + $0x40] sm:$0xff]
    %v1066 = vld [vmem:[%s3 + $0x48] sm:$0xff]
    %v1067 = vld [vmem:[%s3 + $0x50] sm:$0xff]
    %v1068 = vld [vmem:[%s3 + $0x58] sm:$0xff]
    %v1069 = vld [vmem:[%s3 + $0x60] sm:$0xff]
    %v1070 = vld [vmem:[%s3 + $0x68] sm:$0xff]
    %v1071 = vld [vmem:[%s3 + $0x70] sm:$0xff]
    %v1072 = vld [vmem:[%s3 + $0x78] sm:$0xff]
    %v1073 = vpack.c.bf16 %v1058, %v1057
    %v1074 = vpack.c.bf16 %v1060, %v1059
    %v1075 = vpack.c.bf16 %v1062, %v1061
    %v1076 = vpack.c.bf16 %v1064, %v1063
    %v1077 = vpack.c.bf16 %v1066, %v1065
    %v1078 = vpack.c.bf16 %v1068, %v1067
    %v1079 = vpack.c.bf16 %v1070, %v1069
    %v1080 = vpack.c.bf16 %v1072, %v1071
    %v1081 = vld [vmem:[%s27] sm:$0x7]
    %v1082 = vld [vmem:[%s29] sm:$0x1]
    %v1084 = vperm.slane %v1082, 0
    %vm1086 = vcmask 39936
    %v1088 = vsel %vm1086, %v1073, 0
    %v1091 = vsel %vm1086, %v1074, 0
    %v1094 = vsel %vm1086, %v1075, 0
    %v1097 = vsel %vm1086, %v1076, 0
    %v1100 = vsel %vm1086, %v1077, 0
    %v1103 = vsel %vm1086, %v1078, 0
    %v1106 = vsel %vm1086, %v1079, 0
    %v1109 = vsel %vm1086, %v1080, 0
    %vm1111 = vcmask 1041408
    %v1112 = vsel %vm1111, 4294967295, 65535
    %v1113 = vsel %vm649, %v1112, 0
    %v1115 = vand.u32 %v1081, %v1113
    %1117 = vmatpush.bf16.msra.mxu0 0
    %1118 = vmatpush.bf16.msra.mxu0 0
    %1119 = vmatpush.bf16.msra.mxu0 0
    %1120 = vmatpush.bf16.msra.mxu0 0
    %1121 = vmatpush.bf16.msra.mxu0 0
    %1122 = vmatpush.bf16.msra.mxu0 0
    %1123 = vmatpush.bf16.msra.mxu0 0
    %1124 = vmatpush.bf16.msra.mxu0 %v1115
    %1125 = vmatmul.bf16.gmra.mxu0 %v1088
    %v1126 = vpop.f32.mrf.mxu0
    %v1127 = vadd.f32 %v1084, %v1126
    %v1128 = vpop.f32.mrf.mxu0
    %v1129 = vadd.f32 %v1084, %v1128
    %1130 = vmatmul.bf16.gmra.mxu0 %v1091
    %v1131 = vpop.f32.mrf.mxu0
    %v1132 = vadd.f32 %v1084, %v1131
    %v1133 = vpop.f32.mrf.mxu0
    %v1134 = vadd.f32 %v1084, %v1133
    %1135 = vmatmul.bf16.gmra.mxu0 %v1094
    %v1136 = vpop.f32.mrf.mxu0
    %v1137 = vadd.f32 %v1084, %v1136
    %v1138 = vpop.f32.mrf.mxu0
    %v1139 = vadd.f32 %v1084, %v1138
    %1140 = vmatmul.bf16.gmra.mxu0 %v1097
    %v1141 = vpop.f32.mrf.mxu0
    %v1142 = vadd.f32 %v1084, %v1141
    %v1143 = vpop.f32.mrf.mxu0
    %v1144 = vadd.f32 %v1084, %v1143
    %1145 = vmatmul.bf16.gmra.mxu0 %v1100
    %v1146 = vpop.f32.mrf.mxu0
    %v1147 = vadd.f32 %v1084, %v1146
    %v1148 = vpop.f32.mrf.mxu0
    %v1149 = vadd.f32 %v1084, %v1148
    %1150 = vmatmul.bf16.gmra.mxu0 %v1103
    %v1151 = vpop.f32.mrf.mxu0
    %v1152 = vadd.f32 %v1084, %v1151
    %v1153 = vpop.f32.mrf.mxu0
    %v1154 = vadd.f32 %v1084, %v1153
    %1155 = vmatmul.bf16.gmra.mxu0 %v1106
    %v1156 = vpop.f32.mrf.mxu0
    %v1157 = vadd.f32 %v1084, %v1156
    %v1158 = vpop.f32.mrf.mxu0
    %v1159 = vadd.f32 %v1084, %v1158
    %1160 = vmatmul.bf16.gmra.mxu0 %v1109
    %v1161 = vpop.f32.mrf.mxu0
    %v1162 = vadd.f32 %v1084, %v1161
    %v1163 = vpop.f32.mrf.mxu0
    %v1164 = vadd.f32 %v1084, %v1163
    %1165 = vdwg.mxu0
    %v1166 = vmax.f32 %v1127, 0.0
    %v1167 = vmax.f32 %v1129, 0.0
    %v1168 = vmax.f32 %v1132, 0.0
    %v1169 = vmax.f32 %v1134, 0.0
    %v1170 = vmax.f32 %v1137, 0.0
    %v1171 = vmax.f32 %v1139, 0.0
    %v1172 = vmax.f32 %v1142, 0.0
    %v1173 = vmax.f32 %v1144, 0.0
    %v1174 = vmax.f32 %v1147, 0.0
    %v1175 = vmax.f32 %v1149, 0.0
    %v1176 = vmax.f32 %v1152, 0.0
    %v1177 = vmax.f32 %v1154, 0.0
    %v1178 = vmax.f32 %v1157, 0.0
    %v1179 = vmax.f32 %v1159, 0.0
    %v1180 = vmax.f32 %v1162, 0.0
    %v1181 = vmax.f32 %v1164, 0.0
    %v1182 = vpack.c.bf16 %v1167, %v1166
    %v1183 = vpack.c.bf16 %v1169, %v1168
    %v1184 = vpack.c.bf16 %v1171, %v1170
    %v1185 = vpack.c.bf16 %v1173, %v1172
    %v1186 = vpack.c.bf16 %v1175, %v1174
    %v1187 = vpack.c.bf16 %v1177, %v1176
    %v1188 = vpack.c.bf16 %v1179, %v1178
    %v1189 = vpack.c.bf16 %v1181, %v1180
    %v1190 = vld [vmem:[%s31] sm:$0xf]
    %v1191 = vld [vmem:[%s31 + $0x4] sm:$0xf]
    %v1192 = vld [vmem:[%s31 + $0x8] sm:$0xf]
    %v1193 = vld [vmem:[%s31 + $0xc] sm:$0xf]
    %v1194 = vld [vmem:[%s33] sm:$0x1]
    %v1196 = vperm.slane %v1194, 0
    %v1202 = vunpack.c.l.b16 %v1190
    %v1203 = vunpack.c.l.b16 %v1191
    %v1204 = vunpack.c.l.b16 %v1192
    %v1205 = vunpack.c.l.b16 %v1193
    %v1206 = vpack.c.b16 %v1203, %v1202
    %v1207 = vpack.c.b16 %v1205, %v1204
    %v1211 = vsel %vm749, %v1182, 0
    %v1214 = vsel %vm749, %v1183, 0
    %v1217 = vsel %vm749, %v1184, 0
    %v1220 = vsel %vm749, %v1185, 0
    %v1223 = vsel %vm749, %v1186, 0
    %v1226 = vsel %vm749, %v1187, 0
    %v1229 = vsel %vm749, %v1188, 0
    %v1232 = vsel %vm749, %v1189, 0
    %1234 = vmatpush.bf16.msra.mxu0 0
    %1235 = vmatpush.bf16.msra.mxu0 0
    %1236 = vmatpush.bf16.msra.mxu0 0
    %1237 = vmatpush.bf16.msra.mxu0 0
    %1238 = vmatpush.bf16.msra.mxu0 0
    %1239 = vmatpush.bf16.msra.mxu0 0
    %1240 = vmatpush.bf16.msra.mxu0 %v1207
    %1241 = vmatpush.bf16.msra.mxu0 %v1206
    %1242 = vmatmul.bf16.gmra.mxu0 %v1211
    %v1243 = vpop.f32.mrf.mxu0
    %v1244 = vadd.f32 %v1196, %v1243
    %v1245 = vpop.f32.mrf.mxu0
    %v1246 = vadd.f32 %v1196, %v1245
    %1247 = vmatmul.bf16.gmra.mxu0 %v1214
    %v1248 = vpop.f32.mrf.mxu0
    %v1249 = vadd.f32 %v1196, %v1248
    %v1250 = vpop.f32.mrf.mxu0
    %v1251 = vadd.f32 %v1196, %v1250
    %1252 = vmatmul.bf16.gmra.mxu0 %v1217
    %v1253 = vpop.f32.mrf.mxu0
    %v1254 = vadd.f32 %v1196, %v1253
    %v1255 = vpop.f32.mrf.mxu0
    %v1256 = vadd.f32 %v1196, %v1255
    %1257 = vmatmul.bf16.gmra.mxu0 %v1220
    %v1258 = vpop.f32.mrf.mxu0
    %v1259 = vadd.f32 %v1196, %v1258
    %v1260 = vpop.f32.mrf.mxu0
    %v1261 = vadd.f32 %v1196, %v1260
    %1262 = vmatmul.bf16.gmra.mxu0 %v1223
    %v1263 = vpop.f32.mrf.mxu0
    %v1264 = vadd.f32 %v1196, %v1263
    %v1265 = vpop.f32.mrf.mxu0
    %v1266 = vadd.f32 %v1196, %v1265
    %1267 = vmatmul.bf16.gmra.mxu0 %v1226
    %v1268 = vpop.f32.mrf.mxu0
    %v1269 = vadd.f32 %v1196, %v1268
    %v1270 = vpop.f32.mrf.mxu0
    %v1271 = vadd.f32 %v1196, %v1270
    %1272 = vmatmul.bf16.gmra.mxu0 %v1229
    %v1273 = vpop.f32.mrf.mxu0
    %v1274 = vadd.f32 %v1196, %v1273
    %v1275 = vpop.f32.mrf.mxu0
    %v1276 = vadd.f32 %v1196, %v1275
    %1277 = vmatmul.bf16.gmra.mxu0 %v1232
    %v1278 = vpop.f32.mrf.mxu0
    %v1279 = vadd.f32 %v1196, %v1278
    %v1280 = vpop.f32.mrf.mxu0
    %v1281 = vadd.f32 %v1196, %v1280
    %1282 = vdwg.mxu0
    %v1283 = vmax.f32 %v1244, 0.0
    %v1284 = vmax.f32 %v1246, 0.0
    %v1285 = vmax.f32 %v1249, 0.0
    %v1286 = vmax.f32 %v1251, 0.0
    %v1287 = vmax.f32 %v1254, 0.0
    %v1288 = vmax.f32 %v1256, 0.0
    %v1289 = vmax.f32 %v1259, 0.0
    %v1290 = vmax.f32 %v1261, 0.0
    %v1291 = vmax.f32 %v1264, 0.0
    %v1292 = vmax.f32 %v1266, 0.0
    %v1293 = vmax.f32 %v1269, 0.0
    %v1294 = vmax.f32 %v1271, 0.0
    %v1295 = vmax.f32 %v1274, 0.0
    %v1296 = vmax.f32 %v1276, 0.0
    %v1297 = vmax.f32 %v1279, 0.0
    %v1298 = vmax.f32 %v1281, 0.0
    %v1299 = vpack.c.bf16 %v1284, %v1283
    %v1300 = vpack.c.bf16 %v1286, %v1285
    %v1301 = vpack.c.bf16 %v1288, %v1287
    %v1302 = vpack.c.bf16 %v1290, %v1289
    %v1303 = vpack.c.bf16 %v1292, %v1291
    %v1304 = vpack.c.bf16 %v1294, %v1293
    %v1305 = vpack.c.bf16 %v1296, %v1295
    %v1306 = vpack.c.bf16 %v1298, %v1297
    %v1307 = vld [vmem:[%s35] sm:$0xf]
    %v1308 = vld [vmem:[%s35 + $0x4] sm:$0xf]
    %v1309 = vld [vmem:[%s35 + $0x8] sm:$0xf]
    %v1310 = vld [vmem:[%s35 + $0xc] sm:$0xf]
    %v1311 = vld [vmem:[%s37] sm:$0x1]
    %v1313 = vperm.slane %v1311, 0
    %v1319 = vunpack.c.l.b16 %v1307
    %v1320 = vunpack.c.l.b16 %v1308
    %v1321 = vunpack.c.l.b16 %v1309
    %v1322 = vunpack.c.l.b16 %v1310
    %v1323 = vpack.c.b16 %v1320, %v1319
    %v1324 = vpack.c.b16 %v1322, %v1321
    %v1328 = vsel %vm749, %v1299, 0
    %v1331 = vsel %vm749, %v1300, 0
    %v1334 = vsel %vm749, %v1301, 0
    %v1337 = vsel %vm749, %v1302, 0
    %v1340 = vsel %vm749, %v1303, 0
    %v1343 = vsel %vm749, %v1304, 0
    %v1346 = vsel %vm749, %v1305, 0
    %v1349 = vsel %vm749, %v1306, 0
    %1351 = vmatpush.bf16.msra.mxu0 0
    %1352 = vmatpush.bf16.msra.mxu0 0
    %1353 = vmatpush.bf16.msra.mxu0 0
    %1354 = vmatpush.bf16.msra.mxu0 0
    %1355 = vmatpush.bf16.msra.mxu0 0
    %1356 = vmatpush.bf16.msra.mxu0 0
    %1357 = vmatpush.bf16.msra.mxu0 %v1324
    %1358 = vmatpush.bf16.msra.mxu0 %v1323
    %1359 = vmatmul.bf16.gmra.mxu0 %v1328
    %v1360 = vpop.f32.mrf.mxu0
    %v1361 = vadd.f32 %v1313, %v1360
    %v1362 = vpop.f32.mrf.mxu0
    %v1363 = vadd.f32 %v1313, %v1362
    %1364 = vmatmul.bf16.gmra.mxu0 %v1331
    %v1365 = vpop.f32.mrf.mxu0
    %v1366 = vadd.f32 %v1313, %v1365
    %v1367 = vpop.f32.mrf.mxu0
    %v1368 = vadd.f32 %v1313, %v1367
    %1369 = vmatmul.bf16.gmra.mxu0 %v1334
    %v1370 = vpop.f32.mrf.mxu0
    %v1371 = vadd.f32 %v1313, %v1370
    %v1372 = vpop.f32.mrf.mxu0
    %v1373 = vadd.f32 %v1313, %v1372
    %1374 = vmatmul.bf16.gmra.mxu0 %v1337
    %v1375 = vpop.f32.mrf.mxu0
    %v1376 = vadd.f32 %v1313, %v1375
    %v1377 = vpop.f32.mrf.mxu0
    %v1378 = vadd.f32 %v1313, %v1377
    %1379 = vmatmul.bf16.gmra.mxu0 %v1340
    %v1380 = vpop.f32.mrf.mxu0
    %v1381 = vadd.f32 %v1313, %v1380
    %v1382 = vpop.f32.mrf.mxu0
    %v1383 = vadd.f32 %v1313, %v1382
    %1384 = vmatmul.bf16.gmra.mxu0 %v1343
    %v1385 = vpop.f32.mrf.mxu0
    %v1386 = vadd.f32 %v1313, %v1385
    %v1387 = vpop.f32.mrf.mxu0
    %v1388 = vadd.f32 %v1313, %v1387
    %1389 = vmatmul.bf16.gmra.mxu0 %v1346
    %v1390 = vpop.f32.mrf.mxu0
    %v1391 = vadd.f32 %v1313, %v1390
    %v1392 = vpop.f32.mrf.mxu0
    %v1393 = vadd.f32 %v1313, %v1392
    %1394 = vmatmul.bf16.gmra.mxu0 %v1349
    %v1395 = vpop.f32.mrf.mxu0
    %v1396 = vadd.f32 %v1313, %v1395
    %v1397 = vpop.f32.mrf.mxu0
    %v1398 = vadd.f32 %v1313, %v1397
    %1399 = vdwg.mxu0
    %v1400 = vmax.f32 %v1361, 0.0
    %v1401 = vmax.f32 %v1363, 0.0
    %v1402 = vmax.f32 %v1366, 0.0
    %v1403 = vmax.f32 %v1368, 0.0
    %v1404 = vmax.f32 %v1371, 0.0
    %v1405 = vmax.f32 %v1373, 0.0
    %v1406 = vmax.f32 %v1376, 0.0
    %v1407 = vmax.f32 %v1378, 0.0
    %v1408 = vmax.f32 %v1381, 0.0
    %v1409 = vmax.f32 %v1383, 0.0
    %v1410 = vmax.f32 %v1386, 0.0
    %v1411 = vmax.f32 %v1388, 0.0
    %v1412 = vmax.f32 %v1391, 0.0
    %v1413 = vmax.f32 %v1393, 0.0
    %v1414 = vmax.f32 %v1396, 0.0
    %v1415 = vmax.f32 %v1398, 0.0
    %v1416 = vpack.c.bf16 %v1401, %v1400
    %v1417 = vpack.c.bf16 %v1403, %v1402
    %v1418 = vpack.c.bf16 %v1405, %v1404
    %v1419 = vpack.c.bf16 %v1407, %v1406
    %v1420 = vpack.c.bf16 %v1409, %v1408
    %v1421 = vpack.c.bf16 %v1411, %v1410
    %v1422 = vpack.c.bf16 %v1413, %v1412
    %v1423 = vpack.c.bf16 %v1415, %v1414
    %v1424 = vld [vmem:[%s39] sm:$0xf]
    %v1425 = vld [vmem:[%s39 + $0x4] sm:$0xf]
    %v1426 = vld [vmem:[%s39 + $0x8] sm:$0xf]
    %v1427 = vld [vmem:[%s39 + $0xc] sm:$0xf]
    %v1428 = vld [vmem:[%s41] sm:$0x1]
    %v1430 = vperm.slane %v1428, 0
    %v1436 = vunpack.c.l.b16 %v1424
    %v1437 = vunpack.c.l.b16 %v1425
    %v1438 = vunpack.c.l.b16 %v1426
    %v1439 = vunpack.c.l.b16 %v1427
    %v1440 = vpack.c.b16 %v1437, %v1436
    %v1441 = vpack.c.b16 %v1439, %v1438
    %v1445 = vsel %vm749, %v1416, 0
    %v1448 = vsel %vm749, %v1417, 0
    %v1451 = vsel %vm749, %v1418, 0
    %v1454 = vsel %vm749, %v1419, 0
    %v1457 = vsel %vm749, %v1420, 0
    %v1460 = vsel %vm749, %v1421, 0
    %v1463 = vsel %vm749, %v1422, 0
    %v1466 = vsel %vm749, %v1423, 0
    %1468 = vmatpush.bf16.msra.mxu0 0
    %1469 = vmatpush.bf16.msra.mxu0 0
    %1470 = vmatpush.bf16.msra.mxu0 0
    %1471 = vmatpush.bf16.msra.mxu0 0
    %1472 = vmatpush.bf16.msra.mxu0 0
    %1473 = vmatpush.bf16.msra.mxu0 0
    %1474 = vmatpush.bf16.msra.mxu0 %v1441
    %1475 = vmatpush.bf16.msra.mxu0 %v1440
    %1476 = vmatmul.bf16.gmra.mxu0 %v1445
    %v1477 = vpop.f32.mrf.mxu0
    %v1478 = vadd.f32 %v1430, %v1477
    %v1479 = vpop.f32.mrf.mxu0
    %v1480 = vadd.f32 %v1430, %v1479
    %1481 = vmatmul.bf16.gmra.mxu0 %v1448
    %v1482 = vpop.f32.mrf.mxu0
    %v1483 = vadd.f32 %v1430, %v1482
    %v1484 = vpop.f32.mrf.mxu0
    %v1485 = vadd.f32 %v1430, %v1484
    %1486 = vmatmul.bf16.gmra.mxu0 %v1451
    %v1487 = vpop.f32.mrf.mxu0
    %v1488 = vadd.f32 %v1430, %v1487
    %v1489 = vpop.f32.mrf.mxu0
    %v1490 = vadd.f32 %v1430, %v1489
    %1491 = vmatmul.bf16.gmra.mxu0 %v1454
    %v1492 = vpop.f32.mrf.mxu0
    %v1493 = vadd.f32 %v1430, %v1492
    %v1494 = vpop.f32.mrf.mxu0
    %v1495 = vadd.f32 %v1430, %v1494
    %1496 = vmatmul.bf16.gmra.mxu0 %v1457
    %v1497 = vpop.f32.mrf.mxu0
    %v1498 = vadd.f32 %v1430, %v1497
    %v1499 = vpop.f32.mrf.mxu0
    %v1500 = vadd.f32 %v1430, %v1499
    %1501 = vmatmul.bf16.gmra.mxu0 %v1460
    %v1502 = vpop.f32.mrf.mxu0
    %v1503 = vadd.f32 %v1430, %v1502
    %v1504 = vpop.f32.mrf.mxu0
    %v1505 = vadd.f32 %v1430, %v1504
    %1506 = vmatmul.bf16.gmra.mxu0 %v1463
    %v1507 = vpop.f32.mrf.mxu0
    %v1508 = vadd.f32 %v1430, %v1507
    %v1509 = vpop.f32.mrf.mxu0
    %v1510 = vadd.f32 %v1430, %v1509
    %1511 = vmatmul.bf16.gmra.mxu0 %v1466
    %v1512 = vpop.f32.mrf.mxu0
    %v1513 = vadd.f32 %v1430, %v1512
    %v1514 = vpop.f32.mrf.mxu0
    %v1515 = vadd.f32 %v1430, %v1514
    %1516 = vdwg.mxu0
    %v1517 = vpack.c.bf16 %v1020, %v1018
    %v1518 = vpack.c.bf16 %v1025, %v1023
    %v1519 = vpack.c.bf16 %v1030, %v1028
    %v1520 = vpack.c.bf16 %v1035, %v1033
    %v1521 = vpack.c.bf16 %v1040, %v1038
    %v1522 = vpack.c.bf16 %v1045, %v1043
    %v1523 = vpack.c.bf16 %v1050, %v1048
    %v1524 = vpack.c.bf16 %v1055, %v1053
    %1525 = vmatpush.bf16.msra.mxu0 %v1524
    %1526 = vmatpush.bf16.msra.mxu0 %v1523
    %1527 = vmatpush.bf16.msra.mxu0 %v1522
    %1528 = vmatpush.bf16.msra.mxu0 %v1521
    %1529 = vmatpush.bf16.msra.mxu0 %v1520
    %1530 = vmatpush.bf16.msra.mxu0 %v1519
    %1531 = vmatpush.bf16.msra.mxu0 %v1518
    %1532 = vmatpush.bf16.msra.mxu0 %v1517
    %1533 = vmatmul.bf16.gmra.mxu0 %v392
    %v1534 = vpop.f32.mrf.mxu0
    %v1535 = vadd.f32 0.0, %v1534
    %v1536 = vpop.f32.mrf.mxu0
    %v1537 = vadd.f32 0.0, %v1536
    %1538 = vmatmul.bf16.gmra.mxu0 %v393
    %v1539 = vpop.f32.mrf.mxu0
    %v1540 = vadd.f32 0.0, %v1539
    %v1541 = vpop.f32.mrf.mxu0
    %v1542 = vadd.f32 0.0, %v1541
    %1543 = vmatmul.bf16.gmra.mxu0 %v394
    %v1544 = vpop.f32.mrf.mxu0
    %v1545 = vadd.f32 0.0, %v1544
    %v1546 = vpop.f32.mrf.mxu0
    %v1547 = vadd.f32 0.0, %v1546
    %1548 = vmatmul.bf16.gmra.mxu0 %v395
    %v1549 = vpop.f32.mrf.mxu0
    %v1550 = vadd.f32 0.0, %v1549
    %v1551 = vpop.f32.mrf.mxu0
    %v1552 = vadd.f32 0.0, %v1551
    %1553 = vmatmul.bf16.gmra.mxu0 %v396
    %v1554 = vpop.f32.mrf.mxu0
    %v1555 = vadd.f32 0.0, %v1554
    %v1556 = vpop.f32.mrf.mxu0
    %v1557 = vadd.f32 0.0, %v1556
    %1558 = vmatmul.bf16.gmra.mxu0 %v397
    %v1559 = vpop.f32.mrf.mxu0
    %v1560 = vadd.f32 0.0, %v1559
    %v1561 = vpop.f32.mrf.mxu0
    %v1562 = vadd.f32 0.0, %v1561
    %1563 = vmatmul.bf16.gmra.mxu0 %v398
    %v1564 = vpop.f32.mrf.mxu0
    %v1565 = vadd.f32 0.0, %v1564
    %v1566 = vpop.f32.mrf.mxu0
    %v1567 = vadd.f32 0.0, %v1566
    %1568 = vmatmul.bf16.gmra.mxu0 %v399
    %v1569 = vpop.f32.mrf.mxu0
    %v1570 = vadd.f32 0.0, %v1569
    %v1571 = vpop.f32.mrf.mxu0
    %v1572 = vadd.f32 0.0, %v1571
    %1573 = vdwg.mxu0
    %1574 = vmatpush.bf16.msra.mxu0 %v1524
    %1575 = vmatpush.bf16.msra.mxu0 %v1523
    %1576 = vmatpush.bf16.msra.mxu0 %v1522
    %1577 = vmatpush.bf16.msra.mxu0 %v1521
    %1578 = vmatpush.bf16.msra.mxu0 %v1520
    %1579 = vmatpush.bf16.msra.mxu0 %v1519
    %1580 = vmatpush.bf16.msra.mxu0 %v1518
    %1581 = vmatpush.bf16.msra.mxu0 %v1517
    %1582 = vmatmul.bf16.gmra.mxu0 %v512
    %v1583 = vpop.f32.mrf.mxu0
    %v1584 = vadd.f32 0.0, %v1583
    %v1585 = vpop.f32.mrf.mxu0
    %v1586 = vadd.f32 0.0, %v1585
    %1587 = vmatmul.bf16.gmra.mxu0 %v513
    %v1588 = vpop.f32.mrf.mxu0
    %v1589 = vadd.f32 0.0, %v1588
    %v1590 = vpop.f32.mrf.mxu0
    %v1591 = vadd.f32 0.0, %v1590
    %1592 = vmatmul.bf16.gmra.mxu0 %v514
    %v1593 = vpop.f32.mrf.mxu0
    %v1594 = vadd.f32 0.0, %v1593
    %v1595 = vpop.f32.mrf.mxu0
    %v1596 = vadd.f32 0.0, %v1595
    %1597 = vmatmul.bf16.gmra.mxu0 %v515
    %v1598 = vpop.f32.mrf.mxu0
    %v1599 = vadd.f32 0.0, %v1598
    %v1600 = vpop.f32.mrf.mxu0
    %v1601 = vadd.f32 0.0, %v1600
    %1602 = vmatmul.bf16.gmra.mxu0 %v516
    %v1603 = vpop.f32.mrf.mxu0
    %v1604 = vadd.f32 0.0, %v1603
    %v1605 = vpop.f32.mrf.mxu0
    %v1606 = vadd.f32 0.0, %v1605
    %1607 = vmatmul.bf16.gmra.mxu0 %v517
    %v1608 = vpop.f32.mrf.mxu0
    %v1609 = vadd.f32 0.0, %v1608
    %v1610 = vpop.f32.mrf.mxu0
    %v1611 = vadd.f32 0.0, %v1610
    %1612 = vmatmul.bf16.gmra.mxu0 %v518
    %v1613 = vpop.f32.mrf.mxu0
    %v1614 = vadd.f32 0.0, %v1613
    %v1615 = vpop.f32.mrf.mxu0
    %v1616 = vadd.f32 0.0, %v1615
    %1617 = vmatmul.bf16.gmra.mxu0 %v519
    %v1618 = vpop.f32.mrf.mxu0
    %v1619 = vadd.f32 0.0, %v1618
    %v1620 = vpop.f32.mrf.mxu0
    %v1621 = vadd.f32 0.0, %v1620
    %1622 = vdwg.mxu0
    %v1623 = vpack.c.bf16 %v1537, %v1535
    %v1624 = vpack.c.bf16 %v1542, %v1540
    %v1625 = vpack.c.bf16 %v1547, %v1545
    %v1626 = vpack.c.bf16 %v1552, %v1550
    %v1627 = vpack.c.bf16 %v1557, %v1555
    %v1628 = vpack.c.bf16 %v1562, %v1560
    %v1629 = vpack.c.bf16 %v1567, %v1565
    %v1630 = vpack.c.bf16 %v1572, %v1570
    %v1631 = vld [vmem:[%s43] sm:$0xf]
    %v1632 = vld [vmem:[%s43 + $0x4] sm:$0xf]
    %v1633 = vld [vmem:[%s43 + $0x8] sm:$0xf]
    %v1634 = vld [vmem:[%s43 + $0xc] sm:$0xf]
    %v1635 = vpack.c.bf16 %v1586, %v1584
    %v1636 = vpack.c.bf16 %v1591, %v1589
    %v1637 = vpack.c.bf16 %v1596, %v1594
    %v1638 = vpack.c.bf16 %v1601, %v1599
    %v1639 = vpack.c.bf16 %v1606, %v1604
    %v1640 = vpack.c.bf16 %v1611, %v1609
    %v1641 = vpack.c.bf16 %v1616, %v1614
    %v1642 = vpack.c.bf16 %v1621, %v1619
    %v1643 = vld [vmem:[%s45] sm:$0xf]
    %v1644 = vld [vmem:[%s45 + $0x4] sm:$0xf]
    %v1645 = vld [vmem:[%s45 + $0x8] sm:$0xf]
    %v1646 = vld [vmem:[%s45 + $0xc] sm:$0xf]
    %v1651 = vunpack.c.l.b16 %v1643
    %v1652 = vunpack.c.l.b16 %v1644
    %v1653 = vunpack.c.l.b16 %v1645
    %v1654 = vunpack.c.l.b16 %v1646
    %v1655 = vpack.c.b16 %v1652, %v1651
    %v1656 = vpack.c.b16 %v1654, %v1653
    %v1660 = vsel %vm749, %v1635, 0
    %v1663 = vsel %vm749, %v1636, 0
    %v1666 = vsel %vm749, %v1637, 0
    %v1669 = vsel %vm749, %v1638, 0
    %v1672 = vsel %vm749, %v1639, 0
    %v1675 = vsel %vm749, %v1640, 0
    %v1678 = vsel %vm749, %v1641, 0
    %v1681 = vsel %vm749, %v1642, 0
    %1683 = vmatpush.bf16.msra.mxu0 0
    %1684 = vmatpush.bf16.msra.mxu0 0
    %1685 = vmatpush.bf16.msra.mxu0 0
    %1686 = vmatpush.bf16.msra.mxu0 0
    %1687 = vmatpush.bf16.msra.mxu0 0
    %1688 = vmatpush.bf16.msra.mxu0 0
    %1689 = vmatpush.bf16.msra.mxu0 %v1656
    %1690 = vmatpush.bf16.msra.mxu0 %v1655
    %1691 = vmatmul.bf16.gmra.mxu0 %v1660
    %v1692 = vpop.f32.mrf.mxu0
    %v1693 = vadd.f32 0.0, %v1692
    %v1694 = vpop.f32.mrf.mxu0
    %v1695 = vadd.f32 0.0, %v1694
    %1696 = vmatmul.bf16.gmra.mxu0 %v1663
    %v1697 = vpop.f32.mrf.mxu0
    %v1698 = vadd.f32 0.0, %v1697
    %v1699 = vpop.f32.mrf.mxu0
    %v1700 = vadd.f32 0.0, %v1699
    %1701 = vmatmul.bf16.gmra.mxu0 %v1666
    %v1702 = vpop.f32.mrf.mxu0
    %v1703 = vadd.f32 0.0, %v1702
    %v1704 = vpop.f32.mrf.mxu0
    %v1705 = vadd.f32 0.0, %v1704
    %1706 = vmatmul.bf16.gmra.mxu0 %v1669
    %v1707 = vpop.f32.mrf.mxu0
    %v1708 = vadd.f32 0.0, %v1707
    %v1709 = vpop.f32.mrf.mxu0
    %v1710 = vadd.f32 0.0, %v1709
    %1711 = vmatmul.bf16.gmra.mxu0 %v1672
    %v1712 = vpop.f32.mrf.mxu0
    %v1713 = vadd.f32 0.0, %v1712
    %v1714 = vpop.f32.mrf.mxu0
    %v1715 = vadd.f32 0.0, %v1714
    %1716 = vmatmul.bf16.gmra.mxu0 %v1675
    %v1717 = vpop.f32.mrf.mxu0
    %v1718 = vadd.f32 0.0, %v1717
    %v1719 = vpop.f32.mrf.mxu0
    %v1720 = vadd.f32 0.0, %v1719
    %1721 = vmatmul.bf16.gmra.mxu0 %v1678
    %v1722 = vpop.f32.mrf.mxu0
    %v1723 = vadd.f32 0.0, %v1722
    %v1724 = vpop.f32.mrf.mxu0
    %v1725 = vadd.f32 0.0, %v1724
    %1726 = vmatmul.bf16.gmra.mxu0 %v1681
    %v1727 = vpop.f32.mrf.mxu0
    %v1728 = vadd.f32 0.0, %v1727
    %v1729 = vpop.f32.mrf.mxu0
    %v1730 = vadd.f32 0.0, %v1729
    %1731 = vdwg.mxu0
    %v1736 = vunpack.c.l.b16 %v1631
    %v1737 = vunpack.c.l.b16 %v1632
    %v1738 = vunpack.c.l.b16 %v1633
    %v1739 = vunpack.c.l.b16 %v1634
    %v1740 = vpack.c.b16 %v1737, %v1736
    %v1741 = vpack.c.b16 %v1739, %v1738
    %v1745 = vsel %vm749, %v1623, 0
    %v1748 = vsel %vm749, %v1624, 0
    %v1751 = vsel %vm749, %v1625, 0
    %v1754 = vsel %vm749, %v1626, 0
    %v1757 = vsel %vm749, %v1627, 0
    %v1760 = vsel %vm749, %v1628, 0
    %v1763 = vsel %vm749, %v1629, 0
    %v1766 = vsel %vm749, %v1630, 0
    %1768 = vmatpush.bf16.msra.mxu0 0
    %1769 = vmatpush.bf16.msra.mxu0 0
    %1770 = vmatpush.bf16.msra.mxu0 0
    %1771 = vmatpush.bf16.msra.mxu0 0
    %1772 = vmatpush.bf16.msra.mxu0 0
    %1773 = vmatpush.bf16.msra.mxu0 0
    %1774 = vmatpush.bf16.msra.mxu0 %v1741
    %1775 = vmatpush.bf16.msra.mxu0 %v1740
    %1776 = vmatmul.bf16.gmra.mxu0 %v1745
    %v1777 = vpop.f32.mrf.mxu0
    %v1778 = vadd.f32 %v1693, %v1777
    %v1779 = vpop.f32.mrf.mxu0
    %v1780 = vadd.f32 %v1695, %v1779
    %1781 = vmatmul.bf16.gmra.mxu0 %v1748
    %v1782 = vpop.f32.mrf.mxu0
    %v1783 = vadd.f32 %v1698, %v1782
    %v1784 = vpop.f32.mrf.mxu0
    %v1785 = vadd.f32 %v1700, %v1784
    %1786 = vmatmul.bf16.gmra.mxu0 %v1751
    %v1787 = vpop.f32.mrf.mxu0
    %v1788 = vadd.f32 %v1703, %v1787
    %v1789 = vpop.f32.mrf.mxu0
    %v1790 = vadd.f32 %v1705, %v1789
    %1791 = vmatmul.bf16.gmra.mxu0 %v1754
    %v1792 = vpop.f32.mrf.mxu0
    %v1793 = vadd.f32 %v1708, %v1792
    %v1794 = vpop.f32.mrf.mxu0
    %v1795 = vadd.f32 %v1710, %v1794
    %1796 = vmatmul.bf16.gmra.mxu0 %v1757
    %v1797 = vpop.f32.mrf.mxu0
    %v1798 = vadd.f32 %v1713, %v1797
    %v1799 = vpop.f32.mrf.mxu0
    %v1800 = vadd.f32 %v1715, %v1799
    %1801 = vmatmul.bf16.gmra.mxu0 %v1760
    %v1802 = vpop.f32.mrf.mxu0
    %v1803 = vadd.f32 %v1718, %v1802
    %v1804 = vpop.f32.mrf.mxu0
    %v1805 = vadd.f32 %v1720, %v1804
    %1806 = vmatmul.bf16.gmra.mxu0 %v1763
    %v1807 = vpop.f32.mrf.mxu0
    %v1808 = vadd.f32 %v1723, %v1807
    %v1809 = vpop.f32.mrf.mxu0
    %v1810 = vadd.f32 %v1725, %v1809
    %1811 = vmatmul.bf16.gmra.mxu0 %v1766
    %v1812 = vpop.f32.mrf.mxu0
    %v1813 = vadd.f32 %v1728, %v1812
    %v1814 = vpop.f32.mrf.mxu0
    %v1815 = vadd.f32 %v1730, %v1814
    %1816 = vdwg.mxu0
    %v1817 = vpack.c.bf16 %v1480, %v1478
    %v1818 = vpack.c.bf16 %v1485, %v1483
    %v1819 = vpack.c.bf16 %v1490, %v1488
    %v1820 = vpack.c.bf16 %v1495, %v1493
    %v1821 = vpack.c.bf16 %v1500, %v1498
    %v1822 = vpack.c.bf16 %v1505, %v1503
    %v1823 = vpack.c.bf16 %v1510, %v1508
    %v1824 = vpack.c.bf16 %v1515, %v1513
    %v1825 = vld [vmem:[%s47] sm:$0xf]
    %v1826 = vld [vmem:[%s47 + $0x4] sm:$0xf]
    %v1827 = vld [vmem:[%s47 + $0x8] sm:$0xf]
    %v1828 = vld [vmem:[%s47 + $0xc] sm:$0xf]
    %v1833 = vunpack.c.l.b16 %v1825
    %v1834 = vunpack.c.l.b16 %v1826
    %v1835 = vunpack.c.l.b16 %v1827
    %v1836 = vunpack.c.l.b16 %v1828
    %v1837 = vpack.c.b16 %v1834, %v1833
    %v1838 = vpack.c.b16 %v1836, %v1835
    %v1842 = vsel %vm749, %v1817, 0
    %v1845 = vsel %vm749, %v1818, 0
    %v1848 = vsel %vm749, %v1819, 0
    %v1851 = vsel %vm749, %v1820, 0
    %v1854 = vsel %vm749, %v1821, 0
    %v1857 = vsel %vm749, %v1822, 0
    %v1860 = vsel %vm749, %v1823, 0
    %v1863 = vsel %vm749, %v1824, 0
    %1865 = vmatpush.bf16.msra.mxu0 0
    %1866 = vmatpush.bf16.msra.mxu0 0
    %1867 = vmatpush.bf16.msra.mxu0 0
    %1868 = vmatpush.bf16.msra.mxu0 0
    %1869 = vmatpush.bf16.msra.mxu0 0
    %1870 = vmatpush.bf16.msra.mxu0 0
    %1871 = vmatpush.bf16.msra.mxu0 %v1838
    %1872 = vmatpush.bf16.msra.mxu0 %v1837
    %1873 = vmatmul.bf16.gmra.mxu0 %v1842
    %v1874 = vpop.f32.mrf.mxu0
    %v1875 = vadd.f32 0.0, %v1874
    %v1876 = vpop.f32.mrf.mxu0
    %v1877 = vadd.f32 0.0, %v1876
    %1878 = vmatmul.bf16.gmra.mxu0 %v1845
    %v1879 = vpop.f32.mrf.mxu0
    %v1880 = vadd.f32 0.0, %v1879
    %v1881 = vpop.f32.mrf.mxu0
    %v1882 = vadd.f32 0.0, %v1881
    %1883 = vmatmul.bf16.gmra.mxu0 %v1848
    %v1884 = vpop.f32.mrf.mxu0
    %v1885 = vadd.f32 0.0, %v1884
    %v1886 = vpop.f32.mrf.mxu0
    %v1887 = vadd.f32 0.0, %v1886
    %1888 = vmatmul.bf16.gmra.mxu0 %v1851
    %v1889 = vpop.f32.mrf.mxu0
    %v1890 = vadd.f32 0.0, %v1889
    %v1891 = vpop.f32.mrf.mxu0
    %v1892 = vadd.f32 0.0, %v1891
    %1893 = vmatmul.bf16.gmra.mxu0 %v1854
    %v1894 = vpop.f32.mrf.mxu0
    %v1895 = vadd.f32 0.0, %v1894
    %v1896 = vpop.f32.mrf.mxu0
    %v1897 = vadd.f32 0.0, %v1896
    %1898 = vmatmul.bf16.gmra.mxu0 %v1857
    %v1899 = vpop.f32.mrf.mxu0
    %v1900 = vadd.f32 0.0, %v1899
    %v1901 = vpop.f32.mrf.mxu0
    %v1902 = vadd.f32 0.0, %v1901
    %1903 = vmatmul.bf16.gmra.mxu0 %v1860
    %v1904 = vpop.f32.mrf.mxu0
    %v1905 = vadd.f32 0.0, %v1904
    %v1906 = vpop.f32.mrf.mxu0
    %v1907 = vadd.f32 0.0, %v1906
    %1908 = vmatmul.bf16.gmra.mxu0 %v1863
    %v1909 = vpop.f32.mrf.mxu0
    %v1910 = vadd.f32 0.0, %v1909
    %v1911 = vpop.f32.mrf.mxu0
    %v1912 = vadd.f32 0.0, %v1911
    %1913 = vdwg.mxu0
    %v1914 = vadd.f32 %v1778, %v1875
    %v1915 = vadd.f32 %v1780, %v1877
    %v1916 = vadd.f32 %v1783, %v1880
    %v1917 = vadd.f32 %v1785, %v1882
    %v1918 = vadd.f32 %v1788, %v1885
    %v1919 = vadd.f32 %v1790, %v1887
    %v1920 = vadd.f32 %v1793, %v1890
    %v1921 = vadd.f32 %v1795, %v1892
    %v1922 = vadd.f32 %v1798, %v1895
    %v1923 = vadd.f32 %v1800, %v1897
    %v1924 = vadd.f32 %v1803, %v1900
    %v1925 = vadd.f32 %v1805, %v1902
    %v1926 = vadd.f32 %v1808, %v1905
    %v1927 = vadd.f32 %v1810, %v1907
    %v1928 = vadd.f32 %v1813, %v1910
    %v1929 = vadd.f32 %v1815, %v1912
    %v1930 = vld [vmem:[%s49] sm:$0x1]
    %v1932 = vperm.slane %v1930, 0
    %v1934 = vadd.f32 %v1914, %v1932
    %v1935 = vadd.f32 %v1915, %v1932
    %v1936 = vadd.f32 %v1916, %v1932
    %v1937 = vadd.f32 %v1917, %v1932
    %v1938 = vadd.f32 %v1918, %v1932
    %v1939 = vadd.f32 %v1919, %v1932
    %v1940 = vadd.f32 %v1920, %v1932
    %v1941 = vadd.f32 %v1921, %v1932
    %v1942 = vadd.f32 %v1922, %v1932
    %v1943 = vadd.f32 %v1923, %v1932
    %v1944 = vadd.f32 %v1924, %v1932
    %v1945 = vadd.f32 %v1925, %v1932
    %v1946 = vadd.f32 %v1926, %v1932
    %v1947 = vadd.f32 %v1927, %v1932
    %v1948 = vadd.f32 %v1928, %v1932
    %v1949 = vadd.f32 %v1929, %v1932
    %v1950 = vmax.f32 %v1934, 0.0
    %v1951 = vmax.f32 %v1935, 0.0
    %v1952 = vmax.f32 %v1936, 0.0
    %v1953 = vmax.f32 %v1937, 0.0
    %v1954 = vmax.f32 %v1938, 0.0
    %v1955 = vmax.f32 %v1939, 0.0
    %v1956 = vmax.f32 %v1940, 0.0
    %v1957 = vmax.f32 %v1941, 0.0
    %v1958 = vmax.f32 %v1942, 0.0
    %v1959 = vmax.f32 %v1943, 0.0
    %v1960 = vmax.f32 %v1944, 0.0
    %v1961 = vmax.f32 %v1945, 0.0
    %v1962 = vmax.f32 %v1946, 0.0
    %v1963 = vmax.f32 %v1947, 0.0
    %v1964 = vmax.f32 %v1948, 0.0
    %v1965 = vmax.f32 %v1949, 0.0
    %v1966 = vpack.c.bf16 %v1951, %v1950
    %v1967 = vpack.c.bf16 %v1953, %v1952
    %v1968 = vpack.c.bf16 %v1955, %v1954
    %v1969 = vpack.c.bf16 %v1957, %v1956
    %v1970 = vpack.c.bf16 %v1959, %v1958
    %v1971 = vpack.c.bf16 %v1961, %v1960
    %v1972 = vpack.c.bf16 %v1963, %v1962
    %v1973 = vpack.c.bf16 %v1965, %v1964
    %v1974 = vld [vmem:[%s51] sm:$0xf]
    %v1975 = vld [vmem:[%s51 + $0x4] sm:$0xf]
    %v1976 = vld [vmem:[%s51 + $0x8] sm:$0xf]
    %v1977 = vld [vmem:[%s51 + $0xc] sm:$0xf]
    %v1978 = vld [vmem:[%s53] sm:$0x1]
    %v1980 = vperm.slane %v1978, 0
    %v1986 = vunpack.c.l.b16 %v1974
    %v1987 = vunpack.c.l.b16 %v1975
    %v1988 = vunpack.c.l.b16 %v1976
    %v1989 = vunpack.c.l.b16 %v1977
    %v1990 = vpack.c.b16 %v1987, %v1986
    %v1991 = vpack.c.b16 %v1989, %v1988
    %v1995 = vsel %vm749, %v1966, 0
    %v1998 = vsel %vm749, %v1967, 0
    %v2001 = vsel %vm749, %v1968, 0
    %v2004 = vsel %vm749, %v1969, 0
    %v2007 = vsel %vm749, %v1970, 0
    %v2010 = vsel %vm749, %v1971, 0
    %v2013 = vsel %vm749, %v1972, 0
    %v2016 = vsel %vm749, %v1973, 0
    %2018 = vmatpush.bf16.msra.mxu0 0
    %2019 = vmatpush.bf16.msra.mxu0 0
    %2020 = vmatpush.bf16.msra.mxu0 0
    %2021 = vmatpush.bf16.msra.mxu0 0
    %2022 = vmatpush.bf16.msra.mxu0 0
    %2023 = vmatpush.bf16.msra.mxu0 0
    %2024 = vmatpush.bf16.msra.mxu0 %v1991
    %2025 = vmatpush.bf16.msra.mxu0 %v1990
    %2026 = vmatmul.bf16.gmra.mxu0 %v1995
    %v2027 = vpop.f32.mrf.mxu0
    %v2028 = vadd.f32 %v1980, %v2027
    %v2029 = vpop.f32.mrf.mxu0
    %v2030 = vadd.f32 %v1980, %v2029
    %2031 = vmatmul.bf16.gmra.mxu0 %v1998
    %v2032 = vpop.f32.mrf.mxu0
    %v2033 = vadd.f32 %v1980, %v2032
    %v2034 = vpop.f32.mrf.mxu0
    %v2035 = vadd.f32 %v1980, %v2034
    %2036 = vmatmul.bf16.gmra.mxu0 %v2001
    %v2037 = vpop.f32.mrf.mxu0
    %v2038 = vadd.f32 %v1980, %v2037
    %v2039 = vpop.f32.mrf.mxu0
    %v2040 = vadd.f32 %v1980, %v2039
    %2041 = vmatmul.bf16.gmra.mxu0 %v2004
    %v2042 = vpop.f32.mrf.mxu0
    %v2043 = vadd.f32 %v1980, %v2042
    %v2044 = vpop.f32.mrf.mxu0
    %v2045 = vadd.f32 %v1980, %v2044
    %2046 = vmatmul.bf16.gmra.mxu0 %v2007
    %v2047 = vpop.f32.mrf.mxu0
    %v2048 = vadd.f32 %v1980, %v2047
    %v2049 = vpop.f32.mrf.mxu0
    %v2050 = vadd.f32 %v1980, %v2049
    %2051 = vmatmul.bf16.gmra.mxu0 %v2010
    %v2052 = vpop.f32.mrf.mxu0
    %v2053 = vadd.f32 %v1980, %v2052
    %v2054 = vpop.f32.mrf.mxu0
    %v2055 = vadd.f32 %v1980, %v2054
    %2056 = vmatmul.bf16.gmra.mxu0 %v2013
    %v2057 = vpop.f32.mrf.mxu0
    %v2058 = vadd.f32 %v1980, %v2057
    %v2059 = vpop.f32.mrf.mxu0
    %v2060 = vadd.f32 %v1980, %v2059
    %2061 = vmatmul.bf16.gmra.mxu0 %v2016
    %v2062 = vpop.f32.mrf.mxu0
    %v2063 = vadd.f32 %v1980, %v2062
    %v2064 = vpop.f32.mrf.mxu0
    %v2065 = vadd.f32 %v1980, %v2064
    %2066 = vdwg.mxu0
    %v2067 = vmax.f32 %v2028, 0.0
    %v2068 = vmax.f32 %v2030, 0.0
    %v2069 = vmax.f32 %v2033, 0.0
    %v2070 = vmax.f32 %v2035, 0.0
    %v2071 = vmax.f32 %v2038, 0.0
    %v2072 = vmax.f32 %v2040, 0.0
    %v2073 = vmax.f32 %v2043, 0.0
    %v2074 = vmax.f32 %v2045, 0.0
    %v2075 = vmax.f32 %v2048, 0.0
    %v2076 = vmax.f32 %v2050, 0.0
    %v2077 = vmax.f32 %v2053, 0.0
    %v2078 = vmax.f32 %v2055, 0.0
    %v2079 = vmax.f32 %v2058, 0.0
    %v2080 = vmax.f32 %v2060, 0.0
    %v2081 = vmax.f32 %v2063, 0.0
    %v2082 = vmax.f32 %v2065, 0.0
    %v2083 = vpack.c.bf16 %v2068, %v2067
    %v2084 = vpack.c.bf16 %v2070, %v2069
    %v2085 = vpack.c.bf16 %v2072, %v2071
    %v2086 = vpack.c.bf16 %v2074, %v2073
    %v2087 = vpack.c.bf16 %v2076, %v2075
    %v2088 = vpack.c.bf16 %v2078, %v2077
    %v2089 = vpack.c.bf16 %v2080, %v2079
    %v2090 = vpack.c.bf16 %v2082, %v2081
    %v2091 = vld [vmem:[%s55] sm:$0xf]
    %v2092 = vld [vmem:[%s55 + $0x4] sm:$0xf]
    %v2093 = vld [vmem:[%s55 + $0x8] sm:$0xf]
    %v2094 = vld [vmem:[%s55 + $0xc] sm:$0xf]
    %v2095 = vld [vmem:[%s57] sm:$0x1]
    %v2097 = vperm.slane %v2095, 0
    %v2103 = vunpack.c.l.b16 %v2091
    %v2104 = vunpack.c.l.b16 %v2092
    %v2105 = vunpack.c.l.b16 %v2093
    %v2106 = vunpack.c.l.b16 %v2094
    %v2107 = vpack.c.b16 %v2104, %v2103
    %v2108 = vpack.c.b16 %v2106, %v2105
    %v2112 = vsel %vm749, %v2083, 0
    %v2115 = vsel %vm749, %v2084, 0
    %v2118 = vsel %vm749, %v2085, 0
    %v2121 = vsel %vm749, %v2086, 0
    %v2124 = vsel %vm749, %v2087, 0
    %v2127 = vsel %vm749, %v2088, 0
    %v2130 = vsel %vm749, %v2089, 0
    %v2133 = vsel %vm749, %v2090, 0
    %2135 = vmatpush.bf16.msra.mxu0 0
    %2136 = vmatpush.bf16.msra.mxu0 0
    %2137 = vmatpush.bf16.msra.mxu0 0
    %2138 = vmatpush.bf16.msra.mxu0 0
    %2139 = vmatpush.bf16.msra.mxu0 0
    %2140 = vmatpush.bf16.msra.mxu0 0
    %2141 = vmatpush.bf16.msra.mxu0 %v2108
    %2142 = vmatpush.bf16.msra.mxu0 %v2107
    %2143 = vmatmul.bf16.gmra.mxu0 %v2112
    %v2144 = vpop.f32.mrf.mxu0
    %v2145 = vadd.f32 %v2097, %v2144
    %v2146 = vpop.f32.mrf.mxu0
    %v2147 = vadd.f32 %v2097, %v2146
    %2148 = vmatmul.bf16.gmra.mxu0 %v2115
    %v2149 = vpop.f32.mrf.mxu0
    %v2150 = vadd.f32 %v2097, %v2149
    %v2151 = vpop.f32.mrf.mxu0
    %v2152 = vadd.f32 %v2097, %v2151
    %2153 = vmatmul.bf16.gmra.mxu0 %v2118
    %v2154 = vpop.f32.mrf.mxu0
    %v2155 = vadd.f32 %v2097, %v2154
    %v2156 = vpop.f32.mrf.mxu0
    %v2157 = vadd.f32 %v2097, %v2156
    %2158 = vmatmul.bf16.gmra.mxu0 %v2121
    %v2159 = vpop.f32.mrf.mxu0
    %v2160 = vadd.f32 %v2097, %v2159
    %v2161 = vpop.f32.mrf.mxu0
    %v2162 = vadd.f32 %v2097, %v2161
    %2163 = vmatmul.bf16.gmra.mxu0 %v2124
    %v2164 = vpop.f32.mrf.mxu0
    %v2165 = vadd.f32 %v2097, %v2164
    %v2166 = vpop.f32.mrf.mxu0
    %v2167 = vadd.f32 %v2097, %v2166
    %2168 = vmatmul.bf16.gmra.mxu0 %v2127
    %v2169 = vpop.f32.mrf.mxu0
    %v2170 = vadd.f32 %v2097, %v2169
    %v2171 = vpop.f32.mrf.mxu0
    %v2172 = vadd.f32 %v2097, %v2171
    %2173 = vmatmul.bf16.gmra.mxu0 %v2130
    %v2174 = vpop.f32.mrf.mxu0
    %v2175 = vadd.f32 %v2097, %v2174
    %v2176 = vpop.f32.mrf.mxu0
    %v2177 = vadd.f32 %v2097, %v2176
    %2178 = vmatmul.bf16.gmra.mxu0 %v2133
    %v2179 = vpop.f32.mrf.mxu0
    %v2180 = vadd.f32 %v2097, %v2179
    %v2181 = vpop.f32.mrf.mxu0
    %v2182 = vadd.f32 %v2097, %v2181
    %2183 = vdwg.mxu0
    %v2184 = vmax.f32 %v2145, 0.0
    %v2185 = vmax.f32 %v2147, 0.0
    %v2186 = vmax.f32 %v2150, 0.0
    %v2187 = vmax.f32 %v2152, 0.0
    %v2188 = vmax.f32 %v2155, 0.0
    %v2189 = vmax.f32 %v2157, 0.0
    %v2190 = vmax.f32 %v2160, 0.0
    %v2191 = vmax.f32 %v2162, 0.0
    %v2192 = vmax.f32 %v2165, 0.0
    %v2193 = vmax.f32 %v2167, 0.0
    %v2194 = vmax.f32 %v2170, 0.0
    %v2195 = vmax.f32 %v2172, 0.0
    %v2196 = vmax.f32 %v2175, 0.0
    %v2197 = vmax.f32 %v2177, 0.0
    %v2198 = vmax.f32 %v2180, 0.0
    %v2199 = vmax.f32 %v2182, 0.0
    %v2200 = vpack.c.bf16 %v2185, %v2184
    %v2201 = vpack.c.bf16 %v2187, %v2186
    %v2202 = vpack.c.bf16 %v2189, %v2188
    %v2203 = vpack.c.bf16 %v2191, %v2190
    %v2204 = vpack.c.bf16 %v2193, %v2192
    %v2205 = vpack.c.bf16 %v2195, %v2194
    %v2206 = vpack.c.bf16 %v2197, %v2196
    %v2207 = vpack.c.bf16 %v2199, %v2198
    %v2208 = vld [vmem:[%s59] sm:$0xf]
    %v2209 = vld [vmem:[%s59 + $0x4] sm:$0xf]
    %v2210 = vld [vmem:[%s59 + $0x8] sm:$0xf]
    %v2211 = vld [vmem:[%s59 + $0xc] sm:$0xf]
    %v2212 = vld [vmem:[%s61] sm:$0x1]
    %v2214 = vperm.slane %v2212, 0
    %v2220 = vunpack.c.l.b16 %v2208
    %v2221 = vunpack.c.l.b16 %v2209
    %v2222 = vunpack.c.l.b16 %v2210
    %v2223 = vunpack.c.l.b16 %v2211
    %v2224 = vpack.c.b16 %v2221, %v2220
    %v2225 = vpack.c.b16 %v2223, %v2222
    %v2229 = vsel %vm749, %v2200, 0
    %v2232 = vsel %vm749, %v2201, 0
    %v2235 = vsel %vm749, %v2202, 0
    %v2238 = vsel %vm749, %v2203, 0
    %v2241 = vsel %vm749, %v2204, 0
    %v2244 = vsel %vm749, %v2205, 0
    %v2247 = vsel %vm749, %v2206, 0
    %v2250 = vsel %vm749, %v2207, 0
    %2252 = vmatpush.bf16.msra.mxu0 0
    %2253 = vmatpush.bf16.msra.mxu0 0
    %2254 = vmatpush.bf16.msra.mxu0 0
    %2255 = vmatpush.bf16.msra.mxu0 0
    %2256 = vmatpush.bf16.msra.mxu0 0
    %2257 = vmatpush.bf16.msra.mxu0 0
    %2258 = vmatpush.bf16.msra.mxu0 %v2225
    %2259 = vmatpush.bf16.msra.mxu0 %v2224
    %2260 = vmatmul.bf16.gmra.mxu0 %v2229
    %v2261 = vpop.f32.mrf.mxu0
    %v2262 = vadd.f32 %v2214, %v2261
    %v2263 = vpop.f32.mrf.mxu0
    %v2264 = vadd.f32 %v2214, %v2263
    %2265 = vmatmul.bf16.gmra.mxu0 %v2232
    %v2266 = vpop.f32.mrf.mxu0
    %v2267 = vadd.f32 %v2214, %v2266
    %v2268 = vpop.f32.mrf.mxu0
    %v2269 = vadd.f32 %v2214, %v2268
    %2270 = vmatmul.bf16.gmra.mxu0 %v2235
    %v2271 = vpop.f32.mrf.mxu0
    %v2272 = vadd.f32 %v2214, %v2271
    %v2273 = vpop.f32.mrf.mxu0
    %v2274 = vadd.f32 %v2214, %v2273
    %2275 = vmatmul.bf16.gmra.mxu0 %v2238
    %v2276 = vpop.f32.mrf.mxu0
    %v2277 = vadd.f32 %v2214, %v2276
    %v2278 = vpop.f32.mrf.mxu0
    %v2279 = vadd.f32 %v2214, %v2278
    %2280 = vmatmul.bf16.gmra.mxu0 %v2241
    %v2281 = vpop.f32.mrf.mxu0
    %v2282 = vadd.f32 %v2214, %v2281
    %v2283 = vpop.f32.mrf.mxu0
    %v2284 = vadd.f32 %v2214, %v2283
    %2285 = vmatmul.bf16.gmra.mxu0 %v2244
    %v2286 = vpop.f32.mrf.mxu0
    %v2287 = vadd.f32 %v2214, %v2286
    %v2288 = vpop.f32.mrf.mxu0
    %v2289 = vadd.f32 %v2214, %v2288
    %2290 = vmatmul.bf16.gmra.mxu0 %v2247
    %v2291 = vpop.f32.mrf.mxu0
    %v2292 = vadd.f32 %v2214, %v2291
    %v2293 = vpop.f32.mrf.mxu0
    %v2294 = vadd.f32 %v2214, %v2293
    %2295 = vmatmul.bf16.gmra.mxu0 %v2250
    %v2296 = vpop.f32.mrf.mxu0
    %v2297 = vadd.f32 %v2214, %v2296
    %v2298 = vpop.f32.mrf.mxu0
    %v2299 = vadd.f32 %v2214, %v2298
    %2300 = vdwg.mxu0
    %v2301 = vpack.c.bf16 %v2264, %v2262
    %v2302 = vpack.c.bf16 %v2269, %v2267
    %v2303 = vpack.c.bf16 %v2274, %v2272
    %v2304 = vpack.c.bf16 %v2279, %v2277
    %v2305 = vpack.c.bf16 %v2284, %v2282
    %v2306 = vpack.c.bf16 %v2289, %v2287
    %v2307 = vpack.c.bf16 %v2294, %v2292
    %v2308 = vpack.c.bf16 %v2299, %v2297
    %2309 = vmatpush.bf16.msra.mxu0 %v2308
    %2310 = vmatpush.bf16.msra.mxu0 %v2307
    %2311 = vmatpush.bf16.msra.mxu0 %v2306
    %2312 = vmatpush.bf16.msra.mxu0 %v2305
    %2313 = vmatpush.bf16.msra.mxu0 %v2304
    %2314 = vmatpush.bf16.msra.mxu0 %v2303
    %2315 = vmatpush.bf16.msra.mxu0 %v2302
    %2316 = vmatpush.bf16.msra.mxu0 %v2301
    %2317 = vmatmul.bf16.gmra.mxu0 %v587
    %v2318 = vpop.f32.mrf.mxu0
    %v2319 = vadd.f32 0.0, %v2318
    %v2320 = vpop.f32.mrf.mxu0
    %v2321 = vadd.f32 0.0, %v2320
    %2322 = vmatmul.bf16.gmra.mxu0 %v588
    %v2323 = vpop.f32.mrf.mxu0
    %v2324 = vadd.f32 0.0, %v2323
    %v2325 = vpop.f32.mrf.mxu0
    %v2326 = vadd.f32 0.0, %v2325
    %2327 = vmatmul.bf16.gmra.mxu0 %v589
    %v2328 = vpop.f32.mrf.mxu0
    %v2329 = vadd.f32 0.0, %v2328
    %v2330 = vpop.f32.mrf.mxu0
    %v2331 = vadd.f32 0.0, %v2330
    %2332 = vmatmul.bf16.gmra.mxu0 %v590
    %v2333 = vpop.f32.mrf.mxu0
    %v2334 = vadd.f32 0.0, %v2333
    %v2335 = vpop.f32.mrf.mxu0
    %v2336 = vadd.f32 0.0, %v2335
    %2337 = vmatmul.bf16.gmra.mxu0 %v591
    %v2338 = vpop.f32.mrf.mxu0
    %v2339 = vadd.f32 0.0, %v2338
    %v2340 = vpop.f32.mrf.mxu0
    %v2341 = vadd.f32 0.0, %v2340
    %2342 = vmatmul.bf16.gmra.mxu0 %v592
    %v2343 = vpop.f32.mrf.mxu0
    %v2344 = vadd.f32 0.0, %v2343
    %v2345 = vpop.f32.mrf.mxu0
    %v2346 = vadd.f32 0.0, %v2345
    %2347 = vmatmul.bf16.gmra.mxu0 %v593
    %v2348 = vpop.f32.mrf.mxu0
    %v2349 = vadd.f32 0.0, %v2348
    %v2350 = vpop.f32.mrf.mxu0
    %v2351 = vadd.f32 0.0, %v2350
    %2352 = vmatmul.bf16.gmra.mxu0 %v594
    %v2353 = vpop.f32.mrf.mxu0
    %v2354 = vadd.f32 0.0, %v2353
    %v2355 = vpop.f32.mrf.mxu0
    %v2356 = vadd.f32 0.0, %v2355
    %2357 = vdwg.mxu0
    %v2358 = vld [vmem:[%s63] sm:$0xf]
    %v2359 = vld [vmem:[%s63 + $0x4] sm:$0xf]
    %v2360 = vld [vmem:[%s63 + $0x8] sm:$0xf]
    %v2361 = vld [vmem:[%s63 + $0xc] sm:$0xf]
    %v2362 = vpack.c.bf16 %v2321, %v2319
    %v2363 = vpack.c.bf16 %v2326, %v2324
    %v2364 = vpack.c.bf16 %v2331, %v2329
    %v2365 = vpack.c.bf16 %v2336, %v2334
    %v2366 = vpack.c.bf16 %v2341, %v2339
    %v2367 = vpack.c.bf16 %v2346, %v2344
    %v2368 = vpack.c.bf16 %v2351, %v2349
    %v2369 = vpack.c.bf16 %v2356, %v2354
    %v2370 = vld [vmem:[%s65] sm:$0xf]
    %v2371 = vld [vmem:[%s65 + $0x4] sm:$0xf]
    %v2372 = vld [vmem:[%s65 + $0x8] sm:$0xf]
    %v2373 = vld [vmem:[%s65 + $0xc] sm:$0xf]
    %v2378 = vunpack.c.l.b16 %v2370
    %v2379 = vunpack.c.l.b16 %v2371
    %v2380 = vunpack.c.l.b16 %v2372
    %v2381 = vunpack.c.l.b16 %v2373
    %v2382 = vpack.c.b16 %v2379, %v2378
    %v2383 = vpack.c.b16 %v2381, %v2380
    %v2387 = vsel %vm749, %v2362, 0
    %v2390 = vsel %vm749, %v2363, 0
    %v2393 = vsel %vm749, %v2364, 0
    %v2396 = vsel %vm749, %v2365, 0
    %v2399 = vsel %vm749, %v2366, 0
    %v2402 = vsel %vm749, %v2367, 0
    %v2405 = vsel %vm749, %v2368, 0
    %v2408 = vsel %vm749, %v2369, 0
    %2410 = vmatpush.bf16.msra.mxu0 0
    %2411 = vmatpush.bf16.msra.mxu0 0
    %2412 = vmatpush.bf16.msra.mxu0 0
    %2413 = vmatpush.bf16.msra.mxu0 0
    %2414 = vmatpush.bf16.msra.mxu0 0
    %2415 = vmatpush.bf16.msra.mxu0 0
    %2416 = vmatpush.bf16.msra.mxu0 %v2383
    %2417 = vmatpush.bf16.msra.mxu0 %v2382
    %2418 = vmatmul.bf16.gmra.mxu0 %v2387
    %v2419 = vpop.f32.mrf.mxu0
    %v2420 = vadd.f32 0.0, %v2419
    %v2421 = vpop.f32.mrf.mxu0
    %v2422 = vadd.f32 0.0, %v2421
    %2423 = vmatmul.bf16.gmra.mxu0 %v2390
    %v2424 = vpop.f32.mrf.mxu0
    %v2425 = vadd.f32 0.0, %v2424
    %v2426 = vpop.f32.mrf.mxu0
    %v2427 = vadd.f32 0.0, %v2426
    %2428 = vmatmul.bf16.gmra.mxu0 %v2393
    %v2429 = vpop.f32.mrf.mxu0
    %v2430 = vadd.f32 0.0, %v2429
    %v2431 = vpop.f32.mrf.mxu0
    %v2432 = vadd.f32 0.0, %v2431
    %2433 = vmatmul.bf16.gmra.mxu0 %v2396
    %v2434 = vpop.f32.mrf.mxu0
    %v2435 = vadd.f32 0.0, %v2434
    %v2436 = vpop.f32.mrf.mxu0
    %v2437 = vadd.f32 0.0, %v2436
    %2438 = vmatmul.bf16.gmra.mxu0 %v2399
    %v2439 = vpop.f32.mrf.mxu0
    %v2440 = vadd.f32 0.0, %v2439
    %v2441 = vpop.f32.mrf.mxu0
    %v2442 = vadd.f32 0.0, %v2441
    %2443 = vmatmul.bf16.gmra.mxu0 %v2402
    %v2444 = vpop.f32.mrf.mxu0
    %v2445 = vadd.f32 0.0, %v2444
    %v2446 = vpop.f32.mrf.mxu0
    %v2447 = vadd.f32 0.0, %v2446
    %2448 = vmatmul.bf16.gmra.mxu0 %v2405
    %v2449 = vpop.f32.mrf.mxu0
    %v2450 = vadd.f32 0.0, %v2449
    %v2451 = vpop.f32.mrf.mxu0
    %v2452 = vadd.f32 0.0, %v2451
    %2453 = vmatmul.bf16.gmra.mxu0 %v2408
    %v2454 = vpop.f32.mrf.mxu0
    %v2455 = vadd.f32 0.0, %v2454
    %v2456 = vpop.f32.mrf.mxu0
    %v2457 = vadd.f32 0.0, %v2456
    %2458 = vdwg.mxu0
    %v2463 = vunpack.c.l.b16 %v2358
    %v2464 = vunpack.c.l.b16 %v2359
    %v2465 = vunpack.c.l.b16 %v2360
    %v2466 = vunpack.c.l.b16 %v2361
    %v2467 = vpack.c.b16 %v2464, %v2463
    %v2468 = vpack.c.b16 %v2466, %v2465
    %v2472 = vsel %vm749, %v1517, 0
    %v2475 = vsel %vm749, %v1518, 0
    %v2478 = vsel %vm749, %v1519, 0
    %v2481 = vsel %vm749, %v1520, 0
    %v2484 = vsel %vm749, %v1521, 0
    %v2487 = vsel %vm749, %v1522, 0
    %v2490 = vsel %vm749, %v1523, 0
    %v2493 = vsel %vm749, %v1524, 0
    %2495 = vmatpush.bf16.msra.mxu0 0
    %2496 = vmatpush.bf16.msra.mxu0 0
    %2497 = vmatpush.bf16.msra.mxu0 0
    %2498 = vmatpush.bf16.msra.mxu0 0
    %2499 = vmatpush.bf16.msra.mxu0 0
    %2500 = vmatpush.bf16.msra.mxu0 0
    %2501 = vmatpush.bf16.msra.mxu0 %v2468
    %2502 = vmatpush.bf16.msra.mxu0 %v2467
    %2503 = vmatmul.bf16.gmra.mxu0 %v2472
    %v2504 = vpop.f32.mrf.mxu0
    %v2505 = vadd.f32 %v2420, %v2504
    %v2506 = vpop.f32.mrf.mxu0
    %v2507 = vadd.f32 %v2422, %v2506
    %2508 = vmatmul.bf16.gmra.mxu0 %v2475
    %v2509 = vpop.f32.mrf.mxu0
    %v2510 = vadd.f32 %v2425, %v2509
    %v2511 = vpop.f32.mrf.mxu0
    %v2512 = vadd.f32 %v2427, %v2511
    %2513 = vmatmul.bf16.gmra.mxu0 %v2478
    %v2514 = vpop.f32.mrf.mxu0
    %v2515 = vadd.f32 %v2430, %v2514
    %v2516 = vpop.f32.mrf.mxu0
    %v2517 = vadd.f32 %v2432, %v2516
    %2518 = vmatmul.bf16.gmra.mxu0 %v2481
    %v2519 = vpop.f32.mrf.mxu0
    %v2520 = vadd.f32 %v2435, %v2519
    %v2521 = vpop.f32.mrf.mxu0
    %v2522 = vadd.f32 %v2437, %v2521
    %2523 = vmatmul.bf16.gmra.mxu0 %v2484
    %v2524 = vpop.f32.mrf.mxu0
    %v2525 = vadd.f32 %v2440, %v2524
    %v2526 = vpop.f32.mrf.mxu0
    %v2527 = vadd.f32 %v2442, %v2526
    %2528 = vmatmul.bf16.gmra.mxu0 %v2487
    %v2529 = vpop.f32.mrf.mxu0
    %v2530 = vadd.f32 %v2445, %v2529
    %v2531 = vpop.f32.mrf.mxu0
    %v2532 = vadd.f32 %v2447, %v2531
    %2533 = vmatmul.bf16.gmra.mxu0 %v2490
    %v2534 = vpop.f32.mrf.mxu0
    %v2535 = vadd.f32 %v2450, %v2534
    %v2536 = vpop.f32.mrf.mxu0
    %v2537 = vadd.f32 %v2452, %v2536
    %2538 = vmatmul.bf16.gmra.mxu0 %v2493
    %v2539 = vpop.f32.mrf.mxu0
    %v2540 = vadd.f32 %v2455, %v2539
    %v2541 = vpop.f32.mrf.mxu0
    %v2542 = vadd.f32 %v2457, %v2541
    %2543 = vdwg.mxu0
    %v2544 = vld [vmem:[%s67] sm:$0x1]
    %v2546 = vperm.slane %v2544, 0
    %v2548 = vadd.f32 %v2505, %v2546
    %v2549 = vadd.f32 %v2507, %v2546
    %v2550 = vadd.f32 %v2510, %v2546
    %v2551 = vadd.f32 %v2512, %v2546
    %v2552 = vadd.f32 %v2515, %v2546
    %v2553 = vadd.f32 %v2517, %v2546
    %v2554 = vadd.f32 %v2520, %v2546
    %v2555 = vadd.f32 %v2522, %v2546
    %v2556 = vadd.f32 %v2525, %v2546
    %v2557 = vadd.f32 %v2527, %v2546
    %v2558 = vadd.f32 %v2530, %v2546
    %v2559 = vadd.f32 %v2532, %v2546
    %v2560 = vadd.f32 %v2535, %v2546
    %v2561 = vadd.f32 %v2537, %v2546
    %v2562 = vadd.f32 %v2540, %v2546
    %v2563 = vadd.f32 %v2542, %v2546
    %v2564 = vmax.f32 %v2548, 0.0
    %v2565 = vmax.f32 %v2549, 0.0
    %v2566 = vmax.f32 %v2550, 0.0
    %v2567 = vmax.f32 %v2551, 0.0
    %v2568 = vmax.f32 %v2552, 0.0
    %v2569 = vmax.f32 %v2553, 0.0
    %v2570 = vmax.f32 %v2554, 0.0
    %v2571 = vmax.f32 %v2555, 0.0
    %v2572 = vmax.f32 %v2556, 0.0
    %v2573 = vmax.f32 %v2557, 0.0
    %v2574 = vmax.f32 %v2558, 0.0
    %v2575 = vmax.f32 %v2559, 0.0
    %v2576 = vmax.f32 %v2560, 0.0
    %v2577 = vmax.f32 %v2561, 0.0
    %v2578 = vmax.f32 %v2562, 0.0
    %v2579 = vmax.f32 %v2563, 0.0
    %v2580 = vpack.c.bf16 %v2565, %v2564
    %v2581 = vpack.c.bf16 %v2567, %v2566
    %v2582 = vpack.c.bf16 %v2569, %v2568
    %v2583 = vpack.c.bf16 %v2571, %v2570
    %v2584 = vpack.c.bf16 %v2573, %v2572
    %v2585 = vpack.c.bf16 %v2575, %v2574
    %v2586 = vpack.c.bf16 %v2577, %v2576
    %v2587 = vpack.c.bf16 %v2579, %v2578
    %v2588 = vld [vmem:[%s69] sm:$0xf]
    %v2589 = vld [vmem:[%s69 + $0x4] sm:$0xf]
    %v2590 = vld [vmem:[%s69 + $0x8] sm:$0xf]
    %v2591 = vld [vmem:[%s69 + $0xc] sm:$0xf]
    %v2592 = vld [vmem:[%s71] sm:$0x1]
    %v2594 = vperm.slane %v2592, 0
    %v2600 = vunpack.c.l.b16 %v2588
    %v2601 = vunpack.c.l.b16 %v2589
    %v2602 = vunpack.c.l.b16 %v2590
    %v2603 = vunpack.c.l.b16 %v2591
    %v2604 = vpack.c.b16 %v2601, %v2600
    %v2605 = vpack.c.b16 %v2603, %v2602
    %v2609 = vsel %vm749, %v2580, 0
    %v2612 = vsel %vm749, %v2581, 0
    %v2615 = vsel %vm749, %v2582, 0
    %v2618 = vsel %vm749, %v2583, 0
    %v2621 = vsel %vm749, %v2584, 0
    %v2624 = vsel %vm749, %v2585, 0
    %v2627 = vsel %vm749, %v2586, 0
    %v2630 = vsel %vm749, %v2587, 0
    %2632 = vmatpush.bf16.msra.mxu0 0
    %2633 = vmatpush.bf16.msra.mxu0 0
    %2634 = vmatpush.bf16.msra.mxu0 0
    %2635 = vmatpush.bf16.msra.mxu0 0
    %2636 = vmatpush.bf16.msra.mxu0 0
    %2637 = vmatpush.bf16.msra.mxu0 0
    %2638 = vmatpush.bf16.msra.mxu0 %v2605
    %2639 = vmatpush.bf16.msra.mxu0 %v2604
    %2640 = vmatmul.bf16.gmra.mxu0 %v2609
    %v2641 = vpop.f32.mrf.mxu0
    %v2642 = vadd.f32 %v2594, %v2641
    %v2643 = vpop.f32.mrf.mxu0
    %v2644 = vadd.f32 %v2594, %v2643
    %2645 = vmatmul.bf16.gmra.mxu0 %v2612
    %v2646 = vpop.f32.mrf.mxu0
    %v2647 = vadd.f32 %v2594, %v2646
    %v2648 = vpop.f32.mrf.mxu0
    %v2649 = vadd.f32 %v2594, %v2648
    %2650 = vmatmul.bf16.gmra.mxu0 %v2615
    %v2651 = vpop.f32.mrf.mxu0
    %v2652 = vadd.f32 %v2594, %v2651
    %v2653 = vpop.f32.mrf.mxu0
    %v2654 = vadd.f32 %v2594, %v2653
    %2655 = vmatmul.bf16.gmra.mxu0 %v2618
    %v2656 = vpop.f32.mrf.mxu0
    %v2657 = vadd.f32 %v2594, %v2656
    %v2658 = vpop.f32.mrf.mxu0
    %v2659 = vadd.f32 %v2594, %v2658
    %2660 = vmatmul.bf16.gmra.mxu0 %v2621
    %v2661 = vpop.f32.mrf.mxu0
    %v2662 = vadd.f32 %v2594, %v2661
    %v2663 = vpop.f32.mrf.mxu0
    %v2664 = vadd.f32 %v2594, %v2663
    %2665 = vmatmul.bf16.gmra.mxu0 %v2624
    %v2666 = vpop.f32.mrf.mxu0
    %v2667 = vadd.f32 %v2594, %v2666
    %v2668 = vpop.f32.mrf.mxu0
    %v2669 = vadd.f32 %v2594, %v2668
    %2670 = vmatmul.bf16.gmra.mxu0 %v2627
    %v2671 = vpop.f32.mrf.mxu0
    %v2672 = vadd.f32 %v2594, %v2671
    %v2673 = vpop.f32.mrf.mxu0
    %v2674 = vadd.f32 %v2594, %v2673
    %2675 = vmatmul.bf16.gmra.mxu0 %v2630
    %v2676 = vpop.f32.mrf.mxu0
    %v2677 = vadd.f32 %v2594, %v2676
    %v2678 = vpop.f32.mrf.mxu0
    %v2679 = vadd.f32 %v2594, %v2678
    %2680 = vdwg.mxu0
    %v2681 = vmax.f32 %v2642, 0.0
    %v2682 = vmax.f32 %v2644, 0.0
    %v2683 = vmax.f32 %v2647, 0.0
    %v2684 = vmax.f32 %v2649, 0.0
    %v2685 = vmax.f32 %v2652, 0.0
    %v2686 = vmax.f32 %v2654, 0.0
    %v2687 = vmax.f32 %v2657, 0.0
    %v2688 = vmax.f32 %v2659, 0.0
    %v2689 = vmax.f32 %v2662, 0.0
    %v2690 = vmax.f32 %v2664, 0.0
    %v2691 = vmax.f32 %v2667, 0.0
    %v2692 = vmax.f32 %v2669, 0.0
    %v2693 = vmax.f32 %v2672, 0.0
    %v2694 = vmax.f32 %v2674, 0.0
    %v2695 = vmax.f32 %v2677, 0.0
    %v2696 = vmax.f32 %v2679, 0.0
    %v2697 = vpack.c.bf16 %v2682, %v2681
    %v2698 = vpack.c.bf16 %v2684, %v2683
    %v2699 = vpack.c.bf16 %v2686, %v2685
    %v2700 = vpack.c.bf16 %v2688, %v2687
    %v2701 = vpack.c.bf16 %v2690, %v2689
    %v2702 = vpack.c.bf16 %v2692, %v2691
    %v2703 = vpack.c.bf16 %v2694, %v2693
    %v2704 = vpack.c.bf16 %v2696, %v2695
    %v2705 = vld [vmem:[%s73] sm:$0xf]
    %v2706 = vld [vmem:[%s73 + $0x4] sm:$0xf]
    %v2707 = vld [vmem:[%s73 + $0x8] sm:$0xf]
    %v2708 = vld [vmem:[%s73 + $0xc] sm:$0xf]
    %v2709 = vld [vmem:[%s75] sm:$0x1]
    %v2711 = vperm.slane %v2709, 0
    %v2717 = vunpack.c.l.b16 %v2705
    %v2718 = vunpack.c.l.b16 %v2706
    %v2719 = vunpack.c.l.b16 %v2707
    %v2720 = vunpack.c.l.b16 %v2708
    %v2721 = vpack.c.b16 %v2718, %v2717
    %v2722 = vpack.c.b16 %v2720, %v2719
    %v2726 = vsel %vm749, %v2697, 0
    %v2729 = vsel %vm749, %v2698, 0
    %v2732 = vsel %vm749, %v2699, 0
    %v2735 = vsel %vm749, %v2700, 0
    %v2738 = vsel %vm749, %v2701, 0
    %v2741 = vsel %vm749, %v2702, 0
    %v2744 = vsel %vm749, %v2703, 0
    %v2747 = vsel %vm749, %v2704, 0
    %2749 = vmatpush.bf16.msra.mxu0 0
    %2750 = vmatpush.bf16.msra.mxu0 0
    %2751 = vmatpush.bf16.msra.mxu0 0
    %2752 = vmatpush.bf16.msra.mxu0 0
    %2753 = vmatpush.bf16.msra.mxu0 0
    %2754 = vmatpush.bf16.msra.mxu0 0
    %2755 = vmatpush.bf16.msra.mxu0 %v2722
    %2756 = vmatpush.bf16.msra.mxu0 %v2721
    %2757 = vmatmul.bf16.gmra.mxu0 %v2726
    %v2758 = vpop.f32.mrf.mxu0
    %v2759 = vadd.f32 %v2711, %v2758
    %v2760 = vpop.f32.mrf.mxu0
    %v2761 = vadd.f32 %v2711, %v2760
    %2762 = vmatmul.bf16.gmra.mxu0 %v2729
    %v2763 = vpop.f32.mrf.mxu0
    %v2764 = vadd.f32 %v2711, %v2763
    %v2765 = vpop.f32.mrf.mxu0
    %v2766 = vadd.f32 %v2711, %v2765
    %2767 = vmatmul.bf16.gmra.mxu0 %v2732
    %v2768 = vpop.f32.mrf.mxu0
    %v2769 = vadd.f32 %v2711, %v2768
    %v2770 = vpop.f32.mrf.mxu0
    %v2771 = vadd.f32 %v2711, %v2770
    %2772 = vmatmul.bf16.gmra.mxu0 %v2735
    %v2773 = vpop.f32.mrf.mxu0
    %v2774 = vadd.f32 %v2711, %v2773
    %v2775 = vpop.f32.mrf.mxu0
    %v2776 = vadd.f32 %v2711, %v2775
    %2777 = vmatmul.bf16.gmra.mxu0 %v2738
    %v2778 = vpop.f32.mrf.mxu0
    %v2779 = vadd.f32 %v2711, %v2778
    %v2780 = vpop.f32.mrf.mxu0
    %v2781 = vadd.f32 %v2711, %v2780
    %2782 = vmatmul.bf16.gmra.mxu0 %v2741
    %v2783 = vpop.f32.mrf.mxu0
    %v2784 = vadd.f32 %v2711, %v2783
    %v2785 = vpop.f32.mrf.mxu0
    %v2786 = vadd.f32 %v2711, %v2785
    %2787 = vmatmul.bf16.gmra.mxu0 %v2744
    %v2788 = vpop.f32.mrf.mxu0
    %v2789 = vadd.f32 %v2711, %v2788
    %v2790 = vpop.f32.mrf.mxu0
    %v2791 = vadd.f32 %v2711, %v2790
    %2792 = vmatmul.bf16.gmra.mxu0 %v2747
    %v2793 = vpop.f32.mrf.mxu0
    %v2794 = vadd.f32 %v2711, %v2793
    %v2795 = vpop.f32.mrf.mxu0
    %v2796 = vadd.f32 %v2711, %v2795
    %2797 = vdwg.mxu0
    %v2798 = vmax.f32 %v2759, 0.0
    %v2799 = vmax.f32 %v2761, 0.0
    %v2800 = vmax.f32 %v2764, 0.0
    %v2801 = vmax.f32 %v2766, 0.0
    %v2802 = vmax.f32 %v2769, 0.0
    %v2803 = vmax.f32 %v2771, 0.0
    %v2804 = vmax.f32 %v2774, 0.0
    %v2805 = vmax.f32 %v2776, 0.0
    %v2806 = vmax.f32 %v2779, 0.0
    %v2807 = vmax.f32 %v2781, 0.0
    %v2808 = vmax.f32 %v2784, 0.0
    %v2809 = vmax.f32 %v2786, 0.0
    %v2810 = vmax.f32 %v2789, 0.0
    %v2811 = vmax.f32 %v2791, 0.0
    %v2812 = vmax.f32 %v2794, 0.0
    %v2813 = vmax.f32 %v2796, 0.0
    %v2814 = vpack.c.bf16 %v2799, %v2798
    %v2815 = vpack.c.bf16 %v2801, %v2800
    %v2816 = vpack.c.bf16 %v2803, %v2802
    %v2817 = vpack.c.bf16 %v2805, %v2804
    %v2818 = vpack.c.bf16 %v2807, %v2806
    %v2819 = vpack.c.bf16 %v2809, %v2808
    %v2820 = vpack.c.bf16 %v2811, %v2810
    %v2821 = vpack.c.bf16 %v2813, %v2812
    %v2822 = vld [vmem:[%s77] sm:$0xf]
    %v2823 = vld [vmem:[%s77 + $0x4] sm:$0xf]
    %v2824 = vld [vmem:[%s77 + $0x8] sm:$0xf]
    %v2825 = vld [vmem:[%s77 + $0xc] sm:$0xf]
    %v2826 = vld [vmem:[#allocation2] sm:$0x1]
    %v2828 = vperm.slane %v2826, 0
    %v2834 = vunpack.c.l.b16 %v2822
    %v2835 = vunpack.c.l.b16 %v2823
    %v2836 = vunpack.c.l.b16 %v2824
    %v2837 = vunpack.c.l.b16 %v2825
    %v2838 = vpack.c.b16 %v2835, %v2834
    %v2839 = vpack.c.b16 %v2837, %v2836
    %v2843 = vsel %vm749, %v2814, 0
    %v2846 = vsel %vm749, %v2815, 0
    %v2849 = vsel %vm749, %v2816, 0
    %v2852 = vsel %vm749, %v2817, 0
    %v2855 = vsel %vm749, %v2818, 0
    %v2858 = vsel %vm749, %v2819, 0
    %v2861 = vsel %vm749, %v2820, 0
    %v2864 = vsel %vm749, %v2821, 0
    %2866 = vmatpush.bf16.msra.mxu0 0
    %2867 = vmatpush.bf16.msra.mxu0 0
    %2868 = vmatpush.bf16.msra.mxu0 0
    %2869 = vmatpush.bf16.msra.mxu0 0
    %2870 = vmatpush.bf16.msra.mxu0 0
    %2871 = vmatpush.bf16.msra.mxu0 0
    %2872 = vmatpush.bf16.msra.mxu0 %v2839
    %2873 = vmatpush.bf16.msra.mxu0 %v2838
    %2874 = vmatmul.bf16.gmra.mxu0 %v2843
    %v2875 = vpop.f32.mrf.mxu0
    %v2876 = vadd.f32 %v2828, %v2875
    %v2877 = vpop.f32.mrf.mxu0
    %v2878 = vadd.f32 %v2828, %v2877
    %2879 = vmatmul.bf16.gmra.mxu0 %v2846
    %v2880 = vpop.f32.mrf.mxu0
    %v2881 = vadd.f32 %v2828, %v2880
    %v2882 = vpop.f32.mrf.mxu0
    %v2883 = vadd.f32 %v2828, %v2882
    %2884 = vmatmul.bf16.gmra.mxu0 %v2849
    %v2885 = vpop.f32.mrf.mxu0
    %v2886 = vadd.f32 %v2828, %v2885
    %v2887 = vpop.f32.mrf.mxu0
    %v2888 = vadd.f32 %v2828, %v2887
    %2889 = vmatmul.bf16.gmra.mxu0 %v2852
    %v2890 = vpop.f32.mrf.mxu0
    %v2891 = vadd.f32 %v2828, %v2890
    %v2892 = vpop.f32.mrf.mxu0
    %v2893 = vadd.f32 %v2828, %v2892
    %2894 = vmatmul.bf16.gmra.mxu0 %v2855
    %v2895 = vpop.f32.mrf.mxu0
    %v2896 = vadd.f32 %v2828, %v2895
    %v2897 = vpop.f32.mrf.mxu0
    %v2898 = vadd.f32 %v2828, %v2897
    %2899 = vmatmul.bf16.gmra.mxu0 %v2858
    %v2900 = vpop.f32.mrf.mxu0
    %v2901 = vadd.f32 %v2828, %v2900
    %v2902 = vpop.f32.mrf.mxu0
    %v2903 = vadd.f32 %v2828, %v2902
    %2904 = vmatmul.bf16.gmra.mxu0 %v2861
    %v2905 = vpop.f32.mrf.mxu0
    %v2906 = vadd.f32 %v2828, %v2905
    %v2907 = vpop.f32.mrf.mxu0
    %v2908 = vadd.f32 %v2828, %v2907
    %2909 = vmatmul.bf16.gmra.mxu0 %v2864
    %v2910 = vpop.f32.mrf.mxu0
    %v2911 = vadd.f32 %v2828, %v2910
    %v2912 = vpop.f32.mrf.mxu0
    %v2913 = vadd.f32 %v2828, %v2912
    %2914 = vdwg.mxu0
    %v2915 = vadd.f32 %v2876, %v1018
    %v2916 = vadd.f32 %v2878, %v1020
    %v2917 = vadd.f32 %v2881, %v1023
    %v2918 = vadd.f32 %v2883, %v1025
    %v2919 = vadd.f32 %v2886, %v1028
    %v2920 = vadd.f32 %v2888, %v1030
    %v2921 = vadd.f32 %v2891, %v1033
    %v2922 = vadd.f32 %v2893, %v1035
    %v2923 = vadd.f32 %v2896, %v1038
    %v2924 = vadd.f32 %v2898, %v1040
    %v2925 = vadd.f32 %v2901, %v1043
    %v2926 = vadd.f32 %v2903, %v1045
    %v2927 = vadd.f32 %v2906, %v1048
    %v2928 = vadd.f32 %v2908, %v1050
    %v2929 = vadd.f32 %v2911, %v1053
    %v2930 = vadd.f32 %v2913, %v1055
    %v2931 = vpack.c.bf16 %v2916, %v2915
    %v2932 = vpack.c.bf16 %v2918, %v2917
    %v2933 = vpack.c.bf16 %v2920, %v2919
    %v2934 = vpack.c.bf16 %v2922, %v2921
    %v2935 = vpack.c.bf16 %v2924, %v2923
    %v2936 = vpack.c.bf16 %v2926, %v2925
    %v2937 = vpack.c.bf16 %v2928, %v2927
    %v2938 = vpack.c.bf16 %v2930, %v2929
    %2939 = vmatpush.bf16.msra.mxu0 %v2938
    %2940 = vmatpush.bf16.msra.mxu0 %v2937
    %2941 = vmatpush.bf16.msra.mxu0 %v2936
    %2942 = vmatpush.bf16.msra.mxu0 %v2935
    %2943 = vmatpush.bf16.msra.mxu0 %v2934
    %2944 = vmatpush.bf16.msra.mxu0 %v2933
    %2945 = vmatpush.bf16.msra.mxu0 %v2932
    %2946 = vmatpush.bf16.msra.mxu0 %v2931
    %2947 = vmatmul.bf16.gmra.mxu0 %v392
    %v2948 = vpop.f32.mrf.mxu0
    %v2949 = vadd.f32 0.0, %v2948
    %v2950 = vpop.f32.mrf.mxu0
    %v2951 = vadd.f32 0.0, %v2950
    %2952 = vmatmul.bf16.gmra.mxu0 %v393
    %v2953 = vpop.f32.mrf.mxu0
    %v2954 = vadd.f32 0.0, %v2953
    %v2955 = vpop.f32.mrf.mxu0
    %v2956 = vadd.f32 0.0, %v2955
    %2957 = vmatmul.bf16.gmra.mxu0 %v394
    %v2958 = vpop.f32.mrf.mxu0
    %v2959 = vadd.f32 0.0, %v2958
    %v2960 = vpop.f32.mrf.mxu0
    %v2961 = vadd.f32 0.0, %v2960
    %2962 = vmatmul.bf16.gmra.mxu0 %v395
    %v2963 = vpop.f32.mrf.mxu0
    %v2964 = vadd.f32 0.0, %v2963
    %v2965 = vpop.f32.mrf.mxu0
    %v2966 = vadd.f32 0.0, %v2965
    %2967 = vmatmul.bf16.gmra.mxu0 %v396
    %v2968 = vpop.f32.mrf.mxu0
    %v2969 = vadd.f32 0.0, %v2968
    %v2970 = vpop.f32.mrf.mxu0
    %v2971 = vadd.f32 0.0, %v2970
    %2972 = vmatmul.bf16.gmra.mxu0 %v397
    %v2973 = vpop.f32.mrf.mxu0
    %v2974 = vadd.f32 0.0, %v2973
    %v2975 = vpop.f32.mrf.mxu0
    %v2976 = vadd.f32 0.0, %v2975
    %2977 = vmatmul.bf16.gmra.mxu0 %v398
    %v2978 = vpop.f32.mrf.mxu0
    %v2979 = vadd.f32 0.0, %v2978
    %v2980 = vpop.f32.mrf.mxu0
    %v2981 = vadd.f32 0.0, %v2980
    %2982 = vmatmul.bf16.gmra.mxu0 %v399
    %v2983 = vpop.f32.mrf.mxu0
    %v2984 = vadd.f32 0.0, %v2983
    %v2985 = vpop.f32.mrf.mxu0
    %v2986 = vadd.f32 0.0, %v2985
    %2987 = vdwg.mxu0
    %2988 = vmatpush.bf16.msra.mxu0 %v2938
    %2989 = vmatpush.bf16.msra.mxu0 %v2937
    %2990 = vmatpush.bf16.msra.mxu0 %v2936
    %2991 = vmatpush.bf16.msra.mxu0 %v2935
    %2992 = vmatpush.bf16.msra.mxu0 %v2934
    %2993 = vmatpush.bf16.msra.mxu0 %v2933
    %2994 = vmatpush.bf16.msra.mxu0 %v2932
    %2995 = vmatpush.bf16.msra.mxu0 %v2931
    %2996 = vmatmul.bf16.gmra.mxu0 %v512
    %v2997 = vpop.f32.mrf.mxu0
    %v2998 = vadd.f32 0.0, %v2997
    %v2999 = vpop.f32.mrf.mxu0
    %v3000 = vadd.f32 0.0, %v2999
    %3001 = vmatmul.bf16.gmra.mxu0 %v513
    %v3002 = vpop.f32.mrf.mxu0
    %v3003 = vadd.f32 0.0, %v3002
    %v3004 = vpop.f32.mrf.mxu0
    %v3005 = vadd.f32 0.0, %v3004
    %3006 = vmatmul.bf16.gmra.mxu0 %v514
    %v3007 = vpop.f32.mrf.mxu0
    %v3008 = vadd.f32 0.0, %v3007
    %v3009 = vpop.f32.mrf.mxu0
    %v3010 = vadd.f32 0.0, %v3009
    %3011 = vmatmul.bf16.gmra.mxu0 %v515
    %v3012 = vpop.f32.mrf.mxu0
    %v3013 = vadd.f32 0.0, %v3012
    %v3014 = vpop.f32.mrf.mxu0
    %v3015 = vadd.f32 0.0, %v3014
    %3016 = vmatmul.bf16.gmra.mxu0 %v516
    %v3017 = vpop.f32.mrf.mxu0
    %v3018 = vadd.f32 0.0, %v3017
    %v3019 = vpop.f32.mrf.mxu0
    %v3020 = vadd.f32 0.0, %v3019
    %3021 = vmatmul.bf16.gmra.mxu0 %v517
    %v3022 = vpop.f32.mrf.mxu0
    %v3023 = vadd.f32 0.0, %v3022
    %v3024 = vpop.f32.mrf.mxu0
    %v3025 = vadd.f32 0.0, %v3024
    %3026 = vmatmul.bf16.gmra.mxu0 %v518
    %v3027 = vpop.f32.mrf.mxu0
    %v3028 = vadd.f32 0.0, %v3027
    %v3029 = vpop.f32.mrf.mxu0
    %v3030 = vadd.f32 0.0, %v3029
    %3031 = vmatmul.bf16.gmra.mxu0 %v519
    %v3032 = vpop.f32.mrf.mxu0
    %v3033 = vadd.f32 0.0, %v3032
    %v3034 = vpop.f32.mrf.mxu0
    %v3035 = vadd.f32 0.0, %v3034
    %3036 = vdwg.mxu0
    %v3037 = vpack.c.bf16 %v2951, %v2949
    %v3038 = vpack.c.bf16 %v2956, %v2954
    %v3039 = vpack.c.bf16 %v2961, %v2959
    %v3040 = vpack.c.bf16 %v2966, %v2964
    %v3041 = vpack.c.bf16 %v2971, %v2969
    %v3042 = vpack.c.bf16 %v2976, %v2974
    %v3043 = vpack.c.bf16 %v2981, %v2979
    %v3044 = vpack.c.bf16 %v2986, %v2984
    %v3045 = vpack.c.bf16 %v3000, %v2998
    %v3046 = vpack.c.bf16 %v3005, %v3003
    %v3047 = vpack.c.bf16 %v3010, %v3008
    %v3048 = vpack.c.bf16 %v3015, %v3013
    %v3049 = vpack.c.bf16 %v3020, %v3018
    %v3050 = vpack.c.bf16 %v3025, %v3023
    %v3051 = vpack.c.bf16 %v3030, %v3028
    %v3052 = vpack.c.bf16 %v3035, %v3033
    %v3054 = vsel %vm749, %v3045, 0
    %v3057 = vsel %vm749, %v3046, 0
    %v3060 = vsel %vm749, %v3047, 0
    %v3063 = vsel %vm749, %v3048, 0
    %v3066 = vsel %vm749, %v3049, 0
    %v3069 = vsel %vm749, %v3050, 0
    %v3072 = vsel %vm749, %v3051, 0
    %v3075 = vsel %vm749, %v3052, 0
    %3077 = vmatpush.bf16.msra.mxu0 0
    %3078 = vmatpush.bf16.msra.mxu0 0
    %3079 = vmatpush.bf16.msra.mxu0 0
    %3080 = vmatpush.bf16.msra.mxu0 0
    %3081 = vmatpush.bf16.msra.mxu0 0
    %3082 = vmatpush.bf16.msra.mxu0 0
    %3083 = vmatpush.bf16.msra.mxu0 %v1656
    %3084 = vmatpush.bf16.msra.mxu0 %v1655
    %3085 = vmatmul.bf16.gmra.mxu0 %v3054
    %v3086 = vpop.f32.mrf.mxu0
    %v3087 = vadd.f32 0.0, %v3086
    %v3088 = vpop.f32.mrf.mxu0
    %v3089 = vadd.f32 0.0, %v3088
    %3090 = vmatmul.bf16.gmra.mxu0 %v3057
    %v3091 = vpop.f32.mrf.mxu0
    %v3092 = vadd.f32 0.0, %v3091
    %v3093 = vpop.f32.mrf.mxu0
    %v3094 = vadd.f32 0.0, %v3093
    %3095 = vmatmul.bf16.gmra.mxu0 %v3060
    %v3096 = vpop.f32.mrf.mxu0
    %v3097 = vadd.f32 0.0, %v3096
    %v3098 = vpop.f32.mrf.mxu0
    %v3099 = vadd.f32 0.0, %v3098
    %3100 = vmatmul.bf16.gmra.mxu0 %v3063
    %v3101 = vpop.f32.mrf.mxu0
    %v3102 = vadd.f32 0.0, %v3101
    %v3103 = vpop.f32.mrf.mxu0
    %v3104 = vadd.f32 0.0, %v3103
    %3105 = vmatmul.bf16.gmra.mxu0 %v3066
    %v3106 = vpop.f32.mrf.mxu0
    %v3107 = vadd.f32 0.0, %v3106
    %v3108 = vpop.f32.mrf.mxu0
    %v3109 = vadd.f32 0.0, %v3108
    %3110 = vmatmul.bf16.gmra.mxu0 %v3069
    %v3111 = vpop.f32.mrf.mxu0
    %v3112 = vadd.f32 0.0, %v3111
    %v3113 = vpop.f32.mrf.mxu0
    %v3114 = vadd.f32 0.0, %v3113
    %3115 = vmatmul.bf16.gmra.mxu0 %v3072
    %v3116 = vpop.f32.mrf.mxu0
    %v3117 = vadd.f32 0.0, %v3116
    %v3118 = vpop.f32.mrf.mxu0
    %v3119 = vadd.f32 0.0, %v3118
    %3120 = vmatmul.bf16.gmra.mxu0 %v3075
    %v3121 = vpop.f32.mrf.mxu0
    %v3122 = vadd.f32 0.0, %v3121
    %v3123 = vpop.f32.mrf.mxu0
    %v3124 = vadd.f32 0.0, %v3123
    %3125 = vdwg.mxu0
    %v3127 = vsel %vm749, %v3037, 0
    %v3130 = vsel %vm749, %v3038, 0
    %v3133 = vsel %vm749, %v3039, 0
    %v3136 = vsel %vm749, %v3040, 0
    %v3139 = vsel %vm749, %v3041, 0
    %v3142 = vsel %vm749, %v3042, 0
    %v3145 = vsel %vm749, %v3043, 0
    %v3148 = vsel %vm749, %v3044, 0
    %3150 = vmatpush.bf16.msra.mxu0 0
    %3151 = vmatpush.bf16.msra.mxu0 0
    %3152 = vmatpush.bf16.msra.mxu0 0
    %3153 = vmatpush.bf16.msra.mxu0 0
    %3154 = vmatpush.bf16.msra.mxu0 0
    %3155 = vmatpush.bf16.msra.mxu0 0
    %3156 = vmatpush.bf16.msra.mxu0 %v1741
    %3157 = vmatpush.bf16.msra.mxu0 %v1740
    %3158 = vmatmul.bf16.gmra.mxu0 %v3127
    %v3159 = vpop.f32.mrf.mxu0
    %v3160 = vadd.f32 %v3087, %v3159
    %v3161 = vpop.f32.mrf.mxu0
    %v3162 = vadd.f32 %v3089, %v3161
    %3163 = vmatmul.bf16.gmra.mxu0 %v3130
    %v3164 = vpop.f32.mrf.mxu0
    %v3165 = vadd.f32 %v3092, %v3164
    %v3166 = vpop.f32.mrf.mxu0
    %v3167 = vadd.f32 %v3094, %v3166
    %3168 = vmatmul.bf16.gmra.mxu0 %v3133
    %v3169 = vpop.f32.mrf.mxu0
    %v3170 = vadd.f32 %v3097, %v3169
    %v3171 = vpop.f32.mrf.mxu0
    %v3172 = vadd.f32 %v3099, %v3171
    %3173 = vmatmul.bf16.gmra.mxu0 %v3136
    %v3174 = vpop.f32.mrf.mxu0
    %v3175 = vadd.f32 %v3102, %v3174
    %v3176 = vpop.f32.mrf.mxu0
    %v3177 = vadd.f32 %v3104, %v3176
    %3178 = vmatmul.bf16.gmra.mxu0 %v3139
    %v3179 = vpop.f32.mrf.mxu0
    %v3180 = vadd.f32 %v3107, %v3179
    %v3181 = vpop.f32.mrf.mxu0
    %v3182 = vadd.f32 %v3109, %v3181
    %3183 = vmatmul.bf16.gmra.mxu0 %v3142
    %v3184 = vpop.f32.mrf.mxu0
    %v3185 = vadd.f32 %v3112, %v3184
    %v3186 = vpop.f32.mrf.mxu0
    %v3187 = vadd.f32 %v3114, %v3186
    %3188 = vmatmul.bf16.gmra.mxu0 %v3145
    %v3189 = vpop.f32.mrf.mxu0
    %v3190 = vadd.f32 %v3117, %v3189
    %v3191 = vpop.f32.mrf.mxu0
    %v3192 = vadd.f32 %v3119, %v3191
    %3193 = vmatmul.bf16.gmra.mxu0 %v3148
    %v3194 = vpop.f32.mrf.mxu0
    %v3195 = vadd.f32 %v3122, %v3194
    %v3196 = vpop.f32.mrf.mxu0
    %v3197 = vadd.f32 %v3124, %v3196
    %3198 = vdwg.mxu0
    %v3200 = vsel %vm749, %v2301, 0
    %v3203 = vsel %vm749, %v2302, 0
    %v3206 = vsel %vm749, %v2303, 0
    %v3209 = vsel %vm749, %v2304, 0
    %v3212 = vsel %vm749, %v2305, 0
    %v3215 = vsel %vm749, %v2306, 0
    %v3218 = vsel %vm749, %v2307, 0
    %v3221 = vsel %vm749, %v2308, 0
    %3223 = vmatpush.bf16.msra.mxu0 0
    %3224 = vmatpush.bf16.msra.mxu0 0
    %3225 = vmatpush.bf16.msra.mxu0 0
    %3226 = vmatpush.bf16.msra.mxu0 0
    %3227 = vmatpush.bf16.msra.mxu0 0
    %3228 = vmatpush.bf16.msra.mxu0 0
    %3229 = vmatpush.bf16.msra.mxu0 %v1838
    %3230 = vmatpush.bf16.msra.mxu0 %v1837
    %3231 = vmatmul.bf16.gmra.mxu0 %v3200
    %v3232 = vpop.f32.mrf.mxu0
    %v3233 = vadd.f32 0.0, %v3232
    %v3234 = vpop.f32.mrf.mxu0
    %v3235 = vadd.f32 0.0, %v3234
    %3236 = vmatmul.bf16.gmra.mxu0 %v3203
    %v3237 = vpop.f32.mrf.mxu0
    %v3238 = vadd.f32 0.0, %v3237
    %v3239 = vpop.f32.mrf.mxu0
    %v3240 = vadd.f32 0.0, %v3239
    %3241 = vmatmul.bf16.gmra.mxu0 %v3206
    %v3242 = vpop.f32.mrf.mxu0
    %v3243 = vadd.f32 0.0, %v3242
    %v3244 = vpop.f32.mrf.mxu0
    %v3245 = vadd.f32 0.0, %v3244
    %3246 = vmatmul.bf16.gmra.mxu0 %v3209
    %v3247 = vpop.f32.mrf.mxu0
    %v3248 = vadd.f32 0.0, %v3247
    %v3249 = vpop.f32.mrf.mxu0
    %v3250 = vadd.f32 0.0, %v3249
    %3251 = vmatmul.bf16.gmra.mxu0 %v3212
    %v3252 = vpop.f32.mrf.mxu0
    %v3253 = vadd.f32 0.0, %v3252
    %v3254 = vpop.f32.mrf.mxu0
    %v3255 = vadd.f32 0.0, %v3254
    %3256 = vmatmul.bf16.gmra.mxu0 %v3215
    %v3257 = vpop.f32.mrf.mxu0
    %v3258 = vadd.f32 0.0, %v3257
    %v3259 = vpop.f32.mrf.mxu0
    %v3260 = vadd.f32 0.0, %v3259
    %3261 = vmatmul.bf16.gmra.mxu0 %v3218
    %v3262 = vpop.f32.mrf.mxu0
    %v3263 = vadd.f32 0.0, %v3262
    %v3264 = vpop.f32.mrf.mxu0
    %v3265 = vadd.f32 0.0, %v3264
    %3266 = vmatmul.bf16.gmra.mxu0 %v3221
    %v3267 = vpop.f32.mrf.mxu0
    %v3268 = vadd.f32 0.0, %v3267
    %v3269 = vpop.f32.mrf.mxu0
    %v3270 = vadd.f32 0.0, %v3269
    %3271 = vdwg.mxu0
    %v3272 = vadd.f32 %v3160, %v3233
    %v3273 = vadd.f32 %v3162, %v3235
    %v3274 = vadd.f32 %v3165, %v3238
    %v3275 = vadd.f32 %v3167, %v3240
    %v3276 = vadd.f32 %v3170, %v3243
    %v3277 = vadd.f32 %v3172, %v3245
    %v3278 = vadd.f32 %v3175, %v3248
    %v3279 = vadd.f32 %v3177, %v3250
    %v3280 = vadd.f32 %v3180, %v3253
    %v3281 = vadd.f32 %v3182, %v3255
    %v3282 = vadd.f32 %v3185, %v3258
    %v3283 = vadd.f32 %v3187, %v3260
    %v3284 = vadd.f32 %v3190, %v3263
    %v3285 = vadd.f32 %v3192, %v3265
    %v3286 = vadd.f32 %v3195, %v3268
    %v3287 = vadd.f32 %v3197, %v3270
    %v3288 = vadd.f32 %v3272, %v1932
    %v3289 = vadd.f32 %v3273, %v1932
    %v3290 = vadd.f32 %v3274, %v1932
    %v3291 = vadd.f32 %v3275, %v1932
    %v3292 = vadd.f32 %v3276, %v1932
    %v3293 = vadd.f32 %v3277, %v1932
    %v3294 = vadd.f32 %v3278, %v1932
    %v3295 = vadd.f32 %v3279, %v1932
    %v3296 = vadd.f32 %v3280, %v1932
    %v3297 = vadd.f32 %v3281, %v1932
    %v3298 = vadd.f32 %v3282, %v1932
    %v3299 = vadd.f32 %v3283, %v1932
    %v3300 = vadd.f32 %v3284, %v1932
    %v3301 = vadd.f32 %v3285, %v1932
    %v3302 = vadd.f32 %v3286, %v1932
    %v3303 = vadd.f32 %v3287, %v1932
    %v3304 = vmax.f32 %v3288, 0.0
    %v3305 = vmax.f32 %v3289, 0.0
    %v3306 = vmax.f32 %v3290, 0.0
    %v3307 = vmax.f32 %v3291, 0.0
    %v3308 = vmax.f32 %v3292, 0.0
    %v3309 = vmax.f32 %v3293, 0.0
    %v3310 = vmax.f32 %v3294, 0.0
    %v3311 = vmax.f32 %v3295, 0.0
    %v3312 = vmax.f32 %v3296, 0.0
    %v3313 = vmax.f32 %v3297, 0.0
    %v3314 = vmax.f32 %v3298, 0.0
    %v3315 = vmax.f32 %v3299, 0.0
    %v3316 = vmax.f32 %v3300, 0.0
    %v3317 = vmax.f32 %v3301, 0.0
    %v3318 = vmax.f32 %v3302, 0.0
    %v3319 = vmax.f32 %v3303, 0.0
    %v3320 = vpack.c.bf16 %v3305, %v3304
    %v3321 = vpack.c.bf16 %v3307, %v3306
    %v3322 = vpack.c.bf16 %v3309, %v3308
    %v3323 = vpack.c.bf16 %v3311, %v3310
    %v3324 = vpack.c.bf16 %v3313, %v3312
    %v3325 = vpack.c.bf16 %v3315, %v3314
    %v3326 = vpack.c.bf16 %v3317, %v3316
    %v3327 = vpack.c.bf16 %v3319, %v3318
    %v3329 = vsel %vm749, %v3320, 0
    %v3332 = vsel %vm749, %v3321, 0
    %v3335 = vsel %vm749, %v3322, 0
    %v3338 = vsel %vm749, %v3323, 0
    %v3341 = vsel %vm749, %v3324, 0
    %v3344 = vsel %vm749, %v3325, 0
    %v3347 = vsel %vm749, %v3326, 0
    %v3350 = vsel %vm749, %v3327, 0
    %3352 = vmatpush.bf16.msra.mxu0 0
    %3353 = vmatpush.bf16.msra.mxu0 0
    %3354 = vmatpush.bf16.msra.mxu0 0
    %3355 = vmatpush.bf16.msra.mxu0 0
    %3356 = vmatpush.bf16.msra.mxu0 0
    %3357 = vmatpush.bf16.msra.mxu0 0
    %3358 = vmatpush.bf16.msra.mxu0 %v1991
    %3359 = vmatpush.bf16.msra.mxu0 %v1990
    %3360 = vmatmul.bf16.gmra.mxu0 %v3329
    %v3361 = vpop.f32.mrf.mxu0
    %v3362 = vadd.f32 %v1980, %v3361
    %v3363 = vpop.f32.mrf.mxu0
    %v3364 = vadd.f32 %v1980, %v3363
    %3365 = vmatmul.bf16.gmra.mxu0 %v3332
    %v3366 = vpop.f32.mrf.mxu0
    %v3367 = vadd.f32 %v1980, %v3366
    %v3368 = vpop.f32.mrf.mxu0
    %v3369 = vadd.f32 %v1980, %v3368
    %3370 = vmatmul.bf16.gmra.mxu0 %v3335
    %v3371 = vpop.f32.mrf.mxu0
    %v3372 = vadd.f32 %v1980, %v3371
    %v3373 = vpop.f32.mrf.mxu0
    %v3374 = vadd.f32 %v1980, %v3373
    %3375 = vmatmul.bf16.gmra.mxu0 %v3338
    %v3376 = vpop.f32.mrf.mxu0
    %v3377 = vadd.f32 %v1980, %v3376
    %v3378 = vpop.f32.mrf.mxu0
    %v3379 = vadd.f32 %v1980, %v3378
    %3380 = vmatmul.bf16.gmra.mxu0 %v3341
    %v3381 = vpop.f32.mrf.mxu0
    %v3382 = vadd.f32 %v1980, %v3381
    %v3383 = vpop.f32.mrf.mxu0
    %v3384 = vadd.f32 %v1980, %v3383
    %3385 = vmatmul.bf16.gmra.mxu0 %v3344
    %v3386 = vpop.f32.mrf.mxu0
    %v3387 = vadd.f32 %v1980, %v3386
    %v3388 = vpop.f32.mrf.mxu0
    %v3389 = vadd.f32 %v1980, %v3388
    %3390 = vmatmul.bf16.gmra.mxu0 %v3347
    %v3391 = vpop.f32.mrf.mxu0
    %v3392 = vadd.f32 %v1980, %v3391
    %v3393 = vpop.f32.mrf.mxu0
    %v3394 = vadd.f32 %v1980, %v3393
    %3395 = vmatmul.bf16.gmra.mxu0 %v3350
    %v3396 = vpop.f32.mrf.mxu0
    %v3397 = vadd.f32 %v1980, %v3396
    %v3398 = vpop.f32.mrf.mxu0
    %v3399 = vadd.f32 %v1980, %v3398
    %3400 = vdwg.mxu0
    %v3401 = vmax.f32 %v3362, 0.0
    %v3402 = vmax.f32 %v3364, 0.0
    %v3403 = vmax.f32 %v3367, 0.0
    %v3404 = vmax.f32 %v3369, 0.0
    %v3405 = vmax.f32 %v3372, 0.0
    %v3406 = vmax.f32 %v3374, 0.0
    %v3407 = vmax.f32 %v3377, 0.0
    %v3408 = vmax.f32 %v3379, 0.0
    %v3409 = vmax.f32 %v3382, 0.0
    %v3410 = vmax.f32 %v3384, 0.0
    %v3411 = vmax.f32 %v3387, 0.0
    %v3412 = vmax.f32 %v3389, 0.0
    %v3413 = vmax.f32 %v3392, 0.0
    %v3414 = vmax.f32 %v3394, 0.0
    %v3415 = vmax.f32 %v3397, 0.0
    %v3416 = vmax.f32 %v3399, 0.0
    %v3417 = vpack.c.bf16 %v3402, %v3401
    %v3418 = vpack.c.bf16 %v3404, %v3403
    %v3419 = vpack.c.bf16 %v3406, %v3405
    %v3420 = vpack.c.bf16 %v3408, %v3407
    %v3421 = vpack.c.bf16 %v3410, %v3409
    %v3422 = vpack.c.bf16 %v3412, %v3411
    %v3423 = vpack.c.bf16 %v3414, %v3413
    %v3424 = vpack.c.bf16 %v3416, %v3415
    %v3426 = vsel %vm749, %v3417, 0
    %v3429 = vsel %vm749, %v3418, 0
    %v3432 = vsel %vm749, %v3419, 0
    %v3435 = vsel %vm749, %v3420, 0
    %v3438 = vsel %vm749, %v3421, 0
    %v3441 = vsel %vm749, %v3422, 0
    %v3444 = vsel %vm749, %v3423, 0
    %v3447 = vsel %vm749, %v3424, 0
    %3449 = vmatpush.bf16.msra.mxu0 0
    %3450 = vmatpush.bf16.msra.mxu0 0
    %3451 = vmatpush.bf16.msra.mxu0 0
    %3452 = vmatpush.bf16.msra.mxu0 0
    %3453 = vmatpush.bf16.msra.mxu0 0
    %3454 = vmatpush.bf16.msra.mxu0 0
    %3455 = vmatpush.bf16.msra.mxu0 %v2108
    %3456 = vmatpush.bf16.msra.mxu0 %v2107
    %3457 = vmatmul.bf16.gmra.mxu0 %v3426
    %v3458 = vpop.f32.mrf.mxu0
    %v3459 = vadd.f32 %v2097, %v3458
    %v3460 = vpop.f32.mrf.mxu0
    %v3461 = vadd.f32 %v2097, %v3460
    %3462 = vmatmul.bf16.gmra.mxu0 %v3429
    %v3463 = vpop.f32.mrf.mxu0
    %v3464 = vadd.f32 %v2097, %v3463
    %v3465 = vpop.f32.mrf.mxu0
    %v3466 = vadd.f32 %v2097, %v3465
    %3467 = vmatmul.bf16.gmra.mxu0 %v3432
    %v3468 = vpop.f32.mrf.mxu0
    %v3469 = vadd.f32 %v2097, %v3468
    %v3470 = vpop.f32.mrf.mxu0
    %v3471 = vadd.f32 %v2097, %v3470
    %3472 = vmatmul.bf16.gmra.mxu0 %v3435
    %v3473 = vpop.f32.mrf.mxu0
    %v3474 = vadd.f32 %v2097, %v3473
    %v3475 = vpop.f32.mrf.mxu0
    %v3476 = vadd.f32 %v2097, %v3475
    %3477 = vmatmul.bf16.gmra.mxu0 %v3438
    %v3478 = vpop.f32.mrf.mxu0
    %v3479 = vadd.f32 %v2097, %v3478
    %v3480 = vpop.f32.mrf.mxu0
    %v3481 = vadd.f32 %v2097, %v3480
    %3482 = vmatmul.bf16.gmra.mxu0 %v3441
    %v3483 = vpop.f32.mrf.mxu0
    %v3484 = vadd.f32 %v2097, %v3483
    %v3485 = vpop.f32.mrf.mxu0
    %v3486 = vadd.f32 %v2097, %v3485
    %3487 = vmatmul.bf16.gmra.mxu0 %v3444
    %v3488 = vpop.f32.mrf.mxu0
    %v3489 = vadd.f32 %v2097, %v3488
    %v3490 = vpop.f32.mrf.mxu0
    %v3491 = vadd.f32 %v2097, %v3490
    %3492 = vmatmul.bf16.gmra.mxu0 %v3447
    %v3493 = vpop.f32.mrf.mxu0
    %v3494 = vadd.f32 %v2097, %v3493
    %v3495 = vpop.f32.mrf.mxu0
    %v3496 = vadd.f32 %v2097, %v3495
    %3497 = vdwg.mxu0
    %v3498 = vmax.f32 %v3459, 0.0
    %v3499 = vmax.f32 %v3461, 0.0
    %v3500 = vmax.f32 %v3464, 0.0
    %v3501 = vmax.f32 %v3466, 0.0
    %v3502 = vmax.f32 %v3469, 0.0
    %v3503 = vmax.f32 %v3471, 0.0
    %v3504 = vmax.f32 %v3474, 0.0
    %v3505 = vmax.f32 %v3476, 0.0
    %v3506 = vmax.f32 %v3479, 0.0
    %v3507 = vmax.f32 %v3481, 0.0
    %v3508 = vmax.f32 %v3484, 0.0
    %v3509 = vmax.f32 %v3486, 0.0
    %v3510 = vmax.f32 %v3489, 0.0
    %v3511 = vmax.f32 %v3491, 0.0
    %v3512 = vmax.f32 %v3494, 0.0
    %v3513 = vmax.f32 %v3496, 0.0
    %v3514 = vpack.c.bf16 %v3499, %v3498
    %v3515 = vpack.c.bf16 %v3501, %v3500
    %v3516 = vpack.c.bf16 %v3503, %v3502
    %v3517 = vpack.c.bf16 %v3505, %v3504
    %v3518 = vpack.c.bf16 %v3507, %v3506
    %v3519 = vpack.c.bf16 %v3509, %v3508
    %v3520 = vpack.c.bf16 %v3511, %v3510
    %v3521 = vpack.c.bf16 %v3513, %v3512
    %v3523 = vsel %vm749, %v3514, 0
    %v3526 = vsel %vm749, %v3515, 0
    %v3529 = vsel %vm749, %v3516, 0
    %v3532 = vsel %vm749, %v3517, 0
    %v3535 = vsel %vm749, %v3518, 0
    %v3538 = vsel %vm749, %v3519, 0
    %v3541 = vsel %vm749, %v3520, 0
    %v3544 = vsel %vm749, %v3521, 0
    %3546 = vmatpush.bf16.msra.mxu0 0
    %3547 = vmatpush.bf16.msra.mxu0 0
    %3548 = vmatpush.bf16.msra.mxu0 0
    %3549 = vmatpush.bf16.msra.mxu0 0
    %3550 = vmatpush.bf16.msra.mxu0 0
    %3551 = vmatpush.bf16.msra.mxu0 0
    %3552 = vmatpush.bf16.msra.mxu0 %v2225
    %3553 = vmatpush.bf16.msra.mxu0 %v2224
    %3554 = vmatmul.bf16.gmra.mxu0 %v3523
    %v3555 = vpop.f32.mrf.mxu0
    %v3556 = vadd.f32 %v2214, %v3555
    %v3557 = vpop.f32.mrf.mxu0
    %v3558 = vadd.f32 %v2214, %v3557
    %3559 = vmatmul.bf16.gmra.mxu0 %v3526
    %v3560 = vpop.f32.mrf.mxu0
    %v3561 = vadd.f32 %v2214, %v3560
    %v3562 = vpop.f32.mrf.mxu0
    %v3563 = vadd.f32 %v2214, %v3562
    %3564 = vmatmul.bf16.gmra.mxu0 %v3529
    %v3565 = vpop.f32.mrf.mxu0
    %v3566 = vadd.f32 %v2214, %v3565
    %v3567 = vpop.f32.mrf.mxu0
    %v3568 = vadd.f32 %v2214, %v3567
    %3569 = vmatmul.bf16.gmra.mxu0 %v3532
    %v3570 = vpop.f32.mrf.mxu0
    %v3571 = vadd.f32 %v2214, %v3570
    %v3572 = vpop.f32.mrf.mxu0
    %v3573 = vadd.f32 %v2214, %v3572
    %3574 = vmatmul.bf16.gmra.mxu0 %v3535
    %v3575 = vpop.f32.mrf.mxu0
    %v3576 = vadd.f32 %v2214, %v3575
    %v3577 = vpop.f32.mrf.mxu0
    %v3578 = vadd.f32 %v2214, %v3577
    %3579 = vmatmul.bf16.gmra.mxu0 %v3538
    %v3580 = vpop.f32.mrf.mxu0
    %v3581 = vadd.f32 %v2214, %v3580
    %v3582 = vpop.f32.mrf.mxu0
    %v3583 = vadd.f32 %v2214, %v3582
    %3584 = vmatmul.bf16.gmra.mxu0 %v3541
    %v3585 = vpop.f32.mrf.mxu0
    %v3586 = vadd.f32 %v2214, %v3585
    %v3587 = vpop.f32.mrf.mxu0
    %v3588 = vadd.f32 %v2214, %v3587
    %3589 = vmatmul.bf16.gmra.mxu0 %v3544
    %v3590 = vpop.f32.mrf.mxu0
    %v3591 = vadd.f32 %v2214, %v3590
    %v3592 = vpop.f32.mrf.mxu0
    %v3593 = vadd.f32 %v2214, %v3592
    %3594 = vdwg.mxu0
    %v3595 = vpack.c.bf16 %v3558, %v3556
    %v3596 = vpack.c.bf16 %v3563, %v3561
    %v3597 = vpack.c.bf16 %v3568, %v3566
    %v3598 = vpack.c.bf16 %v3573, %v3571
    %v3599 = vpack.c.bf16 %v3578, %v3576
    %v3600 = vpack.c.bf16 %v3583, %v3581
    %v3601 = vpack.c.bf16 %v3588, %v3586
    %v3602 = vpack.c.bf16 %v3593, %v3591
    %3603 = vmatpush.bf16.msra.mxu0 %v3602
    %3604 = vmatpush.bf16.msra.mxu0 %v3601
    %3605 = vmatpush.bf16.msra.mxu0 %v3600
    %3606 = vmatpush.bf16.msra.mxu0 %v3599
    %3607 = vmatpush.bf16.msra.mxu0 %v3598
    %3608 = vmatpush.bf16.msra.mxu0 %v3597
    %3609 = vmatpush.bf16.msra.mxu0 %v3596
    %3610 = vmatpush.bf16.msra.mxu0 %v3595
    %3611 = vmatmul.bf16.gmra.mxu0 %v587
    %v3612 = vpop.f32.mrf.mxu0
    %v3613 = vadd.f32 0.0, %v3612
    %v3614 = vpop.f32.mrf.mxu0
    %v3615 = vadd.f32 0.0, %v3614
    %3616 = vmatmul.bf16.gmra.mxu0 %v588
    %v3617 = vpop.f32.mrf.mxu0
    %v3618 = vadd.f32 0.0, %v3617
    %v3619 = vpop.f32.mrf.mxu0
    %v3620 = vadd.f32 0.0, %v3619
    %3621 = vmatmul.bf16.gmra.mxu0 %v589
    %v3622 = vpop.f32.mrf.mxu0
    %v3623 = vadd.f32 0.0, %v3622
    %v3624 = vpop.f32.mrf.mxu0
    %v3625 = vadd.f32 0.0, %v3624
    %3626 = vmatmul.bf16.gmra.mxu0 %v590
    %v3627 = vpop.f32.mrf.mxu0
    %v3628 = vadd.f32 0.0, %v3627
    %v3629 = vpop.f32.mrf.mxu0
    %v3630 = vadd.f32 0.0, %v3629
    %3631 = vmatmul.bf16.gmra.mxu0 %v591
    %v3632 = vpop.f32.mrf.mxu0
    %v3633 = vadd.f32 0.0, %v3632
    %v3634 = vpop.f32.mrf.mxu0
    %v3635 = vadd.f32 0.0, %v3634
    %3636 = vmatmul.bf16.gmra.mxu0 %v592
    %v3637 = vpop.f32.mrf.mxu0
    %v3638 = vadd.f32 0.0, %v3637
    %v3639 = vpop.f32.mrf.mxu0
    %v3640 = vadd.f32 0.0, %v3639
    %3641 = vmatmul.bf16.gmra.mxu0 %v593
    %v3642 = vpop.f32.mrf.mxu0
    %v3643 = vadd.f32 0.0, %v3642
    %v3644 = vpop.f32.mrf.mxu0
    %v3645 = vadd.f32 0.0, %v3644
    %3646 = vmatmul.bf16.gmra.mxu0 %v594
    %v3647 = vpop.f32.mrf.mxu0
    %v3648 = vadd.f32 0.0, %v3647
    %v3649 = vpop.f32.mrf.mxu0
    %v3650 = vadd.f32 0.0, %v3649
    %3651 = vdwg.mxu0
    %v3652 = vpack.c.bf16 %v3615, %v3613
    %v3653 = vpack.c.bf16 %v3620, %v3618
    %v3654 = vpack.c.bf16 %v3625, %v3623
    %v3655 = vpack.c.bf16 %v3630, %v3628
    %v3656 = vpack.c.bf16 %v3635, %v3633
    %v3657 = vpack.c.bf16 %v3640, %v3638
    %v3658 = vpack.c.bf16 %v3645, %v3643
    %v3659 = vpack.c.bf16 %v3650, %v3648
    %v3661 = vsel %vm749, %v3652, 0
    %v3664 = vsel %vm749, %v3653, 0
    %v3667 = vsel %vm749, %v3654, 0
    %v3670 = vsel %vm749, %v3655, 0
    %v3673 = vsel %vm749, %v3656, 0
    %v3676 = vsel %vm749, %v3657, 0
    %v3679 = vsel %vm749, %v3658, 0
    %v3682 = vsel %vm749, %v3659, 0
    %3684 = vmatpush.bf16.msra.mxu0 0
    %3685 = vmatpush.bf16.msra.mxu0 0
    %3686 = vmatpush.bf16.msra.mxu0 0
    %3687 = vmatpush.bf16.msra.mxu0 0
    %3688 = vmatpush.bf16.msra.mxu0 0
    %3689 = vmatpush.bf16.msra.mxu0 0
    %3690 = vmatpush.bf16.msra.mxu0 %v2383
    %3691 = vmatpush.bf16.msra.mxu0 %v2382
    %3692 = vmatmul.bf16.gmra.mxu0 %v3661
    %v3693 = vpop.f32.mrf.mxu0
    %v3694 = vadd.f32 0.0, %v3693
    %v3695 = vpop.f32.mrf.mxu0
    %v3696 = vadd.f32 0.0, %v3695
    %3697 = vmatmul.bf16.gmra.mxu0 %v3664
    %v3698 = vpop.f32.mrf.mxu0
    %v3699 = vadd.f32 0.0, %v3698
    %v3700 = vpop.f32.mrf.mxu0
    %v3701 = vadd.f32 0.0, %v3700
    %3702 = vmatmul.bf16.gmra.mxu0 %v3667
    %v3703 = vpop.f32.mrf.mxu0
    %v3704 = vadd.f32 0.0, %v3703
    %v3705 = vpop.f32.mrf.mxu0
    %v3706 = vadd.f32 0.0, %v3705
    %3707 = vmatmul.bf16.gmra.mxu0 %v3670
    %v3708 = vpop.f32.mrf.mxu0
    %v3709 = vadd.f32 0.0, %v3708
    %v3710 = vpop.f32.mrf.mxu0
    %v3711 = vadd.f32 0.0, %v3710
    %3712 = vmatmul.bf16.gmra.mxu0 %v3673
    %v3713 = vpop.f32.mrf.mxu0
    %v3714 = vadd.f32 0.0, %v3713
    %v3715 = vpop.f32.mrf.mxu0
    %v3716 = vadd.f32 0.0, %v3715
    %3717 = vmatmul.bf16.gmra.mxu0 %v3676
    %v3718 = vpop.f32.mrf.mxu0
    %v3719 = vadd.f32 0.0, %v3718
    %v3720 = vpop.f32.mrf.mxu0
    %v3721 = vadd.f32 0.0, %v3720
    %3722 = vmatmul.bf16.gmra.mxu0 %v3679
    %v3723 = vpop.f32.mrf.mxu0
    %v3724 = vadd.f32 0.0, %v3723
    %v3725 = vpop.f32.mrf.mxu0
    %v3726 = vadd.f32 0.0, %v3725
    %3727 = vmatmul.bf16.gmra.mxu0 %v3682
    %v3728 = vpop.f32.mrf.mxu0
    %v3729 = vadd.f32 0.0, %v3728
    %v3730 = vpop.f32.mrf.mxu0
    %v3731 = vadd.f32 0.0, %v3730
    %3732 = vdwg.mxu0
    %v3734 = vsel %vm749, %v2931, 0
    %v3737 = vsel %vm749, %v2932, 0
    %v3740 = vsel %vm749, %v2933, 0
    %v3743 = vsel %vm749, %v2934, 0
    %v3746 = vsel %vm749, %v2935, 0
    %v3749 = vsel %vm749, %v2936, 0
    %v3752 = vsel %vm749, %v2937, 0
    %v3755 = vsel %vm749, %v2938, 0
    %3757 = vmatpush.bf16.msra.mxu0 0
    %3758 = vmatpush.bf16.msra.mxu0 0
    %3759 = vmatpush.bf16.msra.mxu0 0
    %3760 = vmatpush.bf16.msra.mxu0 0
    %3761 = vmatpush.bf16.msra.mxu0 0
    %3762 = vmatpush.bf16.msra.mxu0 0
    %3763 = vmatpush.bf16.msra.mxu0 %v2468
    %3764 = vmatpush.bf16.msra.mxu0 %v2467
    %3765 = vmatmul.bf16.gmra.mxu0 %v3734
    %v3766 = vpop.f32.mrf.mxu0
    %v3767 = vadd.f32 %v3694, %v3766
    %v3768 = vpop.f32.mrf.mxu0
    %v3769 = vadd.f32 %v3696, %v3768
    %3770 = vmatmul.bf16.gmra.mxu0 %v3737
    %v3771 = vpop.f32.mrf.mxu0
    %v3772 = vadd.f32 %v3699, %v3771
    %v3773 = vpop.f32.mrf.mxu0
    %v3774 = vadd.f32 %v3701, %v3773
    %3775 = vmatmul.bf16.gmra.mxu0 %v3740
    %v3776 = vpop.f32.mrf.mxu0
    %v3777 = vadd.f32 %v3704, %v3776
    %v3778 = vpop.f32.mrf.mxu0
    %v3779 = vadd.f32 %v3706, %v3778
    %3780 = vmatmul.bf16.gmra.mxu0 %v3743
    %v3781 = vpop.f32.mrf.mxu0
    %v3782 = vadd.f32 %v3709, %v3781
    %v3783 = vpop.f32.mrf.mxu0
    %v3784 = vadd.f32 %v3711, %v3783
    %3785 = vmatmul.bf16.gmra.mxu0 %v3746
    %v3786 = vpop.f32.mrf.mxu0
    %v3787 = vadd.f32 %v3714, %v3786
    %v3788 = vpop.f32.mrf.mxu0
    %v3789 = vadd.f32 %v3716, %v3788
    %3790 = vmatmul.bf16.gmra.mxu0 %v3749
    %v3791 = vpop.f32.mrf.mxu0
    %v3792 = vadd.f32 %v3719, %v3791
    %v3793 = vpop.f32.mrf.mxu0
    %v3794 = vadd.f32 %v3721, %v3793
    %3795 = vmatmul.bf16.gmra.mxu0 %v3752
    %v3796 = vpop.f32.mrf.mxu0
    %v3797 = vadd.f32 %v3724, %v3796
    %v3798 = vpop.f32.mrf.mxu0
    %v3799 = vadd.f32 %v3726, %v3798
    %3800 = vmatmul.bf16.gmra.mxu0 %v3755
    %v3801 = vpop.f32.mrf.mxu0
    %v3802 = vadd.f32 %v3729, %v3801
    %v3803 = vpop.f32.mrf.mxu0
    %v3804 = vadd.f32 %v3731, %v3803
    %3805 = vdwg.mxu0
    %v3806 = vadd.f32 %v3767, %v2546
    %v3807 = vadd.f32 %v3769, %v2546
    %v3808 = vadd.f32 %v3772, %v2546
    %v3809 = vadd.f32 %v3774, %v2546
    %v3810 = vadd.f32 %v3777, %v2546
    %v3811 = vadd.f32 %v3779, %v2546
    %v3812 = vadd.f32 %v3782, %v2546
    %v3813 = vadd.f32 %v3784, %v2546
    %v3814 = vadd.f32 %v3787, %v2546
    %v3815 = vadd.f32 %v3789, %v2546
    %v3816 = vadd.f32 %v3792, %v2546
    %v3817 = vadd.f32 %v3794, %v2546
    %v3818 = vadd.f32 %v3797, %v2546
    %v3819 = vadd.f32 %v3799, %v2546
    %v3820 = vadd.f32 %v3802, %v2546
    %v3821 = vadd.f32 %v3804, %v2546
    %v3822 = vmax.f32 %v3806, 0.0
    %v3823 = vmax.f32 %v3807, 0.0
    %v3824 = vmax.f32 %v3808, 0.0
    %v3825 = vmax.f32 %v3809, 0.0
    %v3826 = vmax.f32 %v3810, 0.0
    %v3827 = vmax.f32 %v3811, 0.0
    %v3828 = vmax.f32 %v3812, 0.0
    %v3829 = vmax.f32 %v3813, 0.0
    %v3830 = vmax.f32 %v3814, 0.0
    %v3831 = vmax.f32 %v3815, 0.0
    %v3832 = vmax.f32 %v3816, 0.0
    %v3833 = vmax.f32 %v3817, 0.0
    %v3834 = vmax.f32 %v3818, 0.0
    %v3835 = vmax.f32 %v3819, 0.0
    %v3836 = vmax.f32 %v3820, 0.0
    %v3837 = vmax.f32 %v3821, 0.0
    %v3838 = vpack.c.bf16 %v3823, %v3822
    %v3839 = vpack.c.bf16 %v3825, %v3824
    %v3840 = vpack.c.bf16 %v3827, %v3826
    %v3841 = vpack.c.bf16 %v3829, %v3828
    %v3842 = vpack.c.bf16 %v3831, %v3830
    %v3843 = vpack.c.bf16 %v3833, %v3832
    %v3844 = vpack.c.bf16 %v3835, %v3834
    %v3845 = vpack.c.bf16 %v3837, %v3836
    %v3847 = vsel %vm749, %v3838, 0
    %v3850 = vsel %vm749, %v3839, 0
    %v3853 = vsel %vm749, %v3840, 0
    %v3856 = vsel %vm749, %v3841, 0
    %v3859 = vsel %vm749, %v3842, 0
    %v3862 = vsel %vm749, %v3843, 0
    %v3865 = vsel %vm749, %v3844, 0
    %v3868 = vsel %vm749, %v3845, 0
    %3870 = vmatpush.bf16.msra.mxu0 0
    %3871 = vmatpush.bf16.msra.mxu0 0
    %3872 = vmatpush.bf16.msra.mxu0 0
    %3873 = vmatpush.bf16.msra.mxu0 0
    %3874 = vmatpush.bf16.msra.mxu0 0
    %3875 = vmatpush.bf16.msra.mxu0 0
    %3876 = vmatpush.bf16.msra.mxu0 %v2605
    %3877 = vmatpush.bf16.msra.mxu0 %v2604
    %3878 = vmatmul.bf16.gmra.mxu0 %v3847
    %v3879 = vpop.f32.mrf.mxu0
    %v3880 = vadd.f32 %v2594, %v3879
    %v3881 = vpop.f32.mrf.mxu0
    %v3882 = vadd.f32 %v2594, %v3881
    %3883 = vmatmul.bf16.gmra.mxu0 %v3850
    %v3884 = vpop.f32.mrf.mxu0
    %v3885 = vadd.f32 %v2594, %v3884
    %v3886 = vpop.f32.mrf.mxu0
    %v3887 = vadd.f32 %v2594, %v3886
    %3888 = vmatmul.bf16.gmra.mxu0 %v3853
    %v3889 = vpop.f32.mrf.mxu0
    %v3890 = vadd.f32 %v2594, %v3889
    %v3891 = vpop.f32.mrf.mxu0
    %v3892 = vadd.f32 %v2594, %v3891
    %3893 = vmatmul.bf16.gmra.mxu0 %v3856
    %v3894 = vpop.f32.mrf.mxu0
    %v3895 = vadd.f32 %v2594, %v3894
    %v3896 = vpop.f32.mrf.mxu0
    %v3897 = vadd.f32 %v2594, %v3896
    %3898 = vmatmul.bf16.gmra.mxu0 %v3859
    %v3899 = vpop.f32.mrf.mxu0
    %v3900 = vadd.f32 %v2594, %v3899
    %v3901 = vpop.f32.mrf.mxu0
    %v3902 = vadd.f32 %v2594, %v3901
    %3903 = vmatmul.bf16.gmra.mxu0 %v3862
    %v3904 = vpop.f32.mrf.mxu0
    %v3905 = vadd.f32 %v2594, %v3904
    %v3906 = vpop.f32.mrf.mxu0
    %v3907 = vadd.f32 %v2594, %v3906
    %3908 = vmatmul.bf16.gmra.mxu0 %v3865
    %v3909 = vpop.f32.mrf.mxu0
    %v3910 = vadd.f32 %v2594, %v3909
    %v3911 = vpop.f32.mrf.mxu0
    %v3912 = vadd.f32 %v2594, %v3911
    %3913 = vmatmul.bf16.gmra.mxu0 %v3868
    %v3914 = vpop.f32.mrf.mxu0
    %v3915 = vadd.f32 %v2594, %v3914
    %v3916 = vpop.f32.mrf.mxu0
    %v3917 = vadd.f32 %v2594, %v3916
    %3918 = vdwg.mxu0
    %v3919 = vmax.f32 %v3880, 0.0
    %v3920 = vmax.f32 %v3882, 0.0
    %v3921 = vmax.f32 %v3885, 0.0
    %v3922 = vmax.f32 %v3887, 0.0
    %v3923 = vmax.f32 %v3890, 0.0
    %v3924 = vmax.f32 %v3892, 0.0
    %v3925 = vmax.f32 %v3895, 0.0
    %v3926 = vmax.f32 %v3897, 0.0
    %v3927 = vmax.f32 %v3900, 0.0
    %v3928 = vmax.f32 %v3902, 0.0
    %v3929 = vmax.f32 %v3905, 0.0
    %v3930 = vmax.f32 %v3907, 0.0
    %v3931 = vmax.f32 %v3910, 0.0
    %v3932 = vmax.f32 %v3912, 0.0
    %v3933 = vmax.f32 %v3915, 0.0
    %v3934 = vmax.f32 %v3917, 0.0
    %v3935 = vpack.c.bf16 %v3920, %v3919
    %v3936 = vpack.c.bf16 %v3922, %v3921
    %v3937 = vpack.c.bf16 %v3924, %v3923
    %v3938 = vpack.c.bf16 %v3926, %v3925
    %v3939 = vpack.c.bf16 %v3928, %v3927
    %v3940 = vpack.c.bf16 %v3930, %v3929
    %v3941 = vpack.c.bf16 %v3932, %v3931
    %v3942 = vpack.c.bf16 %v3934, %v3933
    %v3944 = vsel %vm749, %v3935, 0
    %v3947 = vsel %vm749, %v3936, 0
    %v3950 = vsel %vm749, %v3937, 0
    %v3953 = vsel %vm749, %v3938, 0
    %v3956 = vsel %vm749, %v3939, 0
    %v3959 = vsel %vm749, %v3940, 0
    %v3962 = vsel %vm749, %v3941, 0
    %v3965 = vsel %vm749, %v3942, 0
    %3967 = vmatpush.bf16.msra.mxu0 0
    %3968 = vmatpush.bf16.msra.mxu0 0
    %3969 = vmatpush.bf16.msra.mxu0 0
    %3970 = vmatpush.bf16.msra.mxu0 0
    %3971 = vmatpush.bf16.msra.mxu0 0
    %3972 = vmatpush.bf16.msra.mxu0 0
    %3973 = vmatpush.bf16.msra.mxu0 %v2722
    %3974 = vmatpush.bf16.msra.mxu0 %v2721
    %3975 = vmatmul.bf16.gmra.mxu0 %v3944
    %v3976 = vpop.f32.mrf.mxu0
    %v3977 = vadd.f32 %v2711, %v3976
    %v3978 = vpop.f32.mrf.mxu0
    %v3979 = vadd.f32 %v2711, %v3978
    %3980 = vmatmul.bf16.gmra.mxu0 %v3947
    %v3981 = vpop.f32.mrf.mxu0
    %v3982 = vadd.f32 %v2711, %v3981
    %v3983 = vpop.f32.mrf.mxu0
    %v3984 = vadd.f32 %v2711, %v3983
    %3985 = vmatmul.bf16.gmra.mxu0 %v3950
    %v3986 = vpop.f32.mrf.mxu0
    %v3987 = vadd.f32 %v2711, %v3986
    %v3988 = vpop.f32.mrf.mxu0
    %v3989 = vadd.f32 %v2711, %v3988
    %3990 = vmatmul.bf16.gmra.mxu0 %v3953
    %v3991 = vpop.f32.mrf.mxu0
    %v3992 = vadd.f32 %v2711, %v3991
    %v3993 = vpop.f32.mrf.mxu0
    %v3994 = vadd.f32 %v2711, %v3993
    %3995 = vmatmul.bf16.gmra.mxu0 %v3956
    %v3996 = vpop.f32.mrf.mxu0
    %v3997 = vadd.f32 %v2711, %v3996
    %v3998 = vpop.f32.mrf.mxu0
    %v3999 = vadd.f32 %v2711, %v3998
    %4000 = vmatmul.bf16.gmra.mxu0 %v3959
    %v4001 = vpop.f32.mrf.mxu0
    %v4002 = vadd.f32 %v2711, %v4001
    %v4003 = vpop.f32.mrf.mxu0
    %v4004 = vadd.f32 %v2711, %v4003
    %4005 = vmatmul.bf16.gmra.mxu0 %v3962
    %v4006 = vpop.f32.mrf.mxu0
    %v4007 = vadd.f32 %v2711, %v4006
    %v4008 = vpop.f32.mrf.mxu0
    %v4009 = vadd.f32 %v2711, %v4008
    %4010 = vmatmul.bf16.gmra.mxu0 %v3965
    %v4011 = vpop.f32.mrf.mxu0
    %v4012 = vadd.f32 %v2711, %v4011
    %v4013 = vpop.f32.mrf.mxu0
    %v4014 = vadd.f32 %v2711, %v4013
    %4015 = vdwg.mxu0
    %v4016 = vmax.f32 %v3977, 0.0
    %v4017 = vmax.f32 %v3979, 0.0
    %v4018 = vmax.f32 %v3982, 0.0
    %v4019 = vmax.f32 %v3984, 0.0
    %v4020 = vmax.f32 %v3987, 0.0
    %v4021 = vmax.f32 %v3989, 0.0
    %v4022 = vmax.f32 %v3992, 0.0
    %v4023 = vmax.f32 %v3994, 0.0
    %v4024 = vmax.f32 %v3997, 0.0
    %v4025 = vmax.f32 %v3999, 0.0
    %v4026 = vmax.f32 %v4002, 0.0
    %v4027 = vmax.f32 %v4004, 0.0
    %v4028 = vmax.f32 %v4007, 0.0
    %v4029 = vmax.f32 %v4009, 0.0
    %v4030 = vmax.f32 %v4012, 0.0
    %v4031 = vmax.f32 %v4014, 0.0
    %v4032 = vpack.c.bf16 %v4017, %v4016
    %v4033 = vpack.c.bf16 %v4019, %v4018
    %v4034 = vpack.c.bf16 %v4021, %v4020
    %v4035 = vpack.c.bf16 %v4023, %v4022
    %v4036 = vpack.c.bf16 %v4025, %v4024
    %v4037 = vpack.c.bf16 %v4027, %v4026
    %v4038 = vpack.c.bf16 %v4029, %v4028
    %v4039 = vpack.c.bf16 %v4031, %v4030
    %v4041 = vsel %vm749, %v4032, 0
    %v4044 = vsel %vm749, %v4033, 0
    %v4047 = vsel %vm749, %v4034, 0
    %v4050 = vsel %vm749, %v4035, 0
    %v4053 = vsel %vm749, %v4036, 0
    %v4056 = vsel %vm749, %v4037, 0
    %v4059 = vsel %vm749, %v4038, 0
    %v4062 = vsel %vm749, %v4039, 0
    %4064 = vmatpush.bf16.msra.mxu0 0
    %4065 = vmatpush.bf16.msra.mxu0 0
    %4066 = vmatpush.bf16.msra.mxu0 0
    %4067 = vmatpush.bf16.msra.mxu0 0
    %4068 = vmatpush.bf16.msra.mxu0 0
    %4069 = vmatpush.bf16.msra.mxu0 0
    %4070 = vmatpush.bf16.msra.mxu0 %v2839
    %4071 = vmatpush.bf16.msra.mxu0 %v2838
    %4072 = vmatmul.bf16.gmra.mxu0 %v4041
    %v4073 = vpop.f32.mrf.mxu0
    %v4074 = vadd.f32 %v2828, %v4073
    %v4075 = vpop.f32.mrf.mxu0
    %v4076 = vadd.f32 %v2828, %v4075
    %4077 = vmatmul.bf16.gmra.mxu0 %v4044
    %v4078 = vpop.f32.mrf.mxu0
    %v4079 = vadd.f32 %v2828, %v4078
    %v4080 = vpop.f32.mrf.mxu0
    %v4081 = vadd.f32 %v2828, %v4080
    %4082 = vmatmul.bf16.gmra.mxu0 %v4047
    %v4083 = vpop.f32.mrf.mxu0
    %v4084 = vadd.f32 %v2828, %v4083
    %v4085 = vpop.f32.mrf.mxu0
    %v4086 = vadd.f32 %v2828, %v4085
    %4087 = vmatmul.bf16.gmra.mxu0 %v4050
    %v4088 = vpop.f32.mrf.mxu0
    %v4089 = vadd.f32 %v2828, %v4088
    %v4090 = vpop.f32.mrf.mxu0
    %v4091 = vadd.f32 %v2828, %v4090
    %4092 = vmatmul.bf16.gmra.mxu0 %v4053
    %v4093 = vpop.f32.mrf.mxu0
    %v4094 = vadd.f32 %v2828, %v4093
    %v4095 = vpop.f32.mrf.mxu0
    %v4096 = vadd.f32 %v2828, %v4095
    %4097 = vmatmul.bf16.gmra.mxu0 %v4056
    %v4098 = vpop.f32.mrf.mxu0
    %v4099 = vadd.f32 %v2828, %v4098
    %v4100 = vpop.f32.mrf.mxu0
    %v4101 = vadd.f32 %v2828, %v4100
    %4102 = vmatmul.bf16.gmra.mxu0 %v4059
    %v4103 = vpop.f32.mrf.mxu0
    %v4104 = vadd.f32 %v2828, %v4103
    %v4105 = vpop.f32.mrf.mxu0
    %v4106 = vadd.f32 %v2828, %v4105
    %4107 = vmatmul.bf16.gmra.mxu0 %v4062
    %v4108 = vpop.f32.mrf.mxu0
    %v4109 = vadd.f32 %v2828, %v4108
    %v4110 = vpop.f32.mrf.mxu0
    %v4111 = vadd.f32 %v2828, %v4110
    %4112 = vdwg.mxu0
    %v4113 = vadd.f32 %v4074, %v2915
    %v4114 = vadd.f32 %v4076, %v2916
    %v4115 = vadd.f32 %v4079, %v2917
    %v4116 = vadd.f32 %v4081, %v2918
    %v4117 = vadd.f32 %v4084, %v2919
    %v4118 = vadd.f32 %v4086, %v2920
    %v4119 = vadd.f32 %v4089, %v2921
    %v4120 = vadd.f32 %v4091, %v2922
    %v4121 = vadd.f32 %v4094, %v2923
    %v4122 = vadd.f32 %v4096, %v2924
    %v4123 = vadd.f32 %v4099, %v2925
    %v4124 = vadd.f32 %v4101, %v2926
    %v4125 = vadd.f32 %v4104, %v2927
    %v4126 = vadd.f32 %v4106, %v2928
    %v4127 = vadd.f32 %v4109, %v2929
    %v4128 = vadd.f32 %v4111, %v2930
    %v4129 = vpack.c.bf16 %v4114, %v4113
    %v4130 = vpack.c.bf16 %v4116, %v4115
    %v4131 = vpack.c.bf16 %v4118, %v4117
    %v4132 = vpack.c.bf16 %v4120, %v4119
    %v4133 = vpack.c.bf16 %v4122, %v4121
    %v4134 = vpack.c.bf16 %v4124, %v4123
    %v4135 = vpack.c.bf16 %v4126, %v4125
    %v4136 = vpack.c.bf16 %v4128, %v4127
    %4137 = vmatpush.bf16.msra.mxu0 %v4136
    %4138 = vmatpush.bf16.msra.mxu0 %v4135
    %4139 = vmatpush.bf16.msra.mxu0 %v4134
    %4140 = vmatpush.bf16.msra.mxu0 %v4133
    %4141 = vmatpush.bf16.msra.mxu0 %v4132
    %4142 = vmatpush.bf16.msra.mxu0 %v4131
    %4143 = vmatpush.bf16.msra.mxu0 %v4130
    %4144 = vmatpush.bf16.msra.mxu0 %v4129
    %4145 = vmatmul.bf16.gmra.mxu0 %v392
    %v4146 = vpop.f32.mrf.mxu0
    %v4147 = vadd.f32 0.0, %v4146
    %v4148 = vpop.f32.mrf.mxu0
    %v4149 = vadd.f32 0.0, %v4148
    %4150 = vmatmul.bf16.gmra.mxu0 %v393
    %v4151 = vpop.f32.mrf.mxu0
    %v4152 = vadd.f32 0.0, %v4151
    %v4153 = vpop.f32.mrf.mxu0
    %v4154 = vadd.f32 0.0, %v4153
    %4155 = vmatmul.bf16.gmra.mxu0 %v394
    %v4156 = vpop.f32.mrf.mxu0
    %v4157 = vadd.f32 0.0, %v4156
    %v4158 = vpop.f32.mrf.mxu0
    %v4159 = vadd.f32 0.0, %v4158
    %4160 = vmatmul.bf16.gmra.mxu0 %v395
    %v4161 = vpop.f32.mrf.mxu0
    %v4162 = vadd.f32 0.0, %v4161
    %v4163 = vpop.f32.mrf.mxu0
    %v4164 = vadd.f32 0.0, %v4163
    %4165 = vmatmul.bf16.gmra.mxu0 %v396
    %v4166 = vpop.f32.mrf.mxu0
    %v4167 = vadd.f32 0.0, %v4166
    %v4168 = vpop.f32.mrf.mxu0
    %v4169 = vadd.f32 0.0, %v4168
    %4170 = vmatmul.bf16.gmra.mxu0 %v397
    %v4171 = vpop.f32.mrf.mxu0
    %v4172 = vadd.f32 0.0, %v4171
    %v4173 = vpop.f32.mrf.mxu0
    %v4174 = vadd.f32 0.0, %v4173
    %4175 = vmatmul.bf16.gmra.mxu0 %v398
    %v4176 = vpop.f32.mrf.mxu0
    %v4177 = vadd.f32 0.0, %v4176
    %v4178 = vpop.f32.mrf.mxu0
    %v4179 = vadd.f32 0.0, %v4178
    %4180 = vmatmul.bf16.gmra.mxu0 %v399
    %v4181 = vpop.f32.mrf.mxu0
    %v4182 = vadd.f32 0.0, %v4181
    %v4183 = vpop.f32.mrf.mxu0
    %v4184 = vadd.f32 0.0, %v4183
    %4185 = vdwg.mxu0
    %4186 = vmatpush.bf16.msra.mxu0 %v4136
    %4187 = vmatpush.bf16.msra.mxu0 %v4135
    %4188 = vmatpush.bf16.msra.mxu0 %v4134
    %4189 = vmatpush.bf16.msra.mxu0 %v4133
    %4190 = vmatpush.bf16.msra.mxu0 %v4132
    %4191 = vmatpush.bf16.msra.mxu0 %v4131
    %4192 = vmatpush.bf16.msra.mxu0 %v4130
    %4193 = vmatpush.bf16.msra.mxu0 %v4129
    %4194 = vmatmul.bf16.gmra.mxu0 %v512
    %v4195 = vpop.f32.mrf.mxu0
    %v4196 = vadd.f32 0.0, %v4195
    %v4197 = vpop.f32.mrf.mxu0
    %v4198 = vadd.f32 0.0, %v4197
    %4199 = vmatmul.bf16.gmra.mxu0 %v513
    %v4200 = vpop.f32.mrf.mxu0
    %v4201 = vadd.f32 0.0, %v4200
    %v4202 = vpop.f32.mrf.mxu0
    %v4203 = vadd.f32 0.0, %v4202
    %4204 = vmatmul.bf16.gmra.mxu0 %v514
    %v4205 = vpop.f32.mrf.mxu0
    %v4206 = vadd.f32 0.0, %v4205
    %v4207 = vpop.f32.mrf.mxu0
    %v4208 = vadd.f32 0.0, %v4207
    %4209 = vmatmul.bf16.gmra.mxu0 %v515
    %v4210 = vpop.f32.mrf.mxu0
    %v4211 = vadd.f32 0.0, %v4210
    %v4212 = vpop.f32.mrf.mxu0
    %v4213 = vadd.f32 0.0, %v4212
    %4214 = vmatmul.bf16.gmra.mxu0 %v516
    %v4215 = vpop.f32.mrf.mxu0
    %v4216 = vadd.f32 0.0, %v4215
    %v4217 = vpop.f32.mrf.mxu0
    %v4218 = vadd.f32 0.0, %v4217
    %4219 = vmatmul.bf16.gmra.mxu0 %v517
    %v4220 = vpop.f32.mrf.mxu0
    %v4221 = vadd.f32 0.0, %v4220
    %v4222 = vpop.f32.mrf.mxu0
    %v4223 = vadd.f32 0.0, %v4222
    %4224 = vmatmul.bf16.gmra.mxu0 %v518
    %v4225 = vpop.f32.mrf.mxu0
    %v4226 = vadd.f32 0.0, %v4225
    %v4227 = vpop.f32.mrf.mxu0
    %v4228 = vadd.f32 0.0, %v4227
    %4229 = vmatmul.bf16.gmra.mxu0 %v519
    %v4230 = vpop.f32.mrf.mxu0
    %v4231 = vadd.f32 0.0, %v4230
    %v4232 = vpop.f32.mrf.mxu0
    %v4233 = vadd.f32 0.0, %v4232
    %4234 = vdwg.mxu0
    %v4235 = vpack.c.bf16 %v4149, %v4147
    %v4236 = vpack.c.bf16 %v4154, %v4152
    %v4237 = vpack.c.bf16 %v4159, %v4157
    %v4238 = vpack.c.bf16 %v4164, %v4162
    %v4239 = vpack.c.bf16 %v4169, %v4167
    %v4240 = vpack.c.bf16 %v4174, %v4172
    %v4241 = vpack.c.bf16 %v4179, %v4177
    %v4242 = vpack.c.bf16 %v4184, %v4182
    %v4243 = vpack.c.bf16 %v4198, %v4196
    %v4244 = vpack.c.bf16 %v4203, %v4201
    %v4245 = vpack.c.bf16 %v4208, %v4206
    %v4246 = vpack.c.bf16 %v4213, %v4211
    %v4247 = vpack.c.bf16 %v4218, %v4216
    %v4248 = vpack.c.bf16 %v4223, %v4221
    %v4249 = vpack.c.bf16 %v4228, %v4226
    %v4250 = vpack.c.bf16 %v4233, %v4231
    %v4252 = vsel %vm749, %v4243, 0
    %v4255 = vsel %vm749, %v4244, 0
    %v4258 = vsel %vm749, %v4245, 0
    %v4261 = vsel %vm749, %v4246, 0
    %v4264 = vsel %vm749, %v4247, 0
    %v4267 = vsel %vm749, %v4248, 0
    %v4270 = vsel %vm749, %v4249, 0
    %v4273 = vsel %vm749, %v4250, 0
    %4275 = vmatpush.bf16.msra.mxu0 0
    %4276 = vmatpush.bf16.msra.mxu0 0
    %4277 = vmatpush.bf16.msra.mxu0 0
    %4278 = vmatpush.bf16.msra.mxu0 0
    %4279 = vmatpush.bf16.msra.mxu0 0
    %4280 = vmatpush.bf16.msra.mxu0 0
    %4281 = vmatpush.bf16.msra.mxu0 %v1656
    %4282 = vmatpush.bf16.msra.mxu0 %v1655
    %4283 = vmatmul.bf16.gmra.mxu0 %v4252
    %v4284 = vpop.f32.mrf.mxu0
    %v4285 = vadd.f32 0.0, %v4284
    %v4286 = vpop.f32.mrf.mxu0
    %v4287 = vadd.f32 0.0, %v4286
    %4288 = vmatmul.bf16.gmra.mxu0 %v4255
    %v4289 = vpop.f32.mrf.mxu0
    %v4290 = vadd.f32 0.0, %v4289
    %v4291 = vpop.f32.mrf.mxu0
    %v4292 = vadd.f32 0.0, %v4291
    %4293 = vmatmul.bf16.gmra.mxu0 %v4258
    %v4294 = vpop.f32.mrf.mxu0
    %v4295 = vadd.f32 0.0, %v4294
    %v4296 = vpop.f32.mrf.mxu0
    %v4297 = vadd.f32 0.0, %v4296
    %4298 = vmatmul.bf16.gmra.mxu0 %v4261
    %v4299 = vpop.f32.mrf.mxu0
    %v4300 = vadd.f32 0.0, %v4299
    %v4301 = vpop.f32.mrf.mxu0
    %v4302 = vadd.f32 0.0, %v4301
    %4303 = vmatmul.bf16.gmra.mxu0 %v4264
    %v4304 = vpop.f32.mrf.mxu0
    %v4305 = vadd.f32 0.0, %v4304
    %v4306 = vpop.f32.mrf.mxu0
    %v4307 = vadd.f32 0.0, %v4306
    %4308 = vmatmul.bf16.gmra.mxu0 %v4267
    %v4309 = vpop.f32.mrf.mxu0
    %v4310 = vadd.f32 0.0, %v4309
    %v4311 = vpop.f32.mrf.mxu0
    %v4312 = vadd.f32 0.0, %v4311
    %4313 = vmatmul.bf16.gmra.mxu0 %v4270
    %v4314 = vpop.f32.mrf.mxu0
    %v4315 = vadd.f32 0.0, %v4314
    %v4316 = vpop.f32.mrf.mxu0
    %v4317 = vadd.f32 0.0, %v4316
    %4318 = vmatmul.bf16.gmra.mxu0 %v4273
    %v4319 = vpop.f32.mrf.mxu0
    %v4320 = vadd.f32 0.0, %v4319
    %v4321 = vpop.f32.mrf.mxu0
    %v4322 = vadd.f32 0.0, %v4321
    %4323 = vdwg.mxu0
    %v4325 = vsel %vm749, %v4235, 0
    %v4328 = vsel %vm749, %v4236, 0
    %v4331 = vsel %vm749, %v4237, 0
    %v4334 = vsel %vm749, %v4238, 0
    %v4337 = vsel %vm749, %v4239, 0
    %v4340 = vsel %vm749, %v4240, 0
    %v4343 = vsel %vm749, %v4241, 0
    %v4346 = vsel %vm749, %v4242, 0
    %4348 = vmatpush.bf16.msra.mxu0 0
    %4349 = vmatpush.bf16.msra.mxu0 0
    %4350 = vmatpush.bf16.msra.mxu0 0
    %4351 = vmatpush.bf16.msra.mxu0 0
    %4352 = vmatpush.bf16.msra.mxu0 0
    %4353 = vmatpush.bf16.msra.mxu0 0
    %4354 = vmatpush.bf16.msra.mxu0 %v1741
    %4355 = vmatpush.bf16.msra.mxu0 %v1740
    %4356 = vmatmul.bf16.gmra.mxu0 %v4325
    %v4357 = vpop.f32.mrf.mxu0
    %v4358 = vadd.f32 %v4285, %v4357
    %v4359 = vpop.f32.mrf.mxu0
    %v4360 = vadd.f32 %v4287, %v4359
    %4361 = vmatmul.bf16.gmra.mxu0 %v4328
    %v4362 = vpop.f32.mrf.mxu0
    %v4363 = vadd.f32 %v4290, %v4362
    %v4364 = vpop.f32.mrf.mxu0
    %v4365 = vadd.f32 %v4292, %v4364
    %4366 = vmatmul.bf16.gmra.mxu0 %v4331
    %v4367 = vpop.f32.mrf.mxu0
    %v4368 = vadd.f32 %v4295, %v4367
    %v4369 = vpop.f32.mrf.mxu0
    %v4370 = vadd.f32 %v4297, %v4369
    %4371 = vmatmul.bf16.gmra.mxu0 %v4334
    %v4372 = vpop.f32.mrf.mxu0
    %v4373 = vadd.f32 %v4300, %v4372
    %v4374 = vpop.f32.mrf.mxu0
    %v4375 = vadd.f32 %v4302, %v4374
    %4376 = vmatmul.bf16.gmra.mxu0 %v4337
    %v4377 = vpop.f32.mrf.mxu0
    %v4378 = vadd.f32 %v4305, %v4377
    %v4379 = vpop.f32.mrf.mxu0
    %v4380 = vadd.f32 %v4307, %v4379
    %4381 = vmatmul.bf16.gmra.mxu0 %v4340
    %v4382 = vpop.f32.mrf.mxu0
    %v4383 = vadd.f32 %v4310, %v4382
    %v4384 = vpop.f32.mrf.mxu0
    %v4385 = vadd.f32 %v4312, %v4384
    %4386 = vmatmul.bf16.gmra.mxu0 %v4343
    %v4387 = vpop.f32.mrf.mxu0
    %v4388 = vadd.f32 %v4315, %v4387
    %v4389 = vpop.f32.mrf.mxu0
    %v4390 = vadd.f32 %v4317, %v4389
    %4391 = vmatmul.bf16.gmra.mxu0 %v4346
    %v4392 = vpop.f32.mrf.mxu0
    %v4393 = vadd.f32 %v4320, %v4392
    %v4394 = vpop.f32.mrf.mxu0
    %v4395 = vadd.f32 %v4322, %v4394
    %4396 = vdwg.mxu0
    %v4398 = vsel %vm749, %v3595, 0
    %v4401 = vsel %vm749, %v3596, 0
    %v4404 = vsel %vm749, %v3597, 0
    %v4407 = vsel %vm749, %v3598, 0
    %v4410 = vsel %vm749, %v3599, 0
    %v4413 = vsel %vm749, %v3600, 0
    %v4416 = vsel %vm749, %v3601, 0
    %v4419 = vsel %vm749, %v3602, 0
    %4421 = vmatpush.bf16.msra.mxu0 0
    %4422 = vmatpush.bf16.msra.mxu0 0
    %4423 = vmatpush.bf16.msra.mxu0 0
    %4424 = vmatpush.bf16.msra.mxu0 0
    %4425 = vmatpush.bf16.msra.mxu0 0
    %4426 = vmatpush.bf16.msra.mxu0 0
    %4427 = vmatpush.bf16.msra.mxu0 %v1838
    %4428 = vmatpush.bf16.msra.mxu0 %v1837
    %4429 = vmatmul.bf16.gmra.mxu0 %v4398
    %v4430 = vpop.f32.mrf.mxu0
    %v4431 = vadd.f32 0.0, %v4430
    %v4432 = vpop.f32.mrf.mxu0
    %v4433 = vadd.f32 0.0, %v4432
    %4434 = vmatmul.bf16.gmra.mxu0 %v4401
    %v4435 = vpop.f32.mrf.mxu0
    %v4436 = vadd.f32 0.0, %v4435
    %v4437 = vpop.f32.mrf.mxu0
    %v4438 = vadd.f32 0.0, %v4437
    %4439 = vmatmul.bf16.gmra.mxu0 %v4404
    %v4440 = vpop.f32.mrf.mxu0
    %v4441 = vadd.f32 0.0, %v4440
    %v4442 = vpop.f32.mrf.mxu0
    %v4443 = vadd.f32 0.0, %v4442
    %4444 = vmatmul.bf16.gmra.mxu0 %v4407
    %v4445 = vpop.f32.mrf.mxu0
    %v4446 = vadd.f32 0.0, %v4445
    %v4447 = vpop.f32.mrf.mxu0
    %v4448 = vadd.f32 0.0, %v4447
    %4449 = vmatmul.bf16.gmra.mxu0 %v4410
    %v4450 = vpop.f32.mrf.mxu0
    %v4451 = vadd.f32 0.0, %v4450
    %v4452 = vpop.f32.mrf.mxu0
    %v4453 = vadd.f32 0.0, %v4452
    %4454 = vmatmul.bf16.gmra.mxu0 %v4413
    %v4455 = vpop.f32.mrf.mxu0
    %v4456 = vadd.f32 0.0, %v4455
    %v4457 = vpop.f32.mrf.mxu0
    %v4458 = vadd.f32 0.0, %v4457
    %4459 = vmatmul.bf16.gmra.mxu0 %v4416
    %v4460 = vpop.f32.mrf.mxu0
    %v4461 = vadd.f32 0.0, %v4460
    %v4462 = vpop.f32.mrf.mxu0
    %v4463 = vadd.f32 0.0, %v4462
    %4464 = vmatmul.bf16.gmra.mxu0 %v4419
    %v4465 = vpop.f32.mrf.mxu0
    %v4466 = vadd.f32 0.0, %v4465
    %v4467 = vpop.f32.mrf.mxu0
    %v4468 = vadd.f32 0.0, %v4467
    %4469 = vdwg.mxu0
    %v4470 = vadd.f32 %v4358, %v4431
    %v4471 = vadd.f32 %v4360, %v4433
    %v4472 = vadd.f32 %v4363, %v4436
    %v4473 = vadd.f32 %v4365, %v4438
    %v4474 = vadd.f32 %v4368, %v4441
    %v4475 = vadd.f32 %v4370, %v4443
    %v4476 = vadd.f32 %v4373, %v4446
    %v4477 = vadd.f32 %v4375, %v4448
    %v4478 = vadd.f32 %v4378, %v4451
    %v4479 = vadd.f32 %v4380, %v4453
    %v4480 = vadd.f32 %v4383, %v4456
    %v4481 = vadd.f32 %v4385, %v4458
    %v4482 = vadd.f32 %v4388, %v4461
    %v4483 = vadd.f32 %v4390, %v4463
    %v4484 = vadd.f32 %v4393, %v4466
    %v4485 = vadd.f32 %v4395, %v4468
    %v4486 = vadd.f32 %v4470, %v1932
    %v4487 = vadd.f32 %v4471, %v1932
    %v4488 = vadd.f32 %v4472, %v1932
    %v4489 = vadd.f32 %v4473, %v1932
    %v4490 = vadd.f32 %v4474, %v1932
    %v4491 = vadd.f32 %v4475, %v1932
    %v4492 = vadd.f32 %v4476, %v1932
    %v4493 = vadd.f32 %v4477, %v1932
    %v4494 = vadd.f32 %v4478, %v1932
    %v4495 = vadd.f32 %v4479, %v1932
    %v4496 = vadd.f32 %v4480, %v1932
    %v4497 = vadd.f32 %v4481, %v1932
    %v4498 = vadd.f32 %v4482, %v1932
    %v4499 = vadd.f32 %v4483, %v1932
    %v4500 = vadd.f32 %v4484, %v1932
    %v4501 = vadd.f32 %v4485, %v1932
    %v4502 = vmax.f32 %v4486, 0.0
    %v4503 = vmax.f32 %v4487, 0.0
    %v4504 = vmax.f32 %v4488, 0.0
    %v4505 = vmax.f32 %v4489, 0.0
    %v4506 = vmax.f32 %v4490, 0.0
    %v4507 = vmax.f32 %v4491, 0.0
    %v4508 = vmax.f32 %v4492, 0.0
    %v4509 = vmax.f32 %v4493, 0.0
    %v4510 = vmax.f32 %v4494, 0.0
    %v4511 = vmax.f32 %v4495, 0.0
    %v4512 = vmax.f32 %v4496, 0.0
    %v4513 = vmax.f32 %v4497, 0.0
    %v4514 = vmax.f32 %v4498, 0.0
    %v4515 = vmax.f32 %v4499, 0.0
    %v4516 = vmax.f32 %v4500, 0.0
    %v4517 = vmax.f32 %v4501, 0.0
    %v4518 = vpack.c.bf16 %v4503, %v4502
    %v4519 = vpack.c.bf16 %v4505, %v4504
    %v4520 = vpack.c.bf16 %v4507, %v4506
    %v4521 = vpack.c.bf16 %v4509, %v4508
    %v4522 = vpack.c.bf16 %v4511, %v4510
    %v4523 = vpack.c.bf16 %v4513, %v4512
    %v4524 = vpack.c.bf16 %v4515, %v4514
    %v4525 = vpack.c.bf16 %v4517, %v4516
    %v4527 = vsel %vm749, %v4518, 0
    %v4530 = vsel %vm749, %v4519, 0
    %v4533 = vsel %vm749, %v4520, 0
    %v4536 = vsel %vm749, %v4521, 0
    %v4539 = vsel %vm749, %v4522, 0
    %v4542 = vsel %vm749, %v4523, 0
    %v4545 = vsel %vm749, %v4524, 0
    %v4548 = vsel %vm749, %v4525, 0
    %4550 = vmatpush.bf16.msra.mxu0 0
    %4551 = vmatpush.bf16.msra.mxu0 0
    %4552 = vmatpush.bf16.msra.mxu0 0
    %4553 = vmatpush.bf16.msra.mxu0 0
    %4554 = vmatpush.bf16.msra.mxu0 0
    %4555 = vmatpush.bf16.msra.mxu0 0
    %4556 = vmatpush.bf16.msra.mxu0 %v1991
    %4557 = vmatpush.bf16.msra.mxu0 %v1990
    %4558 = vmatmul.bf16.gmra.mxu0 %v4527
    %v4559 = vpop.f32.mrf.mxu0
    %v4560 = vadd.f32 %v1980, %v4559
    %v4561 = vpop.f32.mrf.mxu0
    %v4562 = vadd.f32 %v1980, %v4561
    %4563 = vmatmul.bf16.gmra.mxu0 %v4530
    %v4564 = vpop.f32.mrf.mxu0
    %v4565 = vadd.f32 %v1980, %v4564
    %v4566 = vpop.f32.mrf.mxu0
    %v4567 = vadd.f32 %v1980, %v4566
    %4568 = vmatmul.bf16.gmra.mxu0 %v4533
    %v4569 = vpop.f32.mrf.mxu0
    %v4570 = vadd.f32 %v1980, %v4569
    %v4571 = vpop.f32.mrf.mxu0
    %v4572 = vadd.f32 %v1980, %v4571
    %4573 = vmatmul.bf16.gmra.mxu0 %v4536
    %v4574 = vpop.f32.mrf.mxu0
    %v4575 = vadd.f32 %v1980, %v4574
    %v4576 = vpop.f32.mrf.mxu0
    %v4577 = vadd.f32 %v1980, %v4576
    %4578 = vmatmul.bf16.gmra.mxu0 %v4539
    %v4579 = vpop.f32.mrf.mxu0
    %v4580 = vadd.f32 %v1980, %v4579
    %v4581 = vpop.f32.mrf.mxu0
    %v4582 = vadd.f32 %v1980, %v4581
    %4583 = vmatmul.bf16.gmra.mxu0 %v4542
    %v4584 = vpop.f32.mrf.mxu0
    %v4585 = vadd.f32 %v1980, %v4584
    %v4586 = vpop.f32.mrf.mxu0
    %v4587 = vadd.f32 %v1980, %v4586
    %4588 = vmatmul.bf16.gmra.mxu0 %v4545
    %v4589 = vpop.f32.mrf.mxu0
    %v4590 = vadd.f32 %v1980, %v4589
    %v4591 = vpop.f32.mrf.mxu0
    %v4592 = vadd.f32 %v1980, %v4591
    %4593 = vmatmul.bf16.gmra.mxu0 %v4548
    %v4594 = vpop.f32.mrf.mxu0
    %v4595 = vadd.f32 %v1980, %v4594
    %v4596 = vpop.f32.mrf.mxu0
    %v4597 = vadd.f32 %v1980, %v4596
    %4598 = vdwg.mxu0
    %v4599 = vmax.f32 %v4560, 0.0
    %v4600 = vmax.f32 %v4562, 0.0
    %v4601 = vmax.f32 %v4565, 0.0
    %v4602 = vmax.f32 %v4567, 0.0
    %v4603 = vmax.f32 %v4570, 0.0
    %v4604 = vmax.f32 %v4572, 0.0
    %v4605 = vmax.f32 %v4575, 0.0
    %v4606 = vmax.f32 %v4577, 0.0
    %v4607 = vmax.f32 %v4580, 0.0
    %v4608 = vmax.f32 %v4582, 0.0
    %v4609 = vmax.f32 %v4585, 0.0
    %v4610 = vmax.f32 %v4587, 0.0
    %v4611 = vmax.f32 %v4590, 0.0
    %v4612 = vmax.f32 %v4592, 0.0
    %v4613 = vmax.f32 %v4595, 0.0
    %v4614 = vmax.f32 %v4597, 0.0
    %v4615 = vpack.c.bf16 %v4600, %v4599
    %v4616 = vpack.c.bf16 %v4602, %v4601
    %v4617 = vpack.c.bf16 %v4604, %v4603
    %v4618 = vpack.c.bf16 %v4606, %v4605
    %v4619 = vpack.c.bf16 %v4608, %v4607
    %v4620 = vpack.c.bf16 %v4610, %v4609
    %v4621 = vpack.c.bf16 %v4612, %v4611
    %v4622 = vpack.c.bf16 %v4614, %v4613
    %v4624 = vsel %vm749, %v4615, 0
    %v4627 = vsel %vm749, %v4616, 0
    %v4630 = vsel %vm749, %v4617, 0
    %v4633 = vsel %vm749, %v4618, 0
    %v4636 = vsel %vm749, %v4619, 0
    %v4639 = vsel %vm749, %v4620, 0
    %v4642 = vsel %vm749, %v4621, 0
    %v4645 = vsel %vm749, %v4622, 0
    %4647 = vmatpush.bf16.msra.mxu0 0
    %4648 = vmatpush.bf16.msra.mxu0 0
    %4649 = vmatpush.bf16.msra.mxu0 0
    %4650 = vmatpush.bf16.msra.mxu0 0
    %4651 = vmatpush.bf16.msra.mxu0 0
    %4652 = vmatpush.bf16.msra.mxu0 0
    %4653 = vmatpush.bf16.msra.mxu0 %v2108
    %4654 = vmatpush.bf16.msra.mxu0 %v2107
    %4655 = vmatmul.bf16.gmra.mxu0 %v4624
    %v4656 = vpop.f32.mrf.mxu0
    %v4657 = vadd.f32 %v2097, %v4656
    %v4658 = vpop.f32.mrf.mxu0
    %v4659 = vadd.f32 %v2097, %v4658
    %4660 = vmatmul.bf16.gmra.mxu0 %v4627
    %v4661 = vpop.f32.mrf.mxu0
    %v4662 = vadd.f32 %v2097, %v4661
    %v4663 = vpop.f32.mrf.mxu0
    %v4664 = vadd.f32 %v2097, %v4663
    %4665 = vmatmul.bf16.gmra.mxu0 %v4630
    %v4666 = vpop.f32.mrf.mxu0
    %v4667 = vadd.f32 %v2097, %v4666
    %v4668 = vpop.f32.mrf.mxu0
    %v4669 = vadd.f32 %v2097, %v4668
    %4670 = vmatmul.bf16.gmra.mxu0 %v4633
    %v4671 = vpop.f32.mrf.mxu0
    %v4672 = vadd.f32 %v2097, %v4671
    %v4673 = vpop.f32.mrf.mxu0
    %v4674 = vadd.f32 %v2097, %v4673
    %4675 = vmatmul.bf16.gmra.mxu0 %v4636
    %v4676 = vpop.f32.mrf.mxu0
    %v4677 = vadd.f32 %v2097, %v4676
    %v4678 = vpop.f32.mrf.mxu0
    %v4679 = vadd.f32 %v2097, %v4678
    %4680 = vmatmul.bf16.gmra.mxu0 %v4639
    %v4681 = vpop.f32.mrf.mxu0
    %v4682 = vadd.f32 %v2097, %v4681
    %v4683 = vpop.f32.mrf.mxu0
    %v4684 = vadd.f32 %v2097, %v4683
    %4685 = vmatmul.bf16.gmra.mxu0 %v4642
    %v4686 = vpop.f32.mrf.mxu0
    %v4687 = vadd.f32 %v2097, %v4686
    %v4688 = vpop.f32.mrf.mxu0
    %v4689 = vadd.f32 %v2097, %v4688
    %4690 = vmatmul.bf16.gmra.mxu0 %v4645
    %v4691 = vpop.f32.mrf.mxu0
    %v4692 = vadd.f32 %v2097, %v4691
    %v4693 = vpop.f32.mrf.mxu0
    %v4694 = vadd.f32 %v2097, %v4693
    %4695 = vdwg.mxu0
    %v4696 = vmax.f32 %v4657, 0.0
    %v4697 = vmax.f32 %v4659, 0.0
    %v4698 = vmax.f32 %v4662, 0.0
    %v4699 = vmax.f32 %v4664, 0.0
    %v4700 = vmax.f32 %v4667, 0.0
    %v4701 = vmax.f32 %v4669, 0.0
    %v4702 = vmax.f32 %v4672, 0.0
    %v4703 = vmax.f32 %v4674, 0.0
    %v4704 = vmax.f32 %v4677, 0.0
    %v4705 = vmax.f32 %v4679, 0.0
    %v4706 = vmax.f32 %v4682, 0.0
    %v4707 = vmax.f32 %v4684, 0.0
    %v4708 = vmax.f32 %v4687, 0.0
    %v4709 = vmax.f32 %v4689, 0.0
    %v4710 = vmax.f32 %v4692, 0.0
    %v4711 = vmax.f32 %v4694, 0.0
    %v4712 = vpack.c.bf16 %v4697, %v4696
    %v4713 = vpack.c.bf16 %v4699, %v4698
    %v4714 = vpack.c.bf16 %v4701, %v4700
    %v4715 = vpack.c.bf16 %v4703, %v4702
    %v4716 = vpack.c.bf16 %v4705, %v4704
    %v4717 = vpack.c.bf16 %v4707, %v4706
    %v4718 = vpack.c.bf16 %v4709, %v4708
    %v4719 = vpack.c.bf16 %v4711, %v4710
    %v4721 = vsel %vm749, %v4712, 0
    %v4724 = vsel %vm749, %v4713, 0
    %v4727 = vsel %vm749, %v4714, 0
    %v4730 = vsel %vm749, %v4715, 0
    %v4733 = vsel %vm749, %v4716, 0
    %v4736 = vsel %vm749, %v4717, 0
    %v4739 = vsel %vm749, %v4718, 0
    %v4742 = vsel %vm749, %v4719, 0
    %4744 = vmatpush.bf16.msra.mxu0 0
    %4745 = vmatpush.bf16.msra.mxu0 0
    %4746 = vmatpush.bf16.msra.mxu0 0
    %4747 = vmatpush.bf16.msra.mxu0 0
    %4748 = vmatpush.bf16.msra.mxu0 0
    %4749 = vmatpush.bf16.msra.mxu0 0
    %4750 = vmatpush.bf16.msra.mxu0 %v2225
    %4751 = vmatpush.bf16.msra.mxu0 %v2224
    %4752 = vmatmul.bf16.gmra.mxu0 %v4721
    %v4753 = vpop.f32.mrf.mxu0
    %v4754 = vadd.f32 %v2214, %v4753
    %v4755 = vpop.f32.mrf.mxu0
    %v4756 = vadd.f32 %v2214, %v4755
    %4757 = vmatmul.bf16.gmra.mxu0 %v4724
    %v4758 = vpop.f32.mrf.mxu0
    %v4759 = vadd.f32 %v2214, %v4758
    %v4760 = vpop.f32.mrf.mxu0
    %v4761 = vadd.f32 %v2214, %v4760
    %4762 = vmatmul.bf16.gmra.mxu0 %v4727
    %v4763 = vpop.f32.mrf.mxu0
    %v4764 = vadd.f32 %v2214, %v4763
    %v4765 = vpop.f32.mrf.mxu0
    %v4766 = vadd.f32 %v2214, %v4765
    %4767 = vmatmul.bf16.gmra.mxu0 %v4730
    %v4768 = vpop.f32.mrf.mxu0
    %v4769 = vadd.f32 %v2214, %v4768
    %v4770 = vpop.f32.mrf.mxu0
    %v4771 = vadd.f32 %v2214, %v4770
    %4772 = vmatmul.bf16.gmra.mxu0 %v4733
    %v4773 = vpop.f32.mrf.mxu0
    %v4774 = vadd.f32 %v2214, %v4773
    %v4775 = vpop.f32.mrf.mxu0
    %v4776 = vadd.f32 %v2214, %v4775
    %4777 = vmatmul.bf16.gmra.mxu0 %v4736
    %v4778 = vpop.f32.mrf.mxu0
    %v4779 = vadd.f32 %v2214, %v4778
    %v4780 = vpop.f32.mrf.mxu0
    %v4781 = vadd.f32 %v2214, %v4780
    %4782 = vmatmul.bf16.gmra.mxu0 %v4739
    %v4783 = vpop.f32.mrf.mxu0
    %v4784 = vadd.f32 %v2214, %v4783
    %v4785 = vpop.f32.mrf.mxu0
    %v4786 = vadd.f32 %v2214, %v4785
    %4787 = vmatmul.bf16.gmra.mxu0 %v4742
    %v4788 = vpop.f32.mrf.mxu0
    %v4789 = vadd.f32 %v2214, %v4788
    %v4790 = vpop.f32.mrf.mxu0
    %v4791 = vadd.f32 %v2214, %v4790
    %4792 = vdwg.mxu0
    %v4793 = vpack.c.bf16 %v4756, %v4754
    %v4794 = vpack.c.bf16 %v4761, %v4759
    %v4795 = vpack.c.bf16 %v4766, %v4764
    %v4796 = vpack.c.bf16 %v4771, %v4769
    %v4797 = vpack.c.bf16 %v4776, %v4774
    %v4798 = vpack.c.bf16 %v4781, %v4779
    %v4799 = vpack.c.bf16 %v4786, %v4784
    %v4800 = vpack.c.bf16 %v4791, %v4789
    %4801 = vmatpush.bf16.msra.mxu0 %v4800
    %4802 = vmatpush.bf16.msra.mxu0 %v4799
    %4803 = vmatpush.bf16.msra.mxu0 %v4798
    %4804 = vmatpush.bf16.msra.mxu0 %v4797
    %4805 = vmatpush.bf16.msra.mxu0 %v4796
    %4806 = vmatpush.bf16.msra.mxu0 %v4795
    %4807 = vmatpush.bf16.msra.mxu0 %v4794
    %4808 = vmatpush.bf16.msra.mxu0 %v4793
    %4809 = vmatmul.bf16.gmra.mxu0 %v587
    %v4810 = vpop.f32.mrf.mxu0
    %v4811 = vadd.f32 0.0, %v4810
    %v4812 = vpop.f32.mrf.mxu0
    %v4813 = vadd.f32 0.0, %v4812
    %4814 = vmatmul.bf16.gmra.mxu0 %v588
    %v4815 = vpop.f32.mrf.mxu0
    %v4816 = vadd.f32 0.0, %v4815
    %v4817 = vpop.f32.mrf.mxu0
    %v4818 = vadd.f32 0.0, %v4817
    %4819 = vmatmul.bf16.gmra.mxu0 %v589
    %v4820 = vpop.f32.mrf.mxu0
    %v4821 = vadd.f32 0.0, %v4820
    %v4822 = vpop.f32.mrf.mxu0
    %v4823 = vadd.f32 0.0, %v4822
    %4824 = vmatmul.bf16.gmra.mxu0 %v590
    %v4825 = vpop.f32.mrf.mxu0
    %v4826 = vadd.f32 0.0, %v4825
    %v4827 = vpop.f32.mrf.mxu0
    %v4828 = vadd.f32 0.0, %v4827
    %4829 = vmatmul.bf16.gmra.mxu0 %v591
    %v4830 = vpop.f32.mrf.mxu0
    %v4831 = vadd.f32 0.0, %v4830
    %v4832 = vpop.f32.mrf.mxu0
    %v4833 = vadd.f32 0.0, %v4832
    %4834 = vmatmul.bf16.gmra.mxu0 %v592
    %v4835 = vpop.f32.mrf.mxu0
    %v4836 = vadd.f32 0.0, %v4835
    %v4837 = vpop.f32.mrf.mxu0
    %v4838 = vadd.f32 0.0, %v4837
    %4839 = vmatmul.bf16.gmra.mxu0 %v593
    %v4840 = vpop.f32.mrf.mxu0
    %v4841 = vadd.f32 0.0, %v4840
    %v4842 = vpop.f32.mrf.mxu0
    %v4843 = vadd.f32 0.0, %v4842
    %4844 = vmatmul.bf16.gmra.mxu0 %v594
    %v4845 = vpop.f32.mrf.mxu0
    %v4846 = vadd.f32 0.0, %v4845
    %v4847 = vpop.f32.mrf.mxu0
    %v4848 = vadd.f32 0.0, %v4847
    %4849 = vdwg.mxu0
    %v4850 = vpack.c.bf16 %v4813, %v4811
    %v4851 = vpack.c.bf16 %v4818, %v4816
    %v4852 = vpack.c.bf16 %v4823, %v4821
    %v4853 = vpack.c.bf16 %v4828, %v4826
    %v4854 = vpack.c.bf16 %v4833, %v4831
    %v4855 = vpack.c.bf16 %v4838, %v4836
    %v4856 = vpack.c.bf16 %v4843, %v4841
    %v4857 = vpack.c.bf16 %v4848, %v4846
    %v4859 = vsel %vm749, %v4850, 0
    %v4862 = vsel %vm749, %v4851, 0
    %v4865 = vsel %vm749, %v4852, 0
    %v4868 = vsel %vm749, %v4853, 0
    %v4871 = vsel %vm749, %v4854, 0
    %v4874 = vsel %vm749, %v4855, 0
    %v4877 = vsel %vm749, %v4856, 0
    %v4880 = vsel %vm749, %v4857, 0
    %4882 = vmatpush.bf16.msra.mxu0 0
    %4883 = vmatpush.bf16.msra.mxu0 0
    %4884 = vmatpush.bf16.msra.mxu0 0
    %4885 = vmatpush.bf16.msra.mxu0 0
    %4886 = vmatpush.bf16.msra.mxu0 0
    %4887 = vmatpush.bf16.msra.mxu0 0
    %4888 = vmatpush.bf16.msra.mxu0 %v2383
    %4889 = vmatpush.bf16.msra.mxu0 %v2382
    %4890 = vmatmul.bf16.gmra.mxu0 %v4859
    %v4891 = vpop.f32.mrf.mxu0
    %v4892 = vadd.f32 0.0, %v4891
    %v4893 = vpop.f32.mrf.mxu0
    %v4894 = vadd.f32 0.0, %v4893
    %4895 = vmatmul.bf16.gmra.mxu0 %v4862
    %v4896 = vpop.f32.mrf.mxu0
    %v4897 = vadd.f32 0.0, %v4896
    %v4898 = vpop.f32.mrf.mxu0
    %v4899 = vadd.f32 0.0, %v4898
    %4900 = vmatmul.bf16.gmra.mxu0 %v4865
    %v4901 = vpop.f32.mrf.mxu0
    %v4902 = vadd.f32 0.0, %v4901
    %v4903 = vpop.f32.mrf.mxu0
    %v4904 = vadd.f32 0.0, %v4903
    %4905 = vmatmul.bf16.gmra.mxu0 %v4868
    %v4906 = vpop.f32.mrf.mxu0
    %v4907 = vadd.f32 0.0, %v4906
    %v4908 = vpop.f32.mrf.mxu0
    %v4909 = vadd.f32 0.0, %v4908
    %4910 = vmatmul.bf16.gmra.mxu0 %v4871
    %v4911 = vpop.f32.mrf.mxu0
    %v4912 = vadd.f32 0.0, %v4911
    %v4913 = vpop.f32.mrf.mxu0
    %v4914 = vadd.f32 0.0, %v4913
    %4915 = vmatmul.bf16.gmra.mxu0 %v4874
    %v4916 = vpop.f32.mrf.mxu0
    %v4917 = vadd.f32 0.0, %v4916
    %v4918 = vpop.f32.mrf.mxu0
    %v4919 = vadd.f32 0.0, %v4918
    %4920 = vmatmul.bf16.gmra.mxu0 %v4877
    %v4921 = vpop.f32.mrf.mxu0
    %v4922 = vadd.f32 0.0, %v4921
    %v4923 = vpop.f32.mrf.mxu0
    %v4924 = vadd.f32 0.0, %v4923
    %4925 = vmatmul.bf16.gmra.mxu0 %v4880
    %v4926 = vpop.f32.mrf.mxu0
    %v4927 = vadd.f32 0.0, %v4926
    %v4928 = vpop.f32.mrf.mxu0
    %v4929 = vadd.f32 0.0, %v4928
    %4930 = vdwg.mxu0
    %v4932 = vsel %vm749, %v4129, 0
    %v4935 = vsel %vm749, %v4130, 0
    %v4938 = vsel %vm749, %v4131, 0
    %v4941 = vsel %vm749, %v4132, 0
    %v4944 = vsel %vm749, %v4133, 0
    %v4947 = vsel %vm749, %v4134, 0
    %v4950 = vsel %vm749, %v4135, 0
    %v4953 = vsel %vm749, %v4136, 0
    %4955 = vmatpush.bf16.msra.mxu0 0
    %4956 = vmatpush.bf16.msra.mxu0 0
    %4957 = vmatpush.bf16.msra.mxu0 0
    %4958 = vmatpush.bf16.msra.mxu0 0
    %4959 = vmatpush.bf16.msra.mxu0 0
    %4960 = vmatpush.bf16.msra.mxu0 0
    %4961 = vmatpush.bf16.msra.mxu0 %v2468
    %4962 = vmatpush.bf16.msra.mxu0 %v2467
    %4963 = vmatmul.bf16.gmra.mxu0 %v4932
    %v4964 = vpop.f32.mrf.mxu0
    %v4965 = vadd.f32 %v4892, %v4964
    %v4966 = vpop.f32.mrf.mxu0
    %v4967 = vadd.f32 %v4894, %v4966
    %4968 = vmatmul.bf16.gmra.mxu0 %v4935
    %v4969 = vpop.f32.mrf.mxu0
    %v4970 = vadd.f32 %v4897, %v4969
    %v4971 = vpop.f32.mrf.mxu0
    %v4972 = vadd.f32 %v4899, %v4971
    %4973 = vmatmul.bf16.gmra.mxu0 %v4938
    %v4974 = vpop.f32.mrf.mxu0
    %v4975 = vadd.f32 %v4902, %v4974
    %v4976 = vpop.f32.mrf.mxu0
    %v4977 = vadd.f32 %v4904, %v4976
    %4978 = vmatmul.bf16.gmra.mxu0 %v4941
    %v4979 = vpop.f32.mrf.mxu0
    %v4980 = vadd.f32 %v4907, %v4979
    %v4981 = vpop.f32.mrf.mxu0
    %v4982 = vadd.f32 %v4909, %v4981
    %4983 = vmatmul.bf16.gmra.mxu0 %v4944
    %v4984 = vpop.f32.mrf.mxu0
    %v4985 = vadd.f32 %v4912, %v4984
    %v4986 = vpop.f32.mrf.mxu0
    %v4987 = vadd.f32 %v4914, %v4986
    %4988 = vmatmul.bf16.gmra.mxu0 %v4947
    %v4989 = vpop.f32.mrf.mxu0
    %v4990 = vadd.f32 %v4917, %v4989
    %v4991 = vpop.f32.mrf.mxu0
    %v4992 = vadd.f32 %v4919, %v4991
    %4993 = vmatmul.bf16.gmra.mxu0 %v4950
    %v4994 = vpop.f32.mrf.mxu0
    %v4995 = vadd.f32 %v4922, %v4994
    %v4996 = vpop.f32.mrf.mxu0
    %v4997 = vadd.f32 %v4924, %v4996
    %4998 = vmatmul.bf16.gmra.mxu0 %v4953
    %v4999 = vpop.f32.mrf.mxu0
    %v5000 = vadd.f32 %v4927, %v4999
    %v5001 = vpop.f32.mrf.mxu0
    %v5002 = vadd.f32 %v4929, %v5001
    %5003 = vdwg.mxu0
    %v5004 = vadd.f32 %v4965, %v2546
    %v5005 = vadd.f32 %v4967, %v2546
    %v5006 = vadd.f32 %v4970, %v2546
    %v5007 = vadd.f32 %v4972, %v2546
    %v5008 = vadd.f32 %v4975, %v2546
    %v5009 = vadd.f32 %v4977, %v2546
    %v5010 = vadd.f32 %v4980, %v2546
    %v5011 = vadd.f32 %v4982, %v2546
    %v5012 = vadd.f32 %v4985, %v2546
    %v5013 = vadd.f32 %v4987, %v2546
    %v5014 = vadd.f32 %v4990, %v2546
    %v5015 = vadd.f32 %v4992, %v2546
    %v5016 = vadd.f32 %v4995, %v2546
    %v5017 = vadd.f32 %v4997, %v2546
    %v5018 = vadd.f32 %v5000, %v2546
    %v5019 = vadd.f32 %v5002, %v2546
    %v5020 = vmax.f32 %v5004, 0.0
    %v5021 = vmax.f32 %v5005, 0.0
    %v5022 = vmax.f32 %v5006, 0.0
    %v5023 = vmax.f32 %v5007, 0.0
    %v5024 = vmax.f32 %v5008, 0.0
    %v5025 = vmax.f32 %v5009, 0.0
    %v5026 = vmax.f32 %v5010, 0.0
    %v5027 = vmax.f32 %v5011, 0.0
    %v5028 = vmax.f32 %v5012, 0.0
    %v5029 = vmax.f32 %v5013, 0.0
    %v5030 = vmax.f32 %v5014, 0.0
    %v5031 = vmax.f32 %v5015, 0.0
    %v5032 = vmax.f32 %v5016, 0.0
    %v5033 = vmax.f32 %v5017, 0.0
    %v5034 = vmax.f32 %v5018, 0.0
    %v5035 = vmax.f32 %v5019, 0.0
    %v5036 = vpack.c.bf16 %v5021, %v5020
    %v5037 = vpack.c.bf16 %v5023, %v5022
    %v5038 = vpack.c.bf16 %v5025, %v5024
    %v5039 = vpack.c.bf16 %v5027, %v5026
    %v5040 = vpack.c.bf16 %v5029, %v5028
    %v5041 = vpack.c.bf16 %v5031, %v5030
    %v5042 = vpack.c.bf16 %v5033, %v5032
    %v5043 = vpack.c.bf16 %v5035, %v5034
    %v5045 = vsel %vm749, %v5036, 0
    %v5048 = vsel %vm749, %v5037, 0
    %v5051 = vsel %vm749, %v5038, 0
    %v5054 = vsel %vm749, %v5039, 0
    %v5057 = vsel %vm749, %v5040, 0
    %v5060 = vsel %vm749, %v5041, 0
    %v5063 = vsel %vm749, %v5042, 0
    %v5066 = vsel %vm749, %v5043, 0
    %5068 = vmatpush.bf16.msra.mxu0 0
    %5069 = vmatpush.bf16.msra.mxu0 0
    %5070 = vmatpush.bf16.msra.mxu0 0
    %5071 = vmatpush.bf16.msra.mxu0 0
    %5072 = vmatpush.bf16.msra.mxu0 0
    %5073 = vmatpush.bf16.msra.mxu0 0
    %5074 = vmatpush.bf16.msra.mxu0 %v2605
    %5075 = vmatpush.bf16.msra.mxu0 %v2604
    %5076 = vmatmul.bf16.gmra.mxu0 %v5045
    %v5077 = vpop.f32.mrf.mxu0
    %v5078 = vadd.f32 %v2594, %v5077
    %v5079 = vpop.f32.mrf.mxu0
    %v5080 = vadd.f32 %v2594, %v5079
    %5081 = vmatmul.bf16.gmra.mxu0 %v5048
    %v5082 = vpop.f32.mrf.mxu0
    %v5083 = vadd.f32 %v2594, %v5082
    %v5084 = vpop.f32.mrf.mxu0
    %v5085 = vadd.f32 %v2594, %v5084
    %5086 = vmatmul.bf16.gmra.mxu0 %v5051
    %v5087 = vpop.f32.mrf.mxu0
    %v5088 = vadd.f32 %v2594, %v5087
    %v5089 = vpop.f32.mrf.mxu0
    %v5090 = vadd.f32 %v2594, %v5089
    %5091 = vmatmul.bf16.gmra.mxu0 %v5054
    %v5092 = vpop.f32.mrf.mxu0
    %v5093 = vadd.f32 %v2594, %v5092
    %v5094 = vpop.f32.mrf.mxu0
    %v5095 = vadd.f32 %v2594, %v5094
    %5096 = vmatmul.bf16.gmra.mxu0 %v5057
    %v5097 = vpop.f32.mrf.mxu0
    %v5098 = vadd.f32 %v2594, %v5097
    %v5099 = vpop.f32.mrf.mxu0
    %v5100 = vadd.f32 %v2594, %v5099
    %5101 = vmatmul.bf16.gmra.mxu0 %v5060
    %v5102 = vpop.f32.mrf.mxu0
    %v5103 = vadd.f32 %v2594, %v5102
    %v5104 = vpop.f32.mrf.mxu0
    %v5105 = vadd.f32 %v2594, %v5104
    %5106 = vmatmul.bf16.gmra.mxu0 %v5063
    %v5107 = vpop.f32.mrf.mxu0
    %v5108 = vadd.f32 %v2594, %v5107
    %v5109 = vpop.f32.mrf.mxu0
    %v5110 = vadd.f32 %v2594, %v5109
    %5111 = vmatmul.bf16.gmra.mxu0 %v5066
    %v5112 = vpop.f32.mrf.mxu0
    %v5113 = vadd.f32 %v2594, %v5112
    %v5114 = vpop.f32.mrf.mxu0
    %v5115 = vadd.f32 %v2594, %v5114
    %5116 = vdwg.mxu0
    %v5117 = vmax.f32 %v5078, 0.0
    %v5118 = vmax.f32 %v5080, 0.0
    %v5119 = vmax.f32 %v5083, 0.0
    %v5120 = vmax.f32 %v5085, 0.0
    %v5121 = vmax.f32 %v5088, 0.0
    %v5122 = vmax.f32 %v5090, 0.0
    %v5123 = vmax.f32 %v5093, 0.0
    %v5124 = vmax.f32 %v5095, 0.0
    %v5125 = vmax.f32 %v5098, 0.0
    %v5126 = vmax.f32 %v5100, 0.0
    %v5127 = vmax.f32 %v5103, 0.0
    %v5128 = vmax.f32 %v5105, 0.0
    %v5129 = vmax.f32 %v5108, 0.0
    %v5130 = vmax.f32 %v5110, 0.0
    %v5131 = vmax.f32 %v5113, 0.0
    %v5132 = vmax.f32 %v5115, 0.0
    %v5133 = vpack.c.bf16 %v5118, %v5117
    %v5134 = vpack.c.bf16 %v5120, %v5119
    %v5135 = vpack.c.bf16 %v5122, %v5121
    %v5136 = vpack.c.bf16 %v5124, %v5123
    %v5137 = vpack.c.bf16 %v5126, %v5125
    %v5138 = vpack.c.bf16 %v5128, %v5127
    %v5139 = vpack.c.bf16 %v5130, %v5129
    %v5140 = vpack.c.bf16 %v5132, %v5131
    %v5142 = vsel %vm749, %v5133, 0
    %v5145 = vsel %vm749, %v5134, 0
    %v5148 = vsel %vm749, %v5135, 0
    %v5151 = vsel %vm749, %v5136, 0
    %v5154 = vsel %vm749, %v5137, 0
    %v5157 = vsel %vm749, %v5138, 0
    %v5160 = vsel %vm749, %v5139, 0
    %v5163 = vsel %vm749, %v5140, 0
    %5165 = vmatpush.bf16.msra.mxu0 0
    %5166 = vmatpush.bf16.msra.mxu0 0
    %5167 = vmatpush.bf16.msra.mxu0 0
    %5168 = vmatpush.bf16.msra.mxu0 0
    %5169 = vmatpush.bf16.msra.mxu0 0
    %5170 = vmatpush.bf16.msra.mxu0 0
    %5171 = vmatpush.bf16.msra.mxu0 %v2722
    %5172 = vmatpush.bf16.msra.mxu0 %v2721
    %5173 = vmatmul.bf16.gmra.mxu0 %v5142
    %v5174 = vpop.f32.mrf.mxu0
    %v5175 = vadd.f32 %v2711, %v5174
    %v5176 = vpop.f32.mrf.mxu0
    %v5177 = vadd.f32 %v2711, %v5176
    %5178 = vmatmul.bf16.gmra.mxu0 %v5145
    %v5179 = vpop.f32.mrf.mxu0
    %v5180 = vadd.f32 %v2711, %v5179
    %v5181 = vpop.f32.mrf.mxu0
    %v5182 = vadd.f32 %v2711, %v5181
    %5183 = vmatmul.bf16.gmra.mxu0 %v5148
    %v5184 = vpop.f32.mrf.mxu0
    %v5185 = vadd.f32 %v2711, %v5184
    %v5186 = vpop.f32.mrf.mxu0
    %v5187 = vadd.f32 %v2711, %v5186
    %5188 = vmatmul.bf16.gmra.mxu0 %v5151
    %v5189 = vpop.f32.mrf.mxu0
    %v5190 = vadd.f32 %v2711, %v5189
    %v5191 = vpop.f32.mrf.mxu0
    %v5192 = vadd.f32 %v2711, %v5191
    %5193 = vmatmul.bf16.gmra.mxu0 %v5154
    %v5194 = vpop.f32.mrf.mxu0
    %v5195 = vadd.f32 %v2711, %v5194
    %v5196 = vpop.f32.mrf.mxu0
    %v5197 = vadd.f32 %v2711, %v5196
    %5198 = vmatmul.bf16.gmra.mxu0 %v5157
    %v5199 = vpop.f32.mrf.mxu0
    %v5200 = vadd.f32 %v2711, %v5199
    %v5201 = vpop.f32.mrf.mxu0
    %v5202 = vadd.f32 %v2711, %v5201
    %5203 = vmatmul.bf16.gmra.mxu0 %v5160
    %v5204 = vpop.f32.mrf.mxu0
    %v5205 = vadd.f32 %v2711, %v5204
    %v5206 = vpop.f32.mrf.mxu0
    %v5207 = vadd.f32 %v2711, %v5206
    %5208 = vmatmul.bf16.gmra.mxu0 %v5163
    %v5209 = vpop.f32.mrf.mxu0
    %v5210 = vadd.f32 %v2711, %v5209
    %v5211 = vpop.f32.mrf.mxu0
    %v5212 = vadd.f32 %v2711, %v5211
    %5213 = vdwg.mxu0
    %v5214 = vmax.f32 %v5175, 0.0
    %v5215 = vmax.f32 %v5177, 0.0
    %v5216 = vmax.f32 %v5180, 0.0
    %v5217 = vmax.f32 %v5182, 0.0
    %v5218 = vmax.f32 %v5185, 0.0
    %v5219 = vmax.f32 %v5187, 0.0
    %v5220 = vmax.f32 %v5190, 0.0
    %v5221 = vmax.f32 %v5192, 0.0
    %v5222 = vmax.f32 %v5195, 0.0
    %v5223 = vmax.f32 %v5197, 0.0
    %v5224 = vmax.f32 %v5200, 0.0
    %v5225 = vmax.f32 %v5202, 0.0
    %v5226 = vmax.f32 %v5205, 0.0
    %v5227 = vmax.f32 %v5207, 0.0
    %v5228 = vmax.f32 %v5210, 0.0
    %v5229 = vmax.f32 %v5212, 0.0
    %v5230 = vpack.c.bf16 %v5215, %v5214
    %v5231 = vpack.c.bf16 %v5217, %v5216
    %v5232 = vpack.c.bf16 %v5219, %v5218
    %v5233 = vpack.c.bf16 %v5221, %v5220
    %v5234 = vpack.c.bf16 %v5223, %v5222
    %v5235 = vpack.c.bf16 %v5225, %v5224
    %v5236 = vpack.c.bf16 %v5227, %v5226
    %v5237 = vpack.c.bf16 %v5229, %v5228
    %v5239 = vsel %vm749, %v5230, 0
    %v5242 = vsel %vm749, %v5231, 0
    %v5245 = vsel %vm749, %v5232, 0
    %v5248 = vsel %vm749, %v5233, 0
    %v5251 = vsel %vm749, %v5234, 0
    %v5254 = vsel %vm749, %v5235, 0
    %v5257 = vsel %vm749, %v5236, 0
    %v5260 = vsel %vm749, %v5237, 0
    %5262 = vmatpush.bf16.msra.mxu0 0
    %5263 = vmatpush.bf16.msra.mxu0 0
    %5264 = vmatpush.bf16.msra.mxu0 0
    %5265 = vmatpush.bf16.msra.mxu0 0
    %5266 = vmatpush.bf16.msra.mxu0 0
    %5267 = vmatpush.bf16.msra.mxu0 0
    %5268 = vmatpush.bf16.msra.mxu0 %v2839
    %5269 = vmatpush.bf16.msra.mxu0 %v2838
    %5270 = vmatmul.bf16.gmra.mxu0 %v5239
    %v5271 = vpop.f32.mrf.mxu0
    %v5272 = vadd.f32 %v2828, %v5271
    %v5273 = vpop.f32.mrf.mxu0
    %v5274 = vadd.f32 %v2828, %v5273
    %5275 = vmatmul.bf16.gmra.mxu0 %v5242
    %v5276 = vpop.f32.mrf.mxu0
    %v5277 = vadd.f32 %v2828, %v5276
    %v5278 = vpop.f32.mrf.mxu0
    %v5279 = vadd.f32 %v2828, %v5278
    %5280 = vmatmul.bf16.gmra.mxu0 %v5245
    %v5281 = vpop.f32.mrf.mxu0
    %v5282 = vadd.f32 %v2828, %v5281
    %v5283 = vpop.f32.mrf.mxu0
    %v5284 = vadd.f32 %v2828, %v5283
    %5285 = vmatmul.bf16.gmra.mxu0 %v5248
    %v5286 = vpop.f32.mrf.mxu0
    %v5287 = vadd.f32 %v2828, %v5286
    %v5288 = vpop.f32.mrf.mxu0
    %v5289 = vadd.f32 %v2828, %v5288
    %5290 = vmatmul.bf16.gmra.mxu0 %v5251
    %v5291 = vpop.f32.mrf.mxu0
    %v5292 = vadd.f32 %v2828, %v5291
    %v5293 = vpop.f32.mrf.mxu0
    %v5294 = vadd.f32 %v2828, %v5293
    %5295 = vmatmul.bf16.gmra.mxu0 %v5254
    %v5296 = vpop.f32.mrf.mxu0
    %v5297 = vadd.f32 %v2828, %v5296
    %v5298 = vpop.f32.mrf.mxu0
    %v5299 = vadd.f32 %v2828, %v5298
    %5300 = vmatmul.bf16.gmra.mxu0 %v5257
    %v5301 = vpop.f32.mrf.mxu0
    %v5302 = vadd.f32 %v2828, %v5301
    %v5303 = vpop.f32.mrf.mxu0
    %v5304 = vadd.f32 %v2828, %v5303
    %5305 = vmatmul.bf16.gmra.mxu0 %v5260
    %v5306 = vpop.f32.mrf.mxu0
    %v5307 = vadd.f32 %v2828, %v5306
    %v5308 = vpop.f32.mrf.mxu0
    %v5309 = vadd.f32 %v2828, %v5308
    %5310 = vdwg.mxu0
    %v5311 = vadd.f32 %v5272, %v4113
    %v5312 = vadd.f32 %v5274, %v4114
    %v5313 = vadd.f32 %v5277, %v4115
    %v5314 = vadd.f32 %v5279, %v4116
    %v5315 = vadd.f32 %v5282, %v4117
    %v5316 = vadd.f32 %v5284, %v4118
    %v5317 = vadd.f32 %v5287, %v4119
    %v5318 = vadd.f32 %v5289, %v4120
    %v5319 = vadd.f32 %v5292, %v4121
    %v5320 = vadd.f32 %v5294, %v4122
    %v5321 = vadd.f32 %v5297, %v4123
    %v5322 = vadd.f32 %v5299, %v4124
    %v5323 = vadd.f32 %v5302, %v4125
    %v5324 = vadd.f32 %v5304, %v4126
    %v5325 = vadd.f32 %v5307, %v4127
    %v5326 = vadd.f32 %v5309, %v4128
    %v5327 = vpack.c.bf16 %v5312, %v5311
    %v5328 = vpack.c.bf16 %v5314, %v5313
    %v5329 = vpack.c.bf16 %v5316, %v5315
    %v5330 = vpack.c.bf16 %v5318, %v5317
    %v5331 = vpack.c.bf16 %v5320, %v5319
    %v5332 = vpack.c.bf16 %v5322, %v5321
    %v5333 = vpack.c.bf16 %v5324, %v5323
    %v5334 = vpack.c.bf16 %v5326, %v5325
    %v5335 = vld [vmem:[%s81] sm:$0xf]
    %v5336 = vld [vmem:[%s81 + $0x4] sm:$0xf]
    %v5337 = vld [vmem:[%s81 + $0x8] sm:$0xf]
    %v5338 = vld [vmem:[%s81 + $0xc] sm:$0xf]
    %v5339 = vld [vmem:[#allocation4] sm:$0x1]
    %v5341 = vperm.slane %v5339, 0
    %v5347 = vunpack.c.l.b16 %v5335
    %v5348 = vunpack.c.l.b16 %v5336
    %v5349 = vunpack.c.l.b16 %v5337
    %v5350 = vunpack.c.l.b16 %v5338
    %v5351 = vpack.c.b16 %v5348, %v5347
    %v5352 = vpack.c.b16 %v5350, %v5349
    %v5356 = vsel %vm749, %v5327, 0
    %v5359 = vsel %vm749, %v5328, 0
    %v5362 = vsel %vm749, %v5329, 0
    %v5365 = vsel %vm749, %v5330, 0
    %v5368 = vsel %vm749, %v5331, 0
    %v5371 = vsel %vm749, %v5332, 0
    %v5374 = vsel %vm749, %v5333, 0
    %v5377 = vsel %vm749, %v5334, 0
    %5379 = vmatpush.bf16.msra.mxu0 0
    %5380 = vmatpush.bf16.msra.mxu0 0
    %5381 = vmatpush.bf16.msra.mxu0 0
    %5382 = vmatpush.bf16.msra.mxu0 0
    %5383 = vmatpush.bf16.msra.mxu0 0
    %5384 = vmatpush.bf16.msra.mxu0 0
    %5385 = vmatpush.bf16.msra.mxu0 %v5352
    %5386 = vmatpush.bf16.msra.mxu0 %v5351
    %5387 = vmatmul.bf16.gmra.mxu0 %v5356
    %v5388 = vpop.f32.mrf.mxu0
    %v5389 = vadd.f32 %v5341, %v5388
    %v5390 = vpop.f32.mrf.mxu0
    %v5391 = vadd.f32 %v5341, %v5390
    %5392 = vmatmul.bf16.gmra.mxu0 %v5359
    %v5393 = vpop.f32.mrf.mxu0
    %v5394 = vadd.f32 %v5341, %v5393
    %v5395 = vpop.f32.mrf.mxu0
    %v5396 = vadd.f32 %v5341, %v5395
    %5397 = vmatmul.bf16.gmra.mxu0 %v5362
    %v5398 = vpop.f32.mrf.mxu0
    %v5399 = vadd.f32 %v5341, %v5398
    %v5400 = vpop.f32.mrf.mxu0
    %v5401 = vadd.f32 %v5341, %v5400
    %5402 = vmatmul.bf16.gmra.mxu0 %v5365
    %v5403 = vpop.f32.mrf.mxu0
    %v5404 = vadd.f32 %v5341, %v5403
    %v5405 = vpop.f32.mrf.mxu0
    %v5406 = vadd.f32 %v5341, %v5405
    %5407 = vmatmul.bf16.gmra.mxu0 %v5368
    %v5408 = vpop.f32.mrf.mxu0
    %v5409 = vadd.f32 %v5341, %v5408
    %v5410 = vpop.f32.mrf.mxu0
    %v5411 = vadd.f32 %v5341, %v5410
    %5412 = vmatmul.bf16.gmra.mxu0 %v5371
    %v5413 = vpop.f32.mrf.mxu0
    %v5414 = vadd.f32 %v5341, %v5413
    %v5415 = vpop.f32.mrf.mxu0
    %v5416 = vadd.f32 %v5341, %v5415
    %5417 = vmatmul.bf16.gmra.mxu0 %v5374
    %v5418 = vpop.f32.mrf.mxu0
    %v5419 = vadd.f32 %v5341, %v5418
    %v5420 = vpop.f32.mrf.mxu0
    %v5421 = vadd.f32 %v5341, %v5420
    %5422 = vmatmul.bf16.gmra.mxu0 %v5377
    %v5423 = vpop.f32.mrf.mxu0
    %v5424 = vadd.f32 %v5341, %v5423
    %v5425 = vpop.f32.mrf.mxu0
    %v5426 = vadd.f32 %v5341, %v5425
    %5427 = vdwg.mxu0
    %v5428 = vmax.f32 %v5389, 0.0
    %v5429 = vmax.f32 %v5391, 0.0
    %v5430 = vmax.f32 %v5394, 0.0
    %v5431 = vmax.f32 %v5396, 0.0
    %v5432 = vmax.f32 %v5399, 0.0
    %v5433 = vmax.f32 %v5401, 0.0
    %v5434 = vmax.f32 %v5404, 0.0
    %v5435 = vmax.f32 %v5406, 0.0
    %v5436 = vmax.f32 %v5409, 0.0
    %v5437 = vmax.f32 %v5411, 0.0
    %v5438 = vmax.f32 %v5414, 0.0
    %v5439 = vmax.f32 %v5416, 0.0
    %v5440 = vmax.f32 %v5419, 0.0
    %v5441 = vmax.f32 %v5421, 0.0
    %v5442 = vmax.f32 %v5424, 0.0
    %v5443 = vmax.f32 %v5426, 0.0
    %v5444 = vpack.c.bf16 %v5429, %v5428
    %v5445 = vpack.c.bf16 %v5431, %v5430
    %v5446 = vpack.c.bf16 %v5433, %v5432
    %v5447 = vpack.c.bf16 %v5435, %v5434
    %v5448 = vpack.c.bf16 %v5437, %v5436
    %v5449 = vpack.c.bf16 %v5439, %v5438
    %v5450 = vpack.c.bf16 %v5441, %v5440
    %v5451 = vpack.c.bf16 %v5443, %v5442
    %v5452 = vld [vmem:[%s85] sm:$0xf]
    %v5453 = vld [vmem:[%s85 + $0x4] sm:$0xf]
    %v5454 = vld [vmem:[%s85 + $0x8] sm:$0xf]
    %v5455 = vld [vmem:[%s85 + $0xc] sm:$0xf]
    %v5456 = vld [vmem:[#allocation6] sm:$0x1]
    %v5458 = vperm.slane %v5456, 0
    %v5464 = vunpack.c.l.b16 %v5452
    %v5465 = vunpack.c.l.b16 %v5453
    %v5466 = vunpack.c.l.b16 %v5454
    %v5467 = vunpack.c.l.b16 %v5455
    %v5468 = vpack.c.b16 %v5465, %v5464
    %v5469 = vpack.c.b16 %v5467, %v5466
    %v5473 = vsel %vm749, %v5444, 0
    %v5476 = vsel %vm749, %v5445, 0
    %v5479 = vsel %vm749, %v5446, 0
    %v5482 = vsel %vm749, %v5447, 0
    %v5485 = vsel %vm749, %v5448, 0
    %v5488 = vsel %vm749, %v5449, 0
    %v5491 = vsel %vm749, %v5450, 0
    %v5494 = vsel %vm749, %v5451, 0
    %5496 = vmatpush.bf16.msra.mxu0 0
    %5497 = vmatpush.bf16.msra.mxu0 0
    %5498 = vmatpush.bf16.msra.mxu0 0
    %5499 = vmatpush.bf16.msra.mxu0 0
    %5500 = vmatpush.bf16.msra.mxu0 0
    %5501 = vmatpush.bf16.msra.mxu0 0
    %5502 = vmatpush.bf16.msra.mxu0 %v5469
    %5503 = vmatpush.bf16.msra.mxu0 %v5468
    %5504 = vmatmul.bf16.gmra.mxu0 %v5473
    %v5505 = vpop.f32.mrf.mxu0
    %v5506 = vadd.f32 %v5458, %v5505
    %v5507 = vpop.f32.mrf.mxu0
    %v5508 = vadd.f32 %v5458, %v5507
    %5509 = vmatmul.bf16.gmra.mxu0 %v5476
    %v5510 = vpop.f32.mrf.mxu0
    %v5511 = vadd.f32 %v5458, %v5510
    %v5512 = vpop.f32.mrf.mxu0
    %v5513 = vadd.f32 %v5458, %v5512
    %5514 = vmatmul.bf16.gmra.mxu0 %v5479
    %v5515 = vpop.f32.mrf.mxu0
    %v5516 = vadd.f32 %v5458, %v5515
    %v5517 = vpop.f32.mrf.mxu0
    %v5518 = vadd.f32 %v5458, %v5517
    %5519 = vmatmul.bf16.gmra.mxu0 %v5482
    %v5520 = vpop.f32.mrf.mxu0
    %v5521 = vadd.f32 %v5458, %v5520
    %v5522 = vpop.f32.mrf.mxu0
    %v5523 = vadd.f32 %v5458, %v5522
    %5524 = vmatmul.bf16.gmra.mxu0 %v5485
    %v5525 = vpop.f32.mrf.mxu0
    %v5526 = vadd.f32 %v5458, %v5525
    %v5527 = vpop.f32.mrf.mxu0
    %v5528 = vadd.f32 %v5458, %v5527
    %5529 = vmatmul.bf16.gmra.mxu0 %v5488
    %v5530 = vpop.f32.mrf.mxu0
    %v5531 = vadd.f32 %v5458, %v5530
    %v5532 = vpop.f32.mrf.mxu0
    %v5533 = vadd.f32 %v5458, %v5532
    %5534 = vmatmul.bf16.gmra.mxu0 %v5491
    %v5535 = vpop.f32.mrf.mxu0
    %v5536 = vadd.f32 %v5458, %v5535
    %v5537 = vpop.f32.mrf.mxu0
    %v5538 = vadd.f32 %v5458, %v5537
    %5539 = vmatmul.bf16.gmra.mxu0 %v5494
    %v5540 = vpop.f32.mrf.mxu0
    %v5541 = vadd.f32 %v5458, %v5540
    %v5542 = vpop.f32.mrf.mxu0
    %v5543 = vadd.f32 %v5458, %v5542
    %5544 = vdwg.mxu0
    %v5545 = vmax.f32 %v5506, 0.0
    %v5546 = vmax.f32 %v5508, 0.0
    %v5547 = vmax.f32 %v5511, 0.0
    %v5548 = vmax.f32 %v5513, 0.0
    %v5549 = vmax.f32 %v5516, 0.0
    %v5550 = vmax.f32 %v5518, 0.0
    %v5551 = vmax.f32 %v5521, 0.0
    %v5552 = vmax.f32 %v5523, 0.0
    %v5553 = vmax.f32 %v5526, 0.0
    %v5554 = vmax.f32 %v5528, 0.0
    %v5555 = vmax.f32 %v5531, 0.0
    %v5556 = vmax.f32 %v5533, 0.0
    %v5557 = vmax.f32 %v5536, 0.0
    %v5558 = vmax.f32 %v5538, 0.0
    %v5559 = vmax.f32 %v5541, 0.0
    %v5560 = vmax.f32 %v5543, 0.0
    %v5561 = vpack.c.bf16 %v5546, %v5545
    %v5562 = vpack.c.bf16 %v5548, %v5547
    %v5563 = vpack.c.bf16 %v5550, %v5549
    %v5564 = vpack.c.bf16 %v5552, %v5551
    %v5565 = vpack.c.bf16 %v5554, %v5553
    %v5566 = vpack.c.bf16 %v5556, %v5555
    %v5567 = vpack.c.bf16 %v5558, %v5557
    %v5568 = vpack.c.bf16 %v5560, %v5559
    %v5569 = vld [vmem:[%s89] sm:$0xf]
    %v5570 = vld [vmem:[%s89 + $0x4] sm:$0xf]
    %v5571 = vld [vmem:[%s89 + $0x8] sm:$0xf]
    %v5572 = vld [vmem:[%s89 + $0xc] sm:$0xf]
    %v5573 = vld [vmem:[#allocation7] sm:$0x1]
    %v5575 = vperm.slane %v5573, 0
    %v5581 = vunpack.c.l.b16 %v5569
    %v5582 = vunpack.c.l.b16 %v5570
    %v5583 = vunpack.c.l.b16 %v5571
    %v5584 = vunpack.c.l.b16 %v5572
    %v5585 = vpack.c.b16 %v5582, %v5581
    %v5586 = vpack.c.b16 %v5584, %v5583
    %v5590 = vsel %vm749, %v5561, 0
    %v5593 = vsel %vm749, %v5562, 0
    %v5596 = vsel %vm749, %v5563, 0
    %v5599 = vsel %vm749, %v5564, 0
    %v5602 = vsel %vm749, %v5565, 0
    %v5605 = vsel %vm749, %v5566, 0
    %v5608 = vsel %vm749, %v5567, 0
    %v5611 = vsel %vm749, %v5568, 0
    %5613 = vmatpush.bf16.msra.mxu0 0
    %5614 = vmatpush.bf16.msra.mxu0 0
    %5615 = vmatpush.bf16.msra.mxu0 0
    %5616 = vmatpush.bf16.msra.mxu0 0
    %5617 = vmatpush.bf16.msra.mxu0 0
    %5618 = vmatpush.bf16.msra.mxu0 0
    %5619 = vmatpush.bf16.msra.mxu0 %v5586
    %5620 = vmatpush.bf16.msra.mxu0 %v5585
    %5621 = vmatmul.bf16.gmra.mxu0 %v5590
    %v5622 = vpop.f32.mrf.mxu0
    %v5623 = vadd.f32 %v5575, %v5622
    %v5624 = vpop.f32.mrf.mxu0
    %v5625 = vadd.f32 %v5575, %v5624
    %5626 = vmatmul.bf16.gmra.mxu0 %v5593
    %v5627 = vpop.f32.mrf.mxu0
    %v5628 = vadd.f32 %v5575, %v5627
    %v5629 = vpop.f32.mrf.mxu0
    %v5630 = vadd.f32 %v5575, %v5629
    %5631 = vmatmul.bf16.gmra.mxu0 %v5596
    %v5632 = vpop.f32.mrf.mxu0
    %v5633 = vadd.f32 %v5575, %v5632
    %v5634 = vpop.f32.mrf.mxu0
    %v5635 = vadd.f32 %v5575, %v5634
    %5636 = vmatmul.bf16.gmra.mxu0 %v5599
    %v5637 = vpop.f32.mrf.mxu0
    %v5638 = vadd.f32 %v5575, %v5637
    %v5639 = vpop.f32.mrf.mxu0
    %v5640 = vadd.f32 %v5575, %v5639
    %5641 = vmatmul.bf16.gmra.mxu0 %v5602
    %v5642 = vpop.f32.mrf.mxu0
    %v5643 = vadd.f32 %v5575, %v5642
    %v5644 = vpop.f32.mrf.mxu0
    %v5645 = vadd.f32 %v5575, %v5644
    %5646 = vmatmul.bf16.gmra.mxu0 %v5605
    %v5647 = vpop.f32.mrf.mxu0
    %v5648 = vadd.f32 %v5575, %v5647
    %v5649 = vpop.f32.mrf.mxu0
    %v5650 = vadd.f32 %v5575, %v5649
    %5651 = vmatmul.bf16.gmra.mxu0 %v5608
    %v5652 = vpop.f32.mrf.mxu0
    %v5653 = vadd.f32 %v5575, %v5652
    %v5654 = vpop.f32.mrf.mxu0
    %v5655 = vadd.f32 %v5575, %v5654
    %5656 = vmatmul.bf16.gmra.mxu0 %v5611
    %v5657 = vpop.f32.mrf.mxu0
    %v5658 = vadd.f32 %v5575, %v5657
    %v5659 = vpop.f32.mrf.mxu0
    %v5660 = vadd.f32 %v5575, %v5659
    %5661 = vdwg.mxu0
    %v5662 = vmax.f32 %v5623, 0.0
    %v5663 = vmax.f32 %v5625, 0.0
    %v5664 = vmax.f32 %v5628, 0.0
    %v5665 = vmax.f32 %v5630, 0.0
    %v5666 = vmax.f32 %v5633, 0.0
    %v5667 = vmax.f32 %v5635, 0.0
    %v5668 = vmax.f32 %v5638, 0.0
    %v5669 = vmax.f32 %v5640, 0.0
    %v5670 = vmax.f32 %v5643, 0.0
    %v5671 = vmax.f32 %v5645, 0.0
    %v5672 = vmax.f32 %v5648, 0.0
    %v5673 = vmax.f32 %v5650, 0.0
    %v5674 = vmax.f32 %v5653, 0.0
    %v5675 = vmax.f32 %v5655, 0.0
    %v5676 = vmax.f32 %v5658, 0.0
    %v5677 = vmax.f32 %v5660, 0.0
    %v5678 = vpack.c.bf16 %v5663, %v5662
    %v5679 = vpack.c.bf16 %v5665, %v5664
    %v5680 = vpack.c.bf16 %v5667, %v5666
    %v5681 = vpack.c.bf16 %v5669, %v5668
    %v5682 = vpack.c.bf16 %v5671, %v5670
    %v5683 = vpack.c.bf16 %v5673, %v5672
    %v5684 = vpack.c.bf16 %v5675, %v5674
    %v5685 = vpack.c.bf16 %v5677, %v5676
    %v5686 = vld [vmem:[%s93] sm:$0xf]
    %v5687 = vld [vmem:[%s93 + $0x4] sm:$0xf]
    %v5688 = vld [vmem:[%s93 + $0x8] sm:$0xf]
    %v5689 = vld [vmem:[%s93 + $0xc] sm:$0xf]
    %v5690 = vld [vmem:[#allocation9] sm:$0x1]
    %v5692 = vperm.slane %v5690, 0
    %v5698 = vunpack.c.l.b16 %v5686
    %v5699 = vunpack.c.l.b16 %v5687
    %v5700 = vunpack.c.l.b16 %v5688
    %v5701 = vunpack.c.l.b16 %v5689
    %v5702 = vpack.c.b16 %v5699, %v5698
    %v5703 = vpack.c.b16 %v5701, %v5700
    %v5707 = vsel %vm749, %v5678, 0
    %v5710 = vsel %vm749, %v5679, 0
    %v5713 = vsel %vm749, %v5680, 0
    %v5716 = vsel %vm749, %v5681, 0
    %v5719 = vsel %vm749, %v5682, 0
    %v5722 = vsel %vm749, %v5683, 0
    %v5725 = vsel %vm749, %v5684, 0
    %v5728 = vsel %vm749, %v5685, 0
    %5730 = vmatpush.bf16.msra.mxu0 0
    %5731 = vmatpush.bf16.msra.mxu0 0
    %5732 = vmatpush.bf16.msra.mxu0 0
    %5733 = vmatpush.bf16.msra.mxu0 0
    %5734 = vmatpush.bf16.msra.mxu0 0
    %5735 = vmatpush.bf16.msra.mxu0 0
    %5736 = vmatpush.bf16.msra.mxu0 %v5703
    %5737 = vmatpush.bf16.msra.mxu0 %v5702
    %5738 = vmatmul.bf16.gmra.mxu0 %v5707
    %v5739 = vpop.f32.mrf.mxu0
    %v5740 = vadd.f32 %v5692, %v5739
    %v5741 = vpop.f32.mrf.mxu0
    %v5742 = vadd.f32 %v5692, %v5741
    %5743 = vmatmul.bf16.gmra.mxu0 %v5710
    %v5744 = vpop.f32.mrf.mxu0
    %v5745 = vadd.f32 %v5692, %v5744
    %v5746 = vpop.f32.mrf.mxu0
    %v5747 = vadd.f32 %v5692, %v5746
    %5748 = vmatmul.bf16.gmra.mxu0 %v5713
    %v5749 = vpop.f32.mrf.mxu0
    %v5750 = vadd.f32 %v5692, %v5749
    %v5751 = vpop.f32.mrf.mxu0
    %v5752 = vadd.f32 %v5692, %v5751
    %5753 = vmatmul.bf16.gmra.mxu0 %v5716
    %v5754 = vpop.f32.mrf.mxu0
    %v5755 = vadd.f32 %v5692, %v5754
    %v5756 = vpop.f32.mrf.mxu0
    %v5757 = vadd.f32 %v5692, %v5756
    %5758 = vmatmul.bf16.gmra.mxu0 %v5719
    %v5759 = vpop.f32.mrf.mxu0
    %v5760 = vadd.f32 %v5692, %v5759
    %v5761 = vpop.f32.mrf.mxu0
    %v5762 = vadd.f32 %v5692, %v5761
    %5763 = vmatmul.bf16.gmra.mxu0 %v5722
    %v5764 = vpop.f32.mrf.mxu0
    %v5765 = vadd.f32 %v5692, %v5764
    %v5766 = vpop.f32.mrf.mxu0
    %v5767 = vadd.f32 %v5692, %v5766
    %5768 = vmatmul.bf16.gmra.mxu0 %v5725
    %v5769 = vpop.f32.mrf.mxu0
    %v5770 = vadd.f32 %v5692, %v5769
    %v5771 = vpop.f32.mrf.mxu0
    %v5772 = vadd.f32 %v5692, %v5771
    %5773 = vmatmul.bf16.gmra.mxu0 %v5728
    %v5774 = vpop.f32.mrf.mxu0
    %v5775 = vadd.f32 %v5692, %v5774
    %v5776 = vpop.f32.mrf.mxu0
    %v5777 = vadd.f32 %v5692, %v5776
    %5778 = vdwg.mxu0
    %v5779 = vmax.f32 %v5740, 0.0
    %v5780 = vmax.f32 %v5742, 0.0
    %v5781 = vmax.f32 %v5745, 0.0
    %v5782 = vmax.f32 %v5747, 0.0
    %v5783 = vmax.f32 %v5750, 0.0
    %v5784 = vmax.f32 %v5752, 0.0
    %v5785 = vmax.f32 %v5755, 0.0
    %v5786 = vmax.f32 %v5757, 0.0
    %v5787 = vmax.f32 %v5760, 0.0
    %v5788 = vmax.f32 %v5762, 0.0
    %v5789 = vmax.f32 %v5765, 0.0
    %v5790 = vmax.f32 %v5767, 0.0
    %v5791 = vmax.f32 %v5770, 0.0
    %v5792 = vmax.f32 %v5772, 0.0
    %v5793 = vmax.f32 %v5775, 0.0
    %v5794 = vmax.f32 %v5777, 0.0
    %v5795 = vld [vmem:[%s97] sm:$0xf]
    %v5796 = vpack.c.bf16 %v5780, %v5779
    %v5797 = vpack.c.bf16 %v5782, %v5781
    %v5798 = vpack.c.bf16 %v5784, %v5783
    %v5799 = vpack.c.bf16 %v5786, %v5785
    %v5800 = vpack.c.bf16 %v5788, %v5787
    %v5801 = vpack.c.bf16 %v5790, %v5789
    %v5802 = vpack.c.bf16 %v5792, %v5791
    %v5803 = vpack.c.bf16 %v5794, %v5793
    %v5804 = vld [vmem:[%s99] sm:$0xff]
    %5806 = vset.pattern.permute.xlu0 0
    %5807 = vperm.xlu0 %5806, %v5804
    %v5808 = vpop.permute.xlu0 %5807
    %v5811 = vsel %vm749, %v5795, 0
    %v5814 = vsel %vm749, %v5796, 0
    %v5817 = vsel %vm749, %v5797, 0
    %v5820 = vsel %vm749, %v5798, 0
    %v5823 = vsel %vm749, %v5799, 0
    %v5826 = vsel %vm749, %v5800, 0
    %v5829 = vsel %vm749, %v5801, 0
    %v5832 = vsel %vm749, %v5802, 0
    %v5835 = vsel %vm749, %v5803, 0
    %5837 = vmatpush.bf16.xpose.msra.mxu0 %v5835
    %5838 = vmatpush.bf16.xpose.msra.mxu0 %v5832
    %5839 = vmatpush.bf16.xpose.msra.mxu0 %v5829
    %5840 = vmatpush.bf16.xpose.msra.mxu0 %v5826
    %5841 = vmatpush.bf16.xpose.msra.mxu0 %v5823
    %5842 = vmatpush.bf16.xpose.msra.mxu0 %v5820
    %5843 = vmatpush.bf16.xpose.msra.mxu0 %v5817
    %5844 = vmatpush.bf16.xpose.msra.mxu0 %v5814
    %5845 = vmatmul.bf16.gmra.mxu0 %v5811
    %v5846 = vpop.f32.mrf.mxu0
    %v5847 = vadd.f32 %v5808, %v5846
    %v5848 = vpop.f32.mrf.mxu0
    %5849 = vdwg.mxu0
    %5850 = vst [vmem:[%s101] sm:$0xff] %v5847
    %5851 = vst.msk [vmem:[%s103] sm:$0xff] %vm749, %v4754
    %5852 = vst.msk [vmem:[%s103 + $0x8] sm:$0xff] %vm749, %v4756
    %5853 = vst.msk [vmem:[%s103 + $0x10] sm:$0xff] %vm749, %v4759
    %5854 = vst.msk [vmem:[%s103 + $0x18] sm:$0xff] %vm749, %v4761
    %5855 = vst.msk [vmem:[%s103 + $0x20] sm:$0xff] %vm749, %v4764
    %5856 = vst.msk [vmem:[%s103 + $0x28] sm:$0xff] %vm749, %v4766
    %5857 = vst.msk [vmem:[%s103 + $0x30] sm:$0xff] %vm749, %v4769
    %5858 = vst.msk [vmem:[%s103 + $0x38] sm:$0xff] %vm749, %v4771
    %5859 = vst.msk [vmem:[%s103 + $0x40] sm:$0xff] %vm749, %v4774
    %5860 = vst.msk [vmem:[%s103 + $0x48] sm:$0xff] %vm749, %v4776
    %5861 = vst.msk [vmem:[%s103 + $0x50] sm:$0xff] %vm749, %v4779
    %5862 = vst.msk [vmem:[%s103 + $0x58] sm:$0xff] %vm749, %v4781
    %5863 = vst.msk [vmem:[%s103 + $0x60] sm:$0xff] %vm749, %v4784
    %5864 = vst.msk [vmem:[%s103 + $0x68] sm:$0xff] %vm749, %v4786
    %5865 = vst.msk [vmem:[%s103 + $0x70] sm:$0xff] %vm749, %v4789
    %5866 = vst.msk [vmem:[%s103 + $0x78] sm:$0xff] %vm749, %v4791
    // Predicated region
    $region222: #{mesh_pde_forward.1} parent=1 // pred_check
      _
    $region223: #{mesh_pde_forward.1} parent=1 // pred_check_branch
      %5868 = sbr.rel (0) target = $region225
    $region224: #{mesh_pde_forward.1} parent=1 // pred_region
      _
    $region225: #{mesh_pde_forward.1} parent=1 // pred_fallthru
      _
    // Predicated region
    $region226: #{mesh_pde_forward.1} parent=1 // pred_check
      _
    $region227: #{mesh_pde_forward.1} parent=1 // pred_check_branch
      %5870 = sbr.rel (0) target = $region229
    $region228: #{mesh_pde_forward.1} parent=1 // pred_region
      _
    $region229: #{mesh_pde_forward.1} parent=1 // pred_fallthru
      _
    // Predicated region
    $region230: #{mesh_pde_forward.1} parent=1 // pred_check
      _
    $region231: #{mesh_pde_forward.1} parent=1 // pred_check_branch
      %5872 = sbr.rel (0) target = $region233
    $region232: #{mesh_pde_forward.1} parent=1 // pred_region
      _
    $region233: #{mesh_pde_forward.1} parent=1 // pred_fallthru
      _
    // Predicated region
    $region234: #{mesh_pde_forward.1} parent=1 // pred_check
      _
    $region235: #{mesh_pde_forward.1} parent=1 // pred_check_branch
      %5874 = sbr.rel (0) target = $region237
    $region236: #{mesh_pde_forward.1} parent=1 // pred_region
      _
    $region237: #{mesh_pde_forward.1} parent=1 // pred_fallthru
      _
    %5875 = vsyncpa [#allocation3], 1
    %5876 = vsyncpa [#allocation5], 1
    %5877 = vsyncpa [#allocation8], 1

</llo_original>
